<compile_context>
chip_gen: v5e
topology: v5e:2x2
jax: 0.10.0
libtpu: 0.0.40
codegen_flags: <defaults>
</compile_context>

<pallas_src>
import functools
import math

import jax
import jax.numpy as jnp
from jax.experimental import pallas as pl
from jax.experimental.pallas import tpu as pltpu

# ----------------------------- model config ---------------------------------
VOCAB = 128
D_MODEL = 32
N_HEAD = 2
HEAD_DIM = D_MODEL // N_HEAD
N_LAYER = 2
MLP_DIM = 4 * D_MODEL
MAX_POS = 64
PAD_TOKEN_ID = VOCAB - 1


# ----------------------------- fused Pallas kernel ---------------------------
def _fused_gpt_kernel(h0_ref, mask_ref, tgt_ref, w_ref,
                      lnp_ref, wqkv_ref, bqkv_ref, wo_ref, bo_ref,
                      wfc_ref, bfc_ref, wproj_ref, bproj_ref, wte_t_ref,
                      o_ref, *, n_layer, n_head, head_dim, scale,
                      n_seq, seq_len):
    """Single step: full transformer forward for all N sequences at once,
    tied LM head, log-softmax, target gather and weighted-mean log-likelihood."""
    f32, bf16 = jnp.float32, jnp.bfloat16
    N, T = n_seq, seq_len
    h = h0_ref[...]                                   # [N*T, D]  f32 embeddings
    d_model = h.shape[-1]

    # Causal + key-validity additive bias built in-kernel (no [N,T,T] HBM DMA).
    # Position 0 is always a valid key after phrase injection (counts+P >= 1),
    # so no query row is ever fully masked -> softmax is never 0/0.
    qi = jax.lax.broadcasted_iota(jnp.int32, (N, T, T), 1)
    kj = jax.lax.broadcasted_iota(jnp.int32, (N, T, T), 2)
    key_ok = mask_ref[...][:, None, :] > 0.0          # [N,1,T]
    bias = jnp.where((qi >= kj) & key_ok, 0.0, -1e9).astype(f32)   # [N,T,T]

    def layernorm(x, gb):                             # gb: [2, D] (gamma, beta)
        mu = jnp.mean(x, axis=-1, keepdims=True)
        var = jnp.mean((x - mu) ** 2, axis=-1, keepdims=True)
        return (x - mu) * jax.lax.rsqrt(var + 1e-5) * gb[0:1, :] + gb[1:2, :]

    for l in range(n_layer):
        # ----- attention block (dense projections batched over all N*T rows) -
        x = layernorm(h, lnp_ref[2 * l])
        qkv = jnp.dot(x.astype(bf16), wqkv_ref[l],
                      preferred_element_type=f32) + bqkv_ref[l]     # [N*T, 3D]
        qkv3 = qkv.reshape(N, T, 3 * d_model)                       # [N, T, 3D]
        attn = jnp.zeros((N * T, d_model), f32)
        for hh in range(n_head):
            q = qkv3[:, :, hh * head_dim:(hh + 1) * head_dim].astype(bf16)
            k = qkv3[:, :, d_model + hh * head_dim:
                           d_model + (hh + 1) * head_dim].astype(bf16)
            v = qkv3[:, :, 2 * d_model + hh * head_dim:
                           2 * d_model + (hh + 1) * head_dim].astype(bf16)
            # Batched over N (einsum -> batched dot_general on MXU).
            s = jnp.einsum("nqd,nkd->nqk", q, k,
                           preferred_element_type=f32) * scale + bias
            m = jnp.max(s, axis=-1, keepdims=True)
            p = jnp.exp(s - m)
            denom = jnp.sum(p, axis=-1, keepdims=True)
            p = p * pl.reciprocal(denom, approx=True)               # EUP vrcp
            a_h = jnp.einsum("nqk,nkd->nqd", p.astype(bf16), v,
                             preferred_element_type=f32)            # [N,T,hd]
            # a @ wo == sum_h a_h @ wo[h*hd:(h+1)*hd, :]  (no lane concat)
            attn = attn + jnp.dot(
                a_h.reshape(N * T, head_dim).astype(bf16),
                wo_ref[l][hh * head_dim:(hh + 1) * head_dim, :],
                preferred_element_type=f32)
        h = h + attn + bo_ref[l]

        # ----- MLP block (batched over all N*T rows) -----
        x = layernorm(h, lnp_ref[2 * l + 1])
        m1 = jnp.dot(x.astype(bf16), wfc_ref[l],
                     preferred_element_type=f32) + bfc_ref[l]
        m1 = jax.nn.gelu(m1, approximate=True)                      # gelu_new
        h = h + jnp.dot(m1.astype(bf16), wproj_ref[l],
                        preferred_element_type=f32) + bproj_ref[l]

    # ----- final LN + tied LM head + log-softmax + gather + weighted mean ----
    h = layernorm(h, lnp_ref[2 * n_layer])
    logits = jnp.dot(h.astype(bf16), wte_t_ref[...],
                     preferred_element_type=f32)                    # [N*T, V]
    mx = jnp.max(logits, axis=-1, keepdims=True)
    lse = jnp.log(jnp.sum(jnp.exp(logits - mx), axis=-1, keepdims=True)) + mx
    logp = logits - lse                                             # [N*T, V]

    # Gather shifted targets via masked select.  The weight vector w is
    # exactly 0 on padded positions and on the last real position (whose
    # shifted target is junk), so those rows contribute nothing -- this is the
    # only thing keeping the gather semantics correct; do not change w.
    tgt = tgt_ref[...]                                              # [N*T, 1]
    vocab_idx = jax.lax.broadcasted_iota(jnp.int32, logp.shape, 1)  # [N*T, V]
    picked = jnp.where(vocab_idx == tgt, logp, 0.0) * w_ref[...]
    rows = jnp.sum(picked, axis=1, keepdims=True)                   # [N*T, 1]
    # Single output write: per-sequence weighted sums.
    o_ref[...] = jnp.sum(rows.reshape(N, T, 1), axis=1)             # [N, 1]


def gpt_forward_loglik(params, ids, mask, w):
    """ids/mask/w: [N, T] (N = num_labels * batch).  Returns [N] mean log-lik."""
    N, T = ids.shape
    D = D_MODEL

    h0 = (params["wte"][ids] + params["wpe"][:T][None, :, :]
          ).astype(jnp.float32).reshape(N * T, D)                   # [N*T, D]
    tgt = jnp.concatenate([ids[:, 1:], jnp.zeros((N, 1), ids.dtype)], axis=1)
    tgt = tgt.astype(jnp.int32).reshape(N * T, 1)                   # [N*T, 1]
    w2 = w.astype(jnp.float32).reshape(N * T, 1)                    # [N*T, 1]
    maskf = mask.astype(jnp.float32)                                # [N, T]

    bf16 = jnp.bfloat16
    wqkv = params["wqkv"].astype(bf16)
    wo = params["wo"].astype(bf16)
    wfc = params["wfc"].astype(bf16)
    wproj = params["wproj"].astype(bf16)
    wte_t = params["wte"].T.astype(bf16)                            # [D, V]

    kernel = functools.partial(_fused_gpt_kernel, n_layer=N_LAYER,
                               n_head=N_HEAD, head_dim=HEAD_DIM,
                               scale=1.0 / math.sqrt(HEAD_DIM),
                               n_seq=N, seq_len=T)

    vmem = pl.BlockSpec(memory_space=pltpu.MemorySpace.VMEM)  # full array, VMEM
    out = pl.pallas_call(
        kernel,
        out_shape=jax.ShapeDtypeStruct((N, 1), jnp.float32),
        in_specs=[vmem] * 14,
        out_specs=vmem,
    )(h0, maskf, tgt, w2,
      params["lnp"], wqkv, params["bqkv"], wo, params["bo"],
      wfc, params["bfc"], wproj, params["bproj"], wte_t)
    return out[:, 0]


# ----------------------------- plain-JAX glue --------------------------------
def inject_phrase(input_ids, phrase, pad_token, attention_mask):
    """Exact JAX equivalent of the PyTorch inject_phrase."""
    B, S = input_ids.shape
    P = phrase.shape[0]
    new_S = S + P
    new_ids = jnp.full((B, new_S), pad_token, dtype=input_ids.dtype)
    new_ids = new_ids.at[:, :S].set(input_ids)
    counts = jnp.sum(attention_mask, axis=1)                     # [B]
    rng = jnp.arange(new_S)[None, :]                             # [1, new_S]
    rel = rng - counts[:, None]                                  # [B, new_S]
    phrase_vals = phrase[jnp.clip(rel, 0, P - 1)]
    in_phrase = (rel >= 0) & (rel < P)
    new_ids = jnp.where(in_phrase, phrase_vals.astype(new_ids.dtype), new_ids)
    new_mask = (rng < (counts[:, None] + P)).astype(attention_mask.dtype)
    return new_ids, new_mask


def classifier_forward(params, input_ids, attention_mask, phrase_tokens,
                       label_token_list, pad_token_id):
    """Mirrors GPTProbabilityClassifier.forward -> [B, num_labels] mean log-lik."""
    B, S = input_ids.shape
    L = len(label_token_list)
    P = phrase_tokens.shape[0]
    T_raw = S + P + max(int(lt.shape[0]) for lt in label_token_list)
    T_max = ((T_raw + 7) // 8) * 8          # pad to sublane multiple (13 -> 16)
    pos = jnp.arange(T_max)

    ids_list, mask_list, w_list = [], [], []
    for lt in label_token_list:
        full_phrase = jnp.concatenate([phrase_tokens, lt])
        ids_l, mask_l = inject_phrase(input_ids, full_phrase,
                                      pad_token_id, attention_mask)
        T_l = ids_l.shape[1]
        pad = T_max - T_l
        if pad:
            ids_l = jnp.pad(ids_l, ((0, 0), (0, pad)),
                            constant_values=pad_token_id)
            mask_l = jnp.pad(mask_l, ((0, 0), (0, pad)))
        # Weighted-mean vector reproduces mean over the T_l-1 shifted positions;
        # zeros neutralize padded rows and the junk shifted target at T_l-1.
        w_l = jnp.where(pos < T_l - 1, 1.0 / (T_l - 1), 0.0).astype(jnp.float32)
        ids_list.append(ids_l)
        mask_list.append(mask_l)
        w_list.append(jnp.broadcast_to(w_l, (B, T_max)))

    ids = jnp.concatenate(ids_list, axis=0)       # [L*B, T_max] label-major
    mask = jnp.concatenate(mask_list, axis=0)
    w = jnp.concatenate(w_list, axis=0)

    ll = gpt_forward_loglik(params, ids, mask, w)  # [L*B]
    return ll.reshape(L, B).T                      # [B, L]


def init_params(key):
    ks = jax.random.split(key, 6)
    ln_pair = jnp.stack([jnp.ones((D_MODEL,), jnp.float32),
                         jnp.zeros((D_MODEL,), jnp.float32)])           # [2, D]
    return {
        "wte": 0.02 * jax.random.normal(ks[0], (VOCAB, D_MODEL), jnp.float32),
        "wpe": 0.01 * jax.random.normal(ks[1], (MAX_POS, D_MODEL), jnp.float32),
        "lnp": jnp.tile(ln_pair[None], (2 * N_LAYER + 1, 1, 1)),        # [5,2,D]
        "wqkv": 0.02 * jax.random.normal(ks[2], (N_LAYER, D_MODEL, 3 * D_MODEL), jnp.float32),
        "bqkv": jnp.zeros((N_LAYER, 1, 3 * D_MODEL), jnp.float32),
        "wo": 0.02 * jax.random.normal(ks[3], (N_LAYER, D_MODEL, D_MODEL), jnp.float32),
        "bo": jnp.zeros((N_LAYER, 1, D_MODEL), jnp.float32),
        "wfc": 0.02 * jax.random.normal(ks[4], (N_LAYER, D_MODEL, MLP_DIM), jnp.float32),
        "bfc": jnp.zeros((N_LAYER, 1, MLP_DIM), jnp.float32),
        "wproj": 0.02 * jax.random.normal(ks[5], (N_LAYER, MLP_DIM, D_MODEL), jnp.float32),
        "bproj": jnp.zeros((N_LAYER, 1, D_MODEL), jnp.float32),
    }


# ------------------------- pure-JAX reference (f32) ---------------------------
def _reference_forward(params, input_ids, attention_mask, phrase_tokens,
                       label_token_list, pad_token_id):
    def ln(x, g, b):
        mu = x.mean(-1, keepdims=True)
        var = ((x - mu) ** 2).mean(-1, keepdims=True)
        return (x - mu) * jax.lax.rsqrt(var + 1e-5) * g + b

    outs = []
    for lt in label_token_list:
        full_phrase = jnp.concatenate([phrase_tokens, lt])
        ids, mask = inject_phrase(input_ids, full_phrase, pad_token_id,
                                  attention_mask)
        B, T = ids.shape
        h = params["wte"][ids] + params["wpe"][:T][None]
        causal = jnp.tril(jnp.ones((T, T), dtype=bool))[None]
        bias = jnp.where(causal & (mask[:, None, :] > 0), 0.0, -1e9)
        for l in range(N_LAYER):
            x = ln(h, params["lnp"][2 * l, 0], params["lnp"][2 * l, 1])
            qkv = x @ params["wqkv"][l] + params["bqkv"][l]
            q, k, v = jnp.split(qkv, 3, axis=-1)
            q = q.reshape(B, T, N_HEAD, HEAD_DIM).transpose(0, 2, 1, 3)
            k = k.reshape(B, T, N_HEAD, HEAD_DIM).transpose(0, 2, 1, 3)
            v = v.reshape(B, T, N_HEAD, HEAD_DIM).transpose(0, 2, 1, 3)
            s = jnp.einsum("bhqd,bhkd->bhqk", q, k) / math.sqrt(HEAD_DIM)
            p = jax.nn.softmax(s + bias[:, None], axis=-1)
            a = jnp.einsum("bhqk,bhkd->bhqd", p, v)
            a = a.transpose(0, 2, 1, 3).reshape(B, T, D_MODEL)
            h = h + a @ params["wo"][l] + params["bo"][l]
            x = ln(h, params["lnp"][2 * l + 1, 0], params["lnp"][2 * l + 1, 1])
            m = jax.nn.gelu(x @ params["wfc"][l] + params["bfc"][l],
                            approximate=True)
            h = h + m @ params["wproj"][l] + params["bproj"][l]
        h = ln(h, params["lnp"][2 * N_LAYER, 0], params["lnp"][2 * N_LAYER, 1])
        logits = h @ params["wte"].T
        logp = jax.nn.log_softmax(logits, axis=-1)
        tgt = ids[:, 1:]
        g = jnp.take_along_axis(logp[:, :-1], tgt[..., None], axis=-1)[..., 0]
        outs.append(g.mean(axis=1))
    return jnp.stack(outs, axis=1)


# ----------------------------------- main -------------------------------------
if __name__ == "__main__":
    key = jax.random.PRNGKey(0)
    k_param, k_ids, k_phrase, k_l0, k_l1 = jax.random.split(key, 5)

    params = init_params(k_param)

    B, S = 2, 8
    input_ids = jax.random.randint(k_ids, (B, S), 0, VOCAB, dtype=jnp.int32)
    attention_mask = jnp.array([[1, 1, 1, 1, 1, 1, 0, 0],
                                [1, 1, 1, 1, 1, 1, 1, 1]], dtype=jnp.int32)

    # Synthetic pre-tokenized classification phrase + labels (stand-ins for
    # GPT2Tokenizer output — see module docstring).
    # TODO(synk): pretrained GPT-2 weights / GPT2Tokenizer have no in-script
    # equivalent; a deterministic tiny GPT-2-style model is used instead.
    phrase_tokens = jax.random.randint(k_phrase, (3,), 0, VOCAB, dtype=jnp.int32)
    label_tokens = [
        jax.random.randint(k_l0, (2,), 0, VOCAB, dtype=jnp.int32),
        jax.random.randint(k_l1, (1,), 0, VOCAB, dtype=jnp.int32),
    ]

    fwd = jax.jit(classifier_forward, static_argnums=(5,))
    out = fwd(params, input_ids, attention_mask, phrase_tokens, label_tokens,
              PAD_TOKEN_ID)
    out = jax.block_until_ready(out)

    ref = _reference_forward(params, input_ids, attention_mask, phrase_tokens,
                             label_tokens, PAD_TOKEN_ID)

    assert out.shape == (B, len(label_tokens))
    assert bool(jnp.all(jnp.isfinite(out)))
    assert bool(jnp.allclose(out, ref, atol=5e-2, rtol=0.0)), (out, ref)
    print("KERNEL_OK")
</pallas_src>

<mosaic_0001>
module attributes {stable_mosaic.version = 11 : i64} {
  func.func @_fused_gpt_kernel(%arg0: memref<64x32xf32, #tpu.memory_space<vmem>>, %arg1: memref<4x16xf32, #tpu.memory_space<vmem>>, %arg2: memref<64x1xi32, #tpu.memory_space<vmem>>, %arg3: memref<64x1xf32, #tpu.memory_space<vmem>>, %arg4: memref<5x2x32xf32, #tpu.memory_space<vmem>>, %arg5: memref<2x32x96xbf16, #tpu.memory_space<vmem>>, %arg6: memref<2x1x96xf32, #tpu.memory_space<vmem>>, %arg7: memref<2x32x32xbf16, #tpu.memory_space<vmem>>, %arg8: memref<2x1x32xf32, #tpu.memory_space<vmem>>, %arg9: memref<2x32x128xbf16, #tpu.memory_space<vmem>>, %arg10: memref<2x1x128xf32, #tpu.memory_space<vmem>>, %arg11: memref<2x128x32xbf16, #tpu.memory_space<vmem>>, %arg12: memref<2x1x32xf32, #tpu.memory_space<vmem>>, %arg13: memref<32x128xbf16, #tpu.memory_space<vmem>>, %arg14: memref<4x1xf32, #tpu.memory_space<vmem>>) attributes {dimension_semantics = [], scalar_prefetch = 0 : i64, scratch_operands = 0 : i64, tpu.core_type = #tpu.core_type<tc>} {
    %c0 = arith.constant 0 : index
    %c0_0 = arith.constant 0 : index
    %0 = vector.load %arg0[%c0, %c0_0] : memref<64x32xf32, #tpu.memory_space<vmem>>, vector<64x32xf32>
    %1 = tpu.iota {dimensions = array<i32: 1>} : vector<4x16x16xi32>
    %2 = tpu.iota {dimensions = array<i32: 2>} : vector<4x16x16xi32>
    %c0_1 = arith.constant 0 : index
    %c0_2 = arith.constant 0 : index
    %3 = vector.load %arg1[%c0_1, %c0_2] : memref<4x16xf32, #tpu.memory_space<vmem>>, vector<4x16xf32>
    %4 = vector.shape_cast %3 : vector<4x16xf32> to vector<4x1x16xf32>
    %cst = arith.constant 0.000000e+00 : f32
    %5 = vector.broadcast %cst : f32 to vector<4x1x16xf32>
    %6 = arith.cmpf ogt, %4, %5 : vector<4x1x16xf32>
    %7 = arith.cmpi sge, %1, %2 : vector<4x16x16xi32>
    %8 = vector.broadcast %6 : vector<4x1x16xi1> to vector<4x16x16xi1>
    %9 = arith.andi %7, %8 : vector<4x16x16xi1>
    %cst_3 = arith.constant 0.000000e+00 : f32
    %cst_4 = arith.constant -1.000000e+09 : f32
    %10 = vector.broadcast %cst_3 : f32 to vector<4x16x16xf32>
    %11 = vector.broadcast %cst_4 : f32 to vector<4x16x16xf32>
    %12 = arith.select %9, %10, %11 : vector<4x16x16xi1>, vector<4x16x16xf32>
    %c0_5 = arith.constant 0 : index
    %c0_6 = arith.constant 0 : index
    %c0_7 = arith.constant 0 : index
    %13 = vector.load %arg4[%c0_5, %c0_6, %c0_7] : memref<5x2x32xf32, #tpu.memory_space<vmem>>, vector<1x2x32xf32>
    %14 = vector.shape_cast %13 : vector<1x2x32xf32> to vector<2x32xf32>
    %cst_8 = arith.constant dense<0.000000e+00> : vector<64xf32>
    %15 = vector.multi_reduction <add>, %0, %cst_8 [1] : vector<64x32xf32> to vector<64xf32>
    %16 = vector.shape_cast %15 : vector<64xf32> to vector<64x1xf32>
    %cst_9 = arith.constant 3.200000e+01 : f32
    %17 = vector.broadcast %cst_9 : f32 to vector<64x1xf32>
    %18 = arith.divf %16, %17 : vector<64x1xf32>
    %19 = vector.broadcast %18 : vector<64x1xf32> to vector<64x32xf32>
    %20 = arith.subf %0, %19 : vector<64x32xf32>
    %21 = arith.mulf %20, %20 : vector<64x32xf32>
    %cst_10 = arith.constant dense<0.000000e+00> : vector<64xf32>
    %22 = vector.multi_reduction <add>, %21, %cst_10 [1] : vector<64x32xf32> to vector<64xf32>
    %23 = vector.shape_cast %22 : vector<64xf32> to vector<64x1xf32>
    %cst_11 = arith.constant 3.200000e+01 : f32
    %24 = vector.broadcast %cst_11 : f32 to vector<64x1xf32>
    %25 = arith.divf %23, %24 : vector<64x1xf32>
    %26 = vector.broadcast %18 : vector<64x1xf32> to vector<64x32xf32>
    %27 = arith.subf %0, %26 : vector<64x32xf32>
    %cst_12 = arith.constant 9.99999974E-6 : f32
    %28 = vector.broadcast %cst_12 : f32 to vector<64x1xf32>
    %29 = arith.addf %25, %28 : vector<64x1xf32>
    %30 = math.rsqrt %29 : vector<64x1xf32>
    %31 = vector.broadcast %30 : vector<64x1xf32> to vector<64x32xf32>
    %32 = arith.mulf %27, %31 : vector<64x32xf32>
    %33 = vector.extract_strided_slice %14 {offsets = [0, 0], sizes = [1, 32], strides = [1, 1]} : vector<2x32xf32> to vector<1x32xf32>
    %34 = vector.broadcast %33 : vector<1x32xf32> to vector<64x32xf32>
    %35 = arith.mulf %32, %34 : vector<64x32xf32>
    %36 = vector.extract_strided_slice %14 {offsets = [1, 0], sizes = [1, 32], strides = [1, 1]} : vector<2x32xf32> to vector<1x32xf32>
    %37 = vector.broadcast %36 : vector<1x32xf32> to vector<64x32xf32>
    %38 = arith.addf %35, %37 : vector<64x32xf32>
    %39 = arith.truncf %38 : vector<64x32xf32> to vector<64x32xbf16>
    %c0_13 = arith.constant 0 : index
    %c0_14 = arith.constant 0 : index
    %c0_15 = arith.constant 0 : index
    %40 = vector.load %arg5[%c0_13, %c0_14, %c0_15] : memref<2x32x96xbf16, #tpu.memory_space<vmem>>, vector<1x32x96xbf16>
    %41 = vector.shape_cast %40 : vector<1x32x96xbf16> to vector<32x96xbf16>
    %cst_16 = arith.constant dense<0.000000e+00> : vector<64x96xf32>
    %42 = tpu.matmul %39, %41, %cst_16 {dimension_numbers = #tpu.dot_dimension_numbers<[1], [0], [0], [1], [0, 0, 1, 1], [], []>} : vector<64x32xbf16>, vector<32x96xbf16>, vector<64x96xf32> -> vector<64x96xf32>
    %c0_17 = arith.constant 0 : index
    %c0_18 = arith.constant 0 : index
    %c0_19 = arith.constant 0 : index
    %43 = vector.load %arg6[%c0_17, %c0_18, %c0_19] : memref<2x1x96xf32, #tpu.memory_space<vmem>>, vector<1x1x96xf32>
    %44 = vector.shape_cast %43 : vector<1x1x96xf32> to vector<1x96xf32>
    %45 = vector.broadcast %44 : vector<1x96xf32> to vector<64x96xf32>
    %46 = arith.addf %42, %45 : vector<64x96xf32>
    %47 = vector.shape_cast %46 : vector<64x96xf32> to vector<4x16x96xf32>
    %cst_20 = arith.constant 0.000000e+00 : f32
    %48 = vector.broadcast %cst_20 : f32 to vector<64x32xf32>
    %49 = vector.extract_strided_slice %47 {offsets = [0, 0, 0], sizes = [4, 16, 16], strides = [1, 1, 1]} : vector<4x16x96xf32> to vector<4x16x16xf32>
    %50 = arith.truncf %49 : vector<4x16x16xf32> to vector<4x16x16xbf16>
    %51 = vector.extract_strided_slice %47 {offsets = [0, 0, 32], sizes = [4, 16, 16], strides = [1, 1, 1]} : vector<4x16x96xf32> to vector<4x16x16xf32>
    %52 = arith.truncf %51 : vector<4x16x16xf32> to vector<4x16x16xbf16>
    %53 = vector.extract_strided_slice %47 {offsets = [0, 0, 64], sizes = [4, 16, 16], strides = [1, 1, 1]} : vector<4x16x96xf32> to vector<4x16x16xf32>
    %54 = arith.truncf %53 : vector<4x16x16xf32> to vector<4x16x16xbf16>
    "tpu.trace_start"() <{level = 10 : i32, message = "nqd,nkd->nqk"}> : () -> ()
    %cst_21 = arith.constant dense<0.000000e+00> : vector<4x16x16xf32>
    %55 = tpu.matmul %50, %52, %cst_21 {dimension_numbers = #tpu.dot_dimension_numbers<[2], [2], [1], [1], [0, 0, 0, 1, 1, 1], [0], [0]>} : vector<4x16x16xbf16>, vector<4x16x16xbf16>, vector<4x16x16xf32> -> vector<4x16x16xf32>
    "tpu.trace_stop"() : () -> ()
    %cst_22 = arith.constant 2.500000e-01 : f32
    %56 = vector.broadcast %cst_22 : f32 to vector<4x16x16xf32>
    %57 = arith.mulf %55, %56 : vector<4x16x16xf32>
    %58 = arith.addf %57, %12 : vector<4x16x16xf32>
    %cst_23 = arith.constant dense<0xFF800000> : vector<4x16xf32>
    %59 = vector.multi_reduction <maximumf>, %58, %cst_23 [2] : vector<4x16x16xf32> to vector<4x16xf32>
    %60 = vector.shape_cast %59 : vector<4x16xf32> to vector<4x16x1xf32>
    %61 = vector.broadcast %60 : vector<4x16x1xf32> to vector<4x16x16xf32>
    %62 = arith.subf %58, %61 : vector<4x16x16xf32>
    %63 = math.exp %62 : vector<4x16x16xf32>
    %cst_24 = arith.constant dense<0.000000e+00> : vector<4x16xf32>
    %64 = vector.multi_reduction <add>, %63, %cst_24 [2] : vector<4x16x16xf32> to vector<4x16xf32>
    %65 = vector.shape_cast %64 : vector<4x16xf32> to vector<4x16x1xf32>
    %66 = tpu.reciprocal %65 {approx = true} : vector<4x16x1xf32> -> vector<4x16x1xf32>
    %67 = vector.broadcast %66 : vector<4x16x1xf32> to vector<4x16x16xf32>
    %68 = arith.mulf %63, %67 : vector<4x16x16xf32>
    %69 = arith.truncf %68 : vector<4x16x16xf32> to vector<4x16x16xbf16>
    "tpu.trace_start"() <{level = 10 : i32, message = "nqk,nkd->nqd"}> : () -> ()
    %cst_25 = arith.constant dense<0.000000e+00> : vector<4x16x16xf32>
    %70 = tpu.matmul %69, %54, %cst_25 {dimension_numbers = #tpu.dot_dimension_numbers<[2], [1], [1], [2], [0, 0, 0, 1, 1, 2], [0], [0]>} : vector<4x16x16xbf16>, vector<4x16x16xbf16>, vector<4x16x16xf32> -> vector<4x16x16xf32>
    "tpu.trace_stop"() : () -> ()
    %71 = vector.shape_cast %70 : vector<4x16x16xf32> to vector<64x16xf32>
    %72 = arith.truncf %71 : vector<64x16xf32> to vector<64x16xbf16>
    %c0_26 = arith.constant 0 : index
    %c0_27 = arith.constant 0 : index
    %c0_28 = arith.constant 0 : index
    %73 = vector.load %arg7[%c0_26, %c0_27, %c0_28] : memref<2x32x32xbf16, #tpu.memory_space<vmem>>, vector<1x32x32xbf16>
    %74 = vector.shape_cast %73 : vector<1x32x32xbf16> to vector<32x32xbf16>
    %75 = vector.extract_strided_slice %74 {offsets = [0, 0], sizes = [16, 32], strides = [1, 1]} : vector<32x32xbf16> to vector<16x32xbf16>
    %cst_29 = arith.constant dense<0.000000e+00> : vector<64x32xf32>
    %76 = tpu.matmul %72, %75, %cst_29 {dimension_numbers = #tpu.dot_dimension_numbers<[1], [0], [0], [1], [0, 0, 1, 1], [], []>} : vector<64x16xbf16>, vector<16x32xbf16>, vector<64x32xf32> -> vector<64x32xf32>
    %77 = arith.addf %48, %76 : vector<64x32xf32>
    %78 = vector.extract_strided_slice %47 {offsets = [0, 0, 16], sizes = [4, 16, 16], strides = [1, 1, 1]} : vector<4x16x96xf32> to vector<4x16x16xf32>
    %79 = arith.truncf %78 : vector<4x16x16xf32> to vector<4x16x16xbf16>
    %80 = vector.extract_strided_slice %47 {offsets = [0, 0, 48], sizes = [4, 16, 16], strides = [1, 1, 1]} : vector<4x16x96xf32> to vector<4x16x16xf32>
    %81 = arith.truncf %80 : vector<4x16x16xf32> to vector<4x16x16xbf16>
    %82 = vector.extract_strided_slice %47 {offsets = [0, 0, 80], sizes = [4, 16, 16], strides = [1, 1, 1]} : vector<4x16x96xf32> to vector<4x16x16xf32>
    %83 = arith.truncf %82 : vector<4x16x16xf32> to vector<4x16x16xbf16>
    "tpu.trace_start"() <{level = 10 : i32, message = "nqd,nkd->nqk"}> : () -> ()
    %cst_30 = arith.constant dense<0.000000e+00> : vector<4x16x16xf32>
    %84 = tpu.matmul %79, %81, %cst_30 {dimension_numbers = #tpu.dot_dimension_numbers<[2], [2], [1], [1], [0, 0, 0, 1, 1, 1], [0], [0]>} : vector<4x16x16xbf16>, vector<4x16x16xbf16>, vector<4x16x16xf32> -> vector<4x16x16xf32>
    "tpu.trace_stop"() : () -> ()
    %cst_31 = arith.constant 2.500000e-01 : f32
    %85 = vector.broadcast %cst_31 : f32 to vector<4x16x16xf32>
    %86 = arith.mulf %84, %85 : vector<4x16x16xf32>
    %87 = arith.addf %86, %12 : vector<4x16x16xf32>
    %cst_32 = arith.constant dense<0xFF800000> : vector<4x16xf32>
    %88 = vector.multi_reduction <maximumf>, %87, %cst_32 [2] : vector<4x16x16xf32> to vector<4x16xf32>
    %89 = vector.shape_cast %88 : vector<4x16xf32> to vector<4x16x1xf32>
    %90 = vector.broadcast %89 : vector<4x16x1xf32> to vector<4x16x16xf32>
    %91 = arith.subf %87, %90 : vector<4x16x16xf32>
    %92 = math.exp %91 : vector<4x16x16xf32>
    %cst_33 = arith.constant dense<0.000000e+00> : vector<4x16xf32>
    %93 = vector.multi_reduction <add>, %92, %cst_33 [2] : vector<4x16x16xf32> to vector<4x16xf32>
    %94 = vector.shape_cast %93 : vector<4x16xf32> to vector<4x16x1xf32>
    %95 = tpu.reciprocal %94 {approx = true} : vector<4x16x1xf32> -> vector<4x16x1xf32>
    %96 = vector.broadcast %95 : vector<4x16x1xf32> to vector<4x16x16xf32>
    %97 = arith.mulf %92, %96 : vector<4x16x16xf32>
    %98 = arith.truncf %97 : vector<4x16x16xf32> to vector<4x16x16xbf16>
    "tpu.trace_start"() <{level = 10 : i32, message = "nqk,nkd->nqd"}> : () -> ()
    %cst_34 = arith.constant dense<0.000000e+00> : vector<4x16x16xf32>
    %99 = tpu.matmul %98, %83, %cst_34 {dimension_numbers = #tpu.dot_dimension_numbers<[2], [1], [1], [2], [0, 0, 0, 1, 1, 2], [0], [0]>} : vector<4x16x16xbf16>, vector<4x16x16xbf16>, vector<4x16x16xf32> -> vector<4x16x16xf32>
    "tpu.trace_stop"() : () -> ()
    %100 = vector.shape_cast %99 : vector<4x16x16xf32> to vector<64x16xf32>
    %101 = arith.truncf %100 : vector<64x16xf32> to vector<64x16xbf16>
    %c0_35 = arith.constant 0 : index
    %c0_36 = arith.constant 0 : index
    %c0_37 = arith.constant 0 : index
    %102 = vector.load %arg7[%c0_35, %c0_36, %c0_37] : memref<2x32x32xbf16, #tpu.memory_space<vmem>>, vector<1x32x32xbf16>
    %103 = vector.shape_cast %102 : vector<1x32x32xbf16> to vector<32x32xbf16>
    %104 = vector.extract_strided_slice %103 {offsets = [16, 0], sizes = [16, 32], strides = [1, 1]} : vector<32x32xbf16> to vector<16x32xbf16>
    %cst_38 = arith.constant dense<0.000000e+00> : vector<64x32xf32>
    %105 = tpu.matmul %101, %104, %cst_38 {dimension_numbers = #tpu.dot_dimension_numbers<[1], [0], [0], [1], [0, 0, 1, 1], [], []>} : vector<64x16xbf16>, vector<16x32xbf16>, vector<64x32xf32> -> vector<64x32xf32>
    %106 = arith.addf %77, %105 : vector<64x32xf32>
    %107 = arith.addf %0, %106 : vector<64x32xf32>
    %c0_39 = arith.constant 0 : index
    %c0_40 = arith.constant 0 : index
    %c0_41 = arith.constant 0 : index
    %108 = vector.load %arg8[%c0_39, %c0_40, %c0_41] : memref<2x1x32xf32, #tpu.memory_space<vmem>>, vector<1x1x32xf32>
    %109 = vector.shape_cast %108 : vector<1x1x32xf32> to vector<1x32xf32>
    %110 = vector.broadcast %109 : vector<1x32xf32> to vector<64x32xf32>
    %111 = arith.addf %107, %110 : vector<64x32xf32>
    %c1 = arith.constant 1 : index
    %c0_42 = arith.constant 0 : index
    %c0_43 = arith.constant 0 : index
    %112 = vector.load %arg4[%c1, %c0_42, %c0_43] : memref<5x2x32xf32, #tpu.memory_space<vmem>>, vector<1x2x32xf32>
    %113 = vector.shape_cast %112 : vector<1x2x32xf32> to vector<2x32xf32>
    %cst_44 = arith.constant dense<0.000000e+00> : vector<64xf32>
    %114 = vector.multi_reduction <add>, %111, %cst_44 [1] : vector<64x32xf32> to vector<64xf32>
    %115 = vector.shape_cast %114 : vector<64xf32> to vector<64x1xf32>
    %cst_45 = arith.constant 3.200000e+01 : f32
    %116 = vector.broadcast %cst_45 : f32 to vector<64x1xf32>
    %117 = arith.divf %115, %116 : vector<64x1xf32>
    %118 = vector.broadcast %117 : vector<64x1xf32> to vector<64x32xf32>
    %119 = arith.subf %111, %118 : vector<64x32xf32>
    %120 = arith.mulf %119, %119 : vector<64x32xf32>
    %cst_46 = arith.constant dense<0.000000e+00> : vector<64xf32>
    %121 = vector.multi_reduction <add>, %120, %cst_46 [1] : vector<64x32xf32> to vector<64xf32>
    %122 = vector.shape_cast %121 : vector<64xf32> to vector<64x1xf32>
    %cst_47 = arith.constant 3.200000e+01 : f32
    %123 = vector.broadcast %cst_47 : f32 to vector<64x1xf32>
    %124 = arith.divf %122, %123 : vector<64x1xf32>
    %125 = vector.broadcast %117 : vector<64x1xf32> to vector<64x32xf32>
    %126 = arith.subf %111, %125 : vector<64x32xf32>
    %cst_48 = arith.constant 9.99999974E-6 : f32
    %127 = vector.broadcast %cst_48 : f32 to vector<64x1xf32>
    %128 = arith.addf %124, %127 : vector<64x1xf32>
    %129 = math.rsqrt %128 : vector<64x1xf32>
    %130 = vector.broadcast %129 : vector<64x1xf32> to vector<64x32xf32>
    %131 = arith.mulf %126, %130 : vector<64x32xf32>
    %132 = vector.extract_strided_slice %113 {offsets = [0, 0], sizes = [1, 32], strides = [1, 1]} : vector<2x32xf32> to vector<1x32xf32>
    %133 = vector.broadcast %132 : vector<1x32xf32> to vector<64x32xf32>
    %134 = arith.mulf %131, %133 : vector<64x32xf32>
    %135 = vector.extract_strided_slice %113 {offsets = [1, 0], sizes = [1, 32], strides = [1, 1]} : vector<2x32xf32> to vector<1x32xf32>
    %136 = vector.broadcast %135 : vector<1x32xf32> to vector<64x32xf32>
    %137 = arith.addf %134, %136 : vector<64x32xf32>
    %138 = arith.truncf %137 : vector<64x32xf32> to vector<64x32xbf16>
    %c0_49 = arith.constant 0 : index
    %c0_50 = arith.constant 0 : index
    %c0_51 = arith.constant 0 : index
    %139 = vector.load %arg9[%c0_49, %c0_50, %c0_51] : memref<2x32x128xbf16, #tpu.memory_space<vmem>>, vector<1x32x128xbf16>
    %140 = vector.shape_cast %139 : vector<1x32x128xbf16> to vector<32x128xbf16>
    %cst_52 = arith.constant dense<0.000000e+00> : vector<64x128xf32>
    %141 = tpu.matmul %138, %140, %cst_52 {dimension_numbers = #tpu.dot_dimension_numbers<[1], [0], [0], [1], [0, 0, 1, 1], [], []>} : vector<64x32xbf16>, vector<32x128xbf16>, vector<64x128xf32> -> vector<64x128xf32>
    %c0_53 = arith.constant 0 : index
    %c0_54 = arith.constant 0 : index
    %c0_55 = arith.constant 0 : index
    %142 = vector.load %arg10[%c0_53, %c0_54, %c0_55] : memref<2x1x128xf32, #tpu.memory_space<vmem>>, vector<1x1x128xf32>
    %143 = vector.shape_cast %142 : vector<1x1x128xf32> to vector<1x128xf32>
    %144 = vector.broadcast %143 : vector<1x128xf32> to vector<64x128xf32>
    %145 = arith.addf %141, %144 : vector<64x128xf32>
    %146 = arith.mulf %145, %145 : vector<64x128xf32>
    %147 = arith.mulf %145, %146 : vector<64x128xf32>
    %cst_56 = arith.constant 4.471500e-02 : f32
    %148 = vector.broadcast %cst_56 : f32 to vector<64x128xf32>
    %149 = arith.mulf %148, %147 : vector<64x128xf32>
    %150 = arith.addf %145, %149 : vector<64x128xf32>
    %cst_57 = arith.constant 0.797884583 : f32
    %151 = vector.broadcast %cst_57 : f32 to vector<64x128xf32>
    %152 = arith.mulf %151, %150 : vector<64x128xf32>
    %153 = math.tanh %152 : vector<64x128xf32>
    %cst_58 = arith.constant 1.000000e+00 : f32
    %154 = vector.broadcast %cst_58 : f32 to vector<64x128xf32>
    %155 = arith.addf %154, %153 : vector<64x128xf32>
    %cst_59 = arith.constant 5.000000e-01 : f32
    %156 = vector.broadcast %cst_59 : f32 to vector<64x128xf32>
    %157 = arith.mulf %156, %155 : vector<64x128xf32>
    %158 = arith.mulf %145, %157 : vector<64x128xf32>
    %159 = arith.truncf %158 : vector<64x128xf32> to vector<64x128xbf16>
    %c0_60 = arith.constant 0 : index
    %c0_61 = arith.constant 0 : index
    %c0_62 = arith.constant 0 : index
    %160 = vector.load %arg11[%c0_60, %c0_61, %c0_62] : memref<2x128x32xbf16, #tpu.memory_space<vmem>>, vector<1x128x32xbf16>
    %161 = vector.shape_cast %160 : vector<1x128x32xbf16> to vector<128x32xbf16>
    %cst_63 = arith.constant dense<0.000000e+00> : vector<64x32xf32>
    %162 = tpu.matmul %159, %161, %cst_63 {dimension_numbers = #tpu.dot_dimension_numbers<[1], [0], [0], [1], [0, 0, 1, 1], [], []>} : vector<64x128xbf16>, vector<128x32xbf16>, vector<64x32xf32> -> vector<64x32xf32>
    %163 = arith.addf %111, %162 : vector<64x32xf32>
    %c0_64 = arith.constant 0 : index
    %c0_65 = arith.constant 0 : index
    %c0_66 = arith.constant 0 : index
    %164 = vector.load %arg12[%c0_64, %c0_65, %c0_66] : memref<2x1x32xf32, #tpu.memory_space<vmem>>, vector<1x1x32xf32>
    %165 = vector.shape_cast %164 : vector<1x1x32xf32> to vector<1x32xf32>
    %166 = vector.broadcast %165 : vector<1x32xf32> to vector<64x32xf32>
    %167 = arith.addf %163, %166 : vector<64x32xf32>
    %c2 = arith.constant 2 : index
    %c0_67 = arith.constant 0 : index
    %c0_68 = arith.constant 0 : index
    %168 = vector.load %arg4[%c2, %c0_67, %c0_68] : memref<5x2x32xf32, #tpu.memory_space<vmem>>, vector<1x2x32xf32>
    %169 = vector.shape_cast %168 : vector<1x2x32xf32> to vector<2x32xf32>
    %cst_69 = arith.constant dense<0.000000e+00> : vector<64xf32>
    %170 = vector.multi_reduction <add>, %167, %cst_69 [1] : vector<64x32xf32> to vector<64xf32>
    %171 = vector.shape_cast %170 : vector<64xf32> to vector<64x1xf32>
    %cst_70 = arith.constant 3.200000e+01 : f32
    %172 = vector.broadcast %cst_70 : f32 to vector<64x1xf32>
    %173 = arith.divf %171, %172 : vector<64x1xf32>
    %174 = vector.broadcast %173 : vector<64x1xf32> to vector<64x32xf32>
    %175 = arith.subf %167, %174 : vector<64x32xf32>
    %176 = arith.mulf %175, %175 : vector<64x32xf32>
    %cst_71 = arith.constant dense<0.000000e+00> : vector<64xf32>
    %177 = vector.multi_reduction <add>, %176, %cst_71 [1] : vector<64x32xf32> to vector<64xf32>
    %178 = vector.shape_cast %177 : vector<64xf32> to vector<64x1xf32>
    %cst_72 = arith.constant 3.200000e+01 : f32
    %179 = vector.broadcast %cst_72 : f32 to vector<64x1xf32>
    %180 = arith.divf %178, %179 : vector<64x1xf32>
    %181 = vector.broadcast %173 : vector<64x1xf32> to vector<64x32xf32>
    %182 = arith.subf %167, %181 : vector<64x32xf32>
    %cst_73 = arith.constant 9.99999974E-6 : f32
    %183 = vector.broadcast %cst_73 : f32 to vector<64x1xf32>
    %184 = arith.addf %180, %183 : vector<64x1xf32>
    %185 = math.rsqrt %184 : vector<64x1xf32>
    %186 = vector.broadcast %185 : vector<64x1xf32> to vector<64x32xf32>
    %187 = arith.mulf %182, %186 : vector<64x32xf32>
    %188 = vector.extract_strided_slice %169 {offsets = [0, 0], sizes = [1, 32], strides = [1, 1]} : vector<2x32xf32> to vector<1x32xf32>
    %189 = vector.broadcast %188 : vector<1x32xf32> to vector<64x32xf32>
    %190 = arith.mulf %187, %189 : vector<64x32xf32>
    %191 = vector.extract_strided_slice %169 {offsets = [1, 0], sizes = [1, 32], strides = [1, 1]} : vector<2x32xf32> to vector<1x32xf32>
    %192 = vector.broadcast %191 : vector<1x32xf32> to vector<64x32xf32>
    %193 = arith.addf %190, %192 : vector<64x32xf32>
    %194 = arith.truncf %193 : vector<64x32xf32> to vector<64x32xbf16>
    %c1_74 = arith.constant 1 : index
    %c0_75 = arith.constant 0 : index
    %c0_76 = arith.constant 0 : index
    %195 = vector.load %arg5[%c1_74, %c0_75, %c0_76] : memref<2x32x96xbf16, #tpu.memory_space<vmem>>, vector<1x32x96xbf16>
    %196 = vector.shape_cast %195 : vector<1x32x96xbf16> to vector<32x96xbf16>
    %cst_77 = arith.constant dense<0.000000e+00> : vector<64x96xf32>
    %197 = tpu.matmul %194, %196, %cst_77 {dimension_numbers = #tpu.dot_dimension_numbers<[1], [0], [0], [1], [0, 0, 1, 1], [], []>} : vector<64x32xbf16>, vector<32x96xbf16>, vector<64x96xf32> -> vector<64x96xf32>
    %c1_78 = arith.constant 1 : index
    %c0_79 = arith.constant 0 : index
    %c0_80 = arith.constant 0 : index
    %198 = vector.load %arg6[%c1_78, %c0_79, %c0_80] : memref<2x1x96xf32, #tpu.memory_space<vmem>>, vector<1x1x96xf32>
    %199 = vector.shape_cast %198 : vector<1x1x96xf32> to vector<1x96xf32>
    %200 = vector.broadcast %199 : vector<1x96xf32> to vector<64x96xf32>
    %201 = arith.addf %197, %200 : vector<64x96xf32>
    %202 = vector.shape_cast %201 : vector<64x96xf32> to vector<4x16x96xf32>
    %cst_81 = arith.constant 0.000000e+00 : f32
    %203 = vector.broadcast %cst_81 : f32 to vector<64x32xf32>
    %204 = vector.extract_strided_slice %202 {offsets = [0, 0, 0], sizes = [4, 16, 16], strides = [1, 1, 1]} : vector<4x16x96xf32> to vector<4x16x16xf32>
    %205 = arith.truncf %204 : vector<4x16x16xf32> to vector<4x16x16xbf16>
    %206 = vector.extract_strided_slice %202 {offsets = [0, 0, 32], sizes = [4, 16, 16], strides = [1, 1, 1]} : vector<4x16x96xf32> to vector<4x16x16xf32>
    %207 = arith.truncf %206 : vector<4x16x16xf32> to vector<4x16x16xbf16>
    %208 = vector.extract_strided_slice %202 {offsets = [0, 0, 64], sizes = [4, 16, 16], strides = [1, 1, 1]} : vector<4x16x96xf32> to vector<4x16x16xf32>
    %209 = arith.truncf %208 : vector<4x16x16xf32> to vector<4x16x16xbf16>
    "tpu.trace_start"() <{level = 10 : i32, message = "nqd,nkd->nqk"}> : () -> ()
    %cst_82 = arith.constant dense<0.000000e+00> : vector<4x16x16xf32>
    %210 = tpu.matmul %205, %207, %cst_82 {dimension_numbers = #tpu.dot_dimension_numbers<[2], [2], [1], [1], [0, 0, 0, 1, 1, 1], [0], [0]>} : vector<4x16x16xbf16>, vector<4x16x16xbf16>, vector<4x16x16xf32> -> vector<4x16x16xf32>
    "tpu.trace_stop"() : () -> ()
    %cst_83 = arith.constant 2.500000e-01 : f32
    %211 = vector.broadcast %cst_83 : f32 to vector<4x16x16xf32>
    %212 = arith.mulf %210, %211 : vector<4x16x16xf32>
    %213 = arith.addf %212, %12 : vector<4x16x16xf32>
    %cst_84 = arith.constant dense<0xFF800000> : vector<4x16xf32>
    %214 = vector.multi_reduction <maximumf>, %213, %cst_84 [2] : vector<4x16x16xf32> to vector<4x16xf32>
    %215 = vector.shape_cast %214 : vector<4x16xf32> to vector<4x16x1xf32>
    %216 = vector.broadcast %215 : vector<4x16x1xf32> to vector<4x16x16xf32>
    %217 = arith.subf %213, %216 : vector<4x16x16xf32>
    %218 = math.exp %217 : vector<4x16x16xf32>
    %cst_85 = arith.constant dense<0.000000e+00> : vector<4x16xf32>
    %219 = vector.multi_reduction <add>, %218, %cst_85 [2] : vector<4x16x16xf32> to vector<4x16xf32>
    %220 = vector.shape_cast %219 : vector<4x16xf32> to vector<4x16x1xf32>
    %221 = tpu.reciprocal %220 {approx = true} : vector<4x16x1xf32> -> vector<4x16x1xf32>
    %222 = vector.broadcast %221 : vector<4x16x1xf32> to vector<4x16x16xf32>
    %223 = arith.mulf %218, %222 : vector<4x16x16xf32>
    %224 = arith.truncf %223 : vector<4x16x16xf32> to vector<4x16x16xbf16>
    "tpu.trace_start"() <{level = 10 : i32, message = "nqk,nkd->nqd"}> : () -> ()
    %cst_86 = arith.constant dense<0.000000e+00> : vector<4x16x16xf32>
    %225 = tpu.matmul %224, %209, %cst_86 {dimension_numbers = #tpu.dot_dimension_numbers<[2], [1], [1], [2], [0, 0, 0, 1, 1, 2], [0], [0]>} : vector<4x16x16xbf16>, vector<4x16x16xbf16>, vector<4x16x16xf32> -> vector<4x16x16xf32>
    "tpu.trace_stop"() : () -> ()
    %226 = vector.shape_cast %225 : vector<4x16x16xf32> to vector<64x16xf32>
    %227 = arith.truncf %226 : vector<64x16xf32> to vector<64x16xbf16>
    %c1_87 = arith.constant 1 : index
    %c0_88 = arith.constant 0 : index
    %c0_89 = arith.constant 0 : index
    %228 = vector.load %arg7[%c1_87, %c0_88, %c0_89] : memref<2x32x32xbf16, #tpu.memory_space<vmem>>, vector<1x32x32xbf16>
    %229 = vector.shape_cast %228 : vector<1x32x32xbf16> to vector<32x32xbf16>
    %230 = vector.extract_strided_slice %229 {offsets = [0, 0], sizes = [16, 32], strides = [1, 1]} : vector<32x32xbf16> to vector<16x32xbf16>
    %cst_90 = arith.constant dense<0.000000e+00> : vector<64x32xf32>
    %231 = tpu.matmul %227, %230, %cst_90 {dimension_numbers = #tpu.dot_dimension_numbers<[1], [0], [0], [1], [0, 0, 1, 1], [], []>} : vector<64x16xbf16>, vector<16x32xbf16>, vector<64x32xf32> -> vector<64x32xf32>
    %232 = arith.addf %203, %231 : vector<64x32xf32>
    %233 = vector.extract_strided_slice %202 {offsets = [0, 0, 16], sizes = [4, 16, 16], strides = [1, 1, 1]} : vector<4x16x96xf32> to vector<4x16x16xf32>
    %234 = arith.truncf %233 : vector<4x16x16xf32> to vector<4x16x16xbf16>
    %235 = vector.extract_strided_slice %202 {offsets = [0, 0, 48], sizes = [4, 16, 16], strides = [1, 1, 1]} : vector<4x16x96xf32> to vector<4x16x16xf32>
    %236 = arith.truncf %235 : vector<4x16x16xf32> to vector<4x16x16xbf16>
    %237 = vector.extract_strided_slice %202 {offsets = [0, 0, 80], sizes = [4, 16, 16], strides = [1, 1, 1]} : vector<4x16x96xf32> to vector<4x16x16xf32>
    %238 = arith.truncf %237 : vector<4x16x16xf32> to vector<4x16x16xbf16>
    "tpu.trace_start"() <{level = 10 : i32, message = "nqd,nkd->nqk"}> : () -> ()
    %cst_91 = arith.constant dense<0.000000e+00> : vector<4x16x16xf32>
    %239 = tpu.matmul %234, %236, %cst_91 {dimension_numbers = #tpu.dot_dimension_numbers<[2], [2], [1], [1], [0, 0, 0, 1, 1, 1], [0], [0]>} : vector<4x16x16xbf16>, vector<4x16x16xbf16>, vector<4x16x16xf32> -> vector<4x16x16xf32>
    "tpu.trace_stop"() : () -> ()
    %cst_92 = arith.constant 2.500000e-01 : f32
    %240 = vector.broadcast %cst_92 : f32 to vector<4x16x16xf32>
    %241 = arith.mulf %239, %240 : vector<4x16x16xf32>
    %242 = arith.addf %241, %12 : vector<4x16x16xf32>
    %cst_93 = arith.constant dense<0xFF800000> : vector<4x16xf32>
    %243 = vector.multi_reduction <maximumf>, %242, %cst_93 [2] : vector<4x16x16xf32> to vector<4x16xf32>
    %244 = vector.shape_cast %243 : vector<4x16xf32> to vector<4x16x1xf32>
    %245 = vector.broadcast %244 : vector<4x16x1xf32> to vector<4x16x16xf32>
    %246 = arith.subf %242, %245 : vector<4x16x16xf32>
    %247 = math.exp %246 : vector<4x16x16xf32>
    %cst_94 = arith.constant dense<0.000000e+00> : vector<4x16xf32>
    %248 = vector.multi_reduction <add>, %247, %cst_94 [2] : vector<4x16x16xf32> to vector<4x16xf32>
    %249 = vector.shape_cast %248 : vector<4x16xf32> to vector<4x16x1xf32>
    %250 = tpu.reciprocal %249 {approx = true} : vector<4x16x1xf32> -> vector<4x16x1xf32>
    %251 = vector.broadcast %250 : vector<4x16x1xf32> to vector<4x16x16xf32>
    %252 = arith.mulf %247, %251 : vector<4x16x16xf32>
    %253 = arith.truncf %252 : vector<4x16x16xf32> to vector<4x16x16xbf16>
    "tpu.trace_start"() <{level = 10 : i32, message = "nqk,nkd->nqd"}> : () -> ()
    %cst_95 = arith.constant dense<0.000000e+00> : vector<4x16x16xf32>
    %254 = tpu.matmul %253, %238, %cst_95 {dimension_numbers = #tpu.dot_dimension_numbers<[2], [1], [1], [2], [0, 0, 0, 1, 1, 2], [0], [0]>} : vector<4x16x16xbf16>, vector<4x16x16xbf16>, vector<4x16x16xf32> -> vector<4x16x16xf32>
    "tpu.trace_stop"() : () -> ()
    %255 = vector.shape_cast %254 : vector<4x16x16xf32> to vector<64x16xf32>
    %256 = arith.truncf %255 : vector<64x16xf32> to vector<64x16xbf16>
    %c1_96 = arith.constant 1 : index
    %c0_97 = arith.constant 0 : index
    %c0_98 = arith.constant 0 : index
    %257 = vector.load %arg7[%c1_96, %c0_97, %c0_98] : memref<2x32x32xbf16, #tpu.memory_space<vmem>>, vector<1x32x32xbf16>
    %258 = vector.shape_cast %257 : vector<1x32x32xbf16> to vector<32x32xbf16>
    %259 = vector.extract_strided_slice %258 {offsets = [16, 0], sizes = [16, 32], strides = [1, 1]} : vector<32x32xbf16> to vector<16x32xbf16>
    %cst_99 = arith.constant dense<0.000000e+00> : vector<64x32xf32>
    %260 = tpu.matmul %256, %259, %cst_99 {dimension_numbers = #tpu.dot_dimension_numbers<[1], [0], [0], [1], [0, 0, 1, 1], [], []>} : vector<64x16xbf16>, vector<16x32xbf16>, vector<64x32xf32> -> vector<64x32xf32>
    %261 = arith.addf %232, %260 : vector<64x32xf32>
    %262 = arith.addf %167, %261 : vector<64x32xf32>
    %c1_100 = arith.constant 1 : index
    %c0_101 = arith.constant 0 : index
    %c0_102 = arith.constant 0 : index
    %263 = vector.load %arg8[%c1_100, %c0_101, %c0_102] : memref<2x1x32xf32, #tpu.memory_space<vmem>>, vector<1x1x32xf32>
    %264 = vector.shape_cast %263 : vector<1x1x32xf32> to vector<1x32xf32>
    %265 = vector.broadcast %264 : vector<1x32xf32> to vector<64x32xf32>
    %266 = arith.addf %262, %265 : vector<64x32xf32>
    %c3 = arith.constant 3 : index
    %c0_103 = arith.constant 0 : index
    %c0_104 = arith.constant 0 : index
    %267 = vector.load %arg4[%c3, %c0_103, %c0_104] : memref<5x2x32xf32, #tpu.memory_space<vmem>>, vector<1x2x32xf32>
    %268 = vector.shape_cast %267 : vector<1x2x32xf32> to vector<2x32xf32>
    %cst_105 = arith.constant dense<0.000000e+00> : vector<64xf32>
    %269 = vector.multi_reduction <add>, %266, %cst_105 [1] : vector<64x32xf32> to vector<64xf32>
    %270 = vector.shape_cast %269 : vector<64xf32> to vector<64x1xf32>
    %cst_106 = arith.constant 3.200000e+01 : f32
    %271 = vector.broadcast %cst_106 : f32 to vector<64x1xf32>
    %272 = arith.divf %270, %271 : vector<64x1xf32>
    %273 = vector.broadcast %272 : vector<64x1xf32> to vector<64x32xf32>
    %274 = arith.subf %266, %273 : vector<64x32xf32>
    %275 = arith.mulf %274, %274 : vector<64x32xf32>
    %cst_107 = arith.constant dense<0.000000e+00> : vector<64xf32>
    %276 = vector.multi_reduction <add>, %275, %cst_107 [1] : vector<64x32xf32> to vector<64xf32>
    %277 = vector.shape_cast %276 : vector<64xf32> to vector<64x1xf32>
    %cst_108 = arith.constant 3.200000e+01 : f32
    %278 = vector.broadcast %cst_108 : f32 to vector<64x1xf32>
    %279 = arith.divf %277, %278 : vector<64x1xf32>
    %280 = vector.broadcast %272 : vector<64x1xf32> to vector<64x32xf32>
    %281 = arith.subf %266, %280 : vector<64x32xf32>
    %cst_109 = arith.constant 9.99999974E-6 : f32
    %282 = vector.broadcast %cst_109 : f32 to vector<64x1xf32>
    %283 = arith.addf %279, %282 : vector<64x1xf32>
    %284 = math.rsqrt %283 : vector<64x1xf32>
    %285 = vector.broadcast %284 : vector<64x1xf32> to vector<64x32xf32>
    %286 = arith.mulf %281, %285 : vector<64x32xf32>
    %287 = vector.extract_strided_slice %268 {offsets = [0, 0], sizes = [1, 32], strides = [1, 1]} : vector<2x32xf32> to vector<1x32xf32>
    %288 = vector.broadcast %287 : vector<1x32xf32> to vector<64x32xf32>
    %289 = arith.mulf %286, %288 : vector<64x32xf32>
    %290 = vector.extract_strided_slice %268 {offsets = [1, 0], sizes = [1, 32], strides = [1, 1]} : vector<2x32xf32> to vector<1x32xf32>
    %291 = vector.broadcast %290 : vector<1x32xf32> to vector<64x32xf32>
    %292 = arith.addf %289, %291 : vector<64x32xf32>
    %293 = arith.truncf %292 : vector<64x32xf32> to vector<64x32xbf16>
    %c1_110 = arith.constant 1 : index
    %c0_111 = arith.constant 0 : index
    %c0_112 = arith.constant 0 : index
    %294 = vector.load %arg9[%c1_110, %c0_111, %c0_112] : memref<2x32x128xbf16, #tpu.memory_space<vmem>>, vector<1x32x128xbf16>
    %295 = vector.shape_cast %294 : vector<1x32x128xbf16> to vector<32x128xbf16>
    %cst_113 = arith.constant dense<0.000000e+00> : vector<64x128xf32>
    %296 = tpu.matmul %293, %295, %cst_113 {dimension_numbers = #tpu.dot_dimension_numbers<[1], [0], [0], [1], [0, 0, 1, 1], [], []>} : vector<64x32xbf16>, vector<32x128xbf16>, vector<64x128xf32> -> vector<64x128xf32>
    %c1_114 = arith.constant 1 : index
    %c0_115 = arith.constant 0 : index
    %c0_116 = arith.constant 0 : index
    %297 = vector.load %arg10[%c1_114, %c0_115, %c0_116] : memref<2x1x128xf32, #tpu.memory_space<vmem>>, vector<1x1x128xf32>
    %298 = vector.shape_cast %297 : vector<1x1x128xf32> to vector<1x128xf32>
    %299 = vector.broadcast %298 : vector<1x128xf32> to vector<64x128xf32>
    %300 = arith.addf %296, %299 : vector<64x128xf32>
    %301 = arith.mulf %300, %300 : vector<64x128xf32>
    %302 = arith.mulf %300, %301 : vector<64x128xf32>
    %cst_117 = arith.constant 4.471500e-02 : f32
    %303 = vector.broadcast %cst_117 : f32 to vector<64x128xf32>
    %304 = arith.mulf %303, %302 : vector<64x128xf32>
    %305 = arith.addf %300, %304 : vector<64x128xf32>
    %cst_118 = arith.constant 0.797884583 : f32
    %306 = vector.broadcast %cst_118 : f32 to vector<64x128xf32>
    %307 = arith.mulf %306, %305 : vector<64x128xf32>
    %308 = math.tanh %307 : vector<64x128xf32>
    %cst_119 = arith.constant 1.000000e+00 : f32
    %309 = vector.broadcast %cst_119 : f32 to vector<64x128xf32>
    %310 = arith.addf %309, %308 : vector<64x128xf32>
    %cst_120 = arith.constant 5.000000e-01 : f32
    %311 = vector.broadcast %cst_120 : f32 to vector<64x128xf32>
    %312 = arith.mulf %311, %310 : vector<64x128xf32>
    %313 = arith.mulf %300, %312 : vector<64x128xf32>
    %314 = arith.truncf %313 : vector<64x128xf32> to vector<64x128xbf16>
    %c1_121 = arith.constant 1 : index
    %c0_122 = arith.constant 0 : index
    %c0_123 = arith.constant 0 : index
    %315 = vector.load %arg11[%c1_121, %c0_122, %c0_123] : memref<2x128x32xbf16, #tpu.memory_space<vmem>>, vector<1x128x32xbf16>
    %316 = vector.shape_cast %315 : vector<1x128x32xbf16> to vector<128x32xbf16>
    %cst_124 = arith.constant dense<0.000000e+00> : vector<64x32xf32>
    %317 = tpu.matmul %314, %316, %cst_124 {dimension_numbers = #tpu.dot_dimension_numbers<[1], [0], [0], [1], [0, 0, 1, 1], [], []>} : vector<64x128xbf16>, vector<128x32xbf16>, vector<64x32xf32> -> vector<64x32xf32>
    %318 = arith.addf %266, %317 : vector<64x32xf32>
    %c1_125 = arith.constant 1 : index
    %c0_126 = arith.constant 0 : index
    %c0_127 = arith.constant 0 : index
    %319 = vector.load %arg12[%c1_125, %c0_126, %c0_127] : memref<2x1x32xf32, #tpu.memory_space<vmem>>, vector<1x1x32xf32>
    %320 = vector.shape_cast %319 : vector<1x1x32xf32> to vector<1x32xf32>
    %321 = vector.broadcast %320 : vector<1x32xf32> to vector<64x32xf32>
    %322 = arith.addf %318, %321 : vector<64x32xf32>
    %c4 = arith.constant 4 : index
    %c0_128 = arith.constant 0 : index
    %c0_129 = arith.constant 0 : index
    %323 = vector.load %arg4[%c4, %c0_128, %c0_129] : memref<5x2x32xf32, #tpu.memory_space<vmem>>, vector<1x2x32xf32>
    %324 = vector.shape_cast %323 : vector<1x2x32xf32> to vector<2x32xf32>
    %cst_130 = arith.constant dense<0.000000e+00> : vector<64xf32>
    %325 = vector.multi_reduction <add>, %322, %cst_130 [1] : vector<64x32xf32> to vector<64xf32>
    %326 = vector.shape_cast %325 : vector<64xf32> to vector<64x1xf32>
    %cst_131 = arith.constant 3.200000e+01 : f32
    %327 = vector.broadcast %cst_131 : f32 to vector<64x1xf32>
    %328 = arith.divf %326, %327 : vector<64x1xf32>
    %329 = vector.broadcast %328 : vector<64x1xf32> to vector<64x32xf32>
    %330 = arith.subf %322, %329 : vector<64x32xf32>
    %331 = arith.mulf %330, %330 : vector<64x32xf32>
    %cst_132 = arith.constant dense<0.000000e+00> : vector<64xf32>
    %332 = vector.multi_reduction <add>, %331, %cst_132 [1] : vector<64x32xf32> to vector<64xf32>
    %333 = vector.shape_cast %332 : vector<64xf32> to vector<64x1xf32>
    %cst_133 = arith.constant 3.200000e+01 : f32
    %334 = vector.broadcast %cst_133 : f32 to vector<64x1xf32>
    %335 = arith.divf %333, %334 : vector<64x1xf32>
    %336 = vector.broadcast %328 : vector<64x1xf32> to vector<64x32xf32>
    %337 = arith.subf %322, %336 : vector<64x32xf32>
    %cst_134 = arith.constant 9.99999974E-6 : f32
    %338 = vector.broadcast %cst_134 : f32 to vector<64x1xf32>
    %339 = arith.addf %335, %338 : vector<64x1xf32>
    %340 = math.rsqrt %339 : vector<64x1xf32>
    %341 = vector.broadcast %340 : vector<64x1xf32> to vector<64x32xf32>
    %342 = arith.mulf %337, %341 : vector<64x32xf32>
    %343 = vector.extract_strided_slice %324 {offsets = [0, 0], sizes = [1, 32], strides = [1, 1]} : vector<2x32xf32> to vector<1x32xf32>
    %344 = vector.broadcast %343 : vector<1x32xf32> to vector<64x32xf32>
    %345 = arith.mulf %342, %344 : vector<64x32xf32>
    %346 = vector.extract_strided_slice %324 {offsets = [1, 0], sizes = [1, 32], strides = [1, 1]} : vector<2x32xf32> to vector<1x32xf32>
    %347 = vector.broadcast %346 : vector<1x32xf32> to vector<64x32xf32>
    %348 = arith.addf %345, %347 : vector<64x32xf32>
    %349 = arith.truncf %348 : vector<64x32xf32> to vector<64x32xbf16>
    %c0_135 = arith.constant 0 : index
    %c0_136 = arith.constant 0 : index
    %350 = vector.load %arg13[%c0_135, %c0_136] : memref<32x128xbf16, #tpu.memory_space<vmem>>, vector<32x128xbf16>
    %cst_137 = arith.constant dense<0.000000e+00> : vector<64x128xf32>
    %351 = tpu.matmul %349, %350, %cst_137 {dimension_numbers = #tpu.dot_dimension_numbers<[1], [0], [0], [1], [0, 0, 1, 1], [], []>} : vector<64x32xbf16>, vector<32x128xbf16>, vector<64x128xf32> -> vector<64x128xf32>
    %cst_138 = arith.constant dense<0xFF800000> : vector<64xf32>
    %352 = vector.multi_reduction <maximumf>, %351, %cst_138 [1] : vector<64x128xf32> to vector<64xf32>
    %353 = vector.shape_cast %352 : vector<64xf32> to vector<64x1xf32>
    %354 = vector.broadcast %353 : vector<64x1xf32> to vector<64x128xf32>
    %355 = arith.subf %351, %354 : vector<64x128xf32>
    %356 = math.exp %355 : vector<64x128xf32>
    %cst_139 = arith.constant dense<0.000000e+00> : vector<64xf32>
    %357 = vector.multi_reduction <add>, %356, %cst_139 [1] : vector<64x128xf32> to vector<64xf32>
    %358 = vector.shape_cast %357 : vector<64xf32> to vector<64x1xf32>
    %359 = math.log %358 : vector<64x1xf32>
    %360 = arith.addf %359, %353 : vector<64x1xf32>
    %361 = vector.broadcast %360 : vector<64x1xf32> to vector<64x128xf32>
    %362 = arith.subf %351, %361 : vector<64x128xf32>
    %c0_140 = arith.constant 0 : index
    %c0_141 = arith.constant 0 : index
    %363 = vector.load %arg2[%c0_140, %c0_141] : memref<64x1xi32, #tpu.memory_space<vmem>>, vector<64x1xi32>
    %364 = tpu.iota {dimensions = array<i32: 1>} : vector<64x128xi32>
    %365 = vector.broadcast %363 : vector<64x1xi32> to vector<64x128xi32>
    %366 = arith.cmpi eq, %364, %365 : vector<64x128xi32>
    %cst_142 = arith.constant 0.000000e+00 : f32
    %367 = vector.broadcast %cst_142 : f32 to vector<64x128xf32>
    %368 = arith.select %366, %362, %367 : vector<64x128xi1>, vector<64x128xf32>
    %c0_143 = arith.constant 0 : index
    %c0_144 = arith.constant 0 : index
    %369 = vector.load %arg3[%c0_143, %c0_144] : memref<64x1xf32, #tpu.memory_space<vmem>>, vector<64x1xf32>
    %370 = vector.broadcast %369 : vector<64x1xf32> to vector<64x128xf32>
    %371 = arith.mulf %368, %370 : vector<64x128xf32>
    %cst_145 = arith.constant dense<0.000000e+00> : vector<64xf32>
    %372 = vector.multi_reduction <add>, %371, %cst_145 [1] : vector<64x128xf32> to vector<64xf32>
    %373 = vector.shape_cast %372 : vector<64xf32> to vector<64x1xf32>
    %374 = vector.shape_cast %373 : vector<64x1xf32> to vector<4x16x1xf32>
    %cst_146 = arith.constant dense<0.000000e+00> : vector<4x1xf32>
    %375 = vector.multi_reduction <add>, %374, %cst_146 [1] : vector<4x16x1xf32> to vector<4x1xf32>
    %c0_147 = arith.constant 0 : index
    %c0_148 = arith.constant 0 : index
    %376 = vector.load %arg14[%c0_147, %c0_148] : memref<4x1xf32, #tpu.memory_space<vmem>>, vector<4x1xf32>
    tpu.vector_store %arg14[%c0_147, %c0_148], %375 {strides = array<i32>} : memref<4x1xf32, #tpu.memory_space<vmem>>, vector<4x1xf32>,
    return
  }
}

</mosaic_0001>

<llo_original>
// kernel: squeeze.1
$region0: #{squeeze.1}
  %s0 = inlined_call_operand.vmem [shape: f32[4], index: 0, kind: input, shape index: {}]
  %s1 = inlined_call_operand.vmem [shape: f32[2,2], index: 1, kind: output, shape index: {}]
  $region1: #{squeeze.1} parent=0
    #allocation0 [shape = 'u8[4096]{0}', space=vmem, size = 0x1000, scoped, tag = 'scoped mem for output reshape']
    #allocation1 [shape = 'u8[4096]{0}', space=vmem, size = 0x1000, scoped, tag = 'scoped mem for input reshape']
    %s3 = ssub.s32 2, 1
    %v4 = vld [vmem:[%s0] sm:%s3]
    %5 = vst [vmem:[#allocation1] sm:%s3] %v4
    %v6 = vld [vmem:[#allocation1] sm:$0x1]
    %vm7 = vcmask 15360
    %8 = vst.msk [vmem:[#allocation0] sm:$0x1] %vm7, %v6
    %v9 = vld [vmem:[#allocation1] sm:$0x1]
    %10 = vrot.lane.b32.xlu0 %v9, 126
    %v11 = vpop.permute.xlu0 %10
    %vm12 = vcmask 15360
    %s13 = scalar_lea.vmem [#allocation0], 1
    %14 = vst.msk [vmem:[%s13] sm:$0x1] %vm12, %v11
    %s16 = ssub.s32 4, 1
    %v17 = vld [vmem:[#allocation0] sm:%s16]
    %s19 = ssub.s32 4, 1
    %20 = vst [vmem:[%s1] sm:%s19] %v17

// kernel: classifier_forward.1
$region0: #{classifier_forward.1}
  #allocation0 [shape = 'u32[]', space=smem, size = 0x4, offset = 0x4, fixed_abs, tag = 'smem constant byte address 0x4 - core index']
  #allocation1 [shape = 'u32[72,128]{1,0:T(1,128)}', space=vmem, size = 0x9000, scoped, tag = 'internal scratch']
  %s0 = inlined_call_operand.vmem [shape: f32[64,32], index: 0, kind: input, shape index: {}]
  %s1 = inlined_call_operand.vmem [shape: f32[4,16], index: 1, kind: input, shape index: {}]
  %s2 = inlined_call_operand.vmem [shape: s32[64,1], index: 2, kind: input, shape index: {}]
  %s3 = inlined_call_operand.vmem [shape: f32[64,1], index: 3, kind: input, shape index: {}]
  %s4 = inlined_call_operand.vmem [shape: f32[5,2,32], index: 4, kind: input, shape index: {}]
  %s5 = inlined_call_operand.vmem [shape: bf16[2,32,96], index: 5, kind: input, shape index: {}]
  %s6 = inlined_call_operand.vmem [shape: f32[2,1,96], index: 6, kind: input, shape index: {}]
  %s7 = inlined_call_operand.vmem [shape: bf16[2,32,32], index: 7, kind: input, shape index: {}]
  %s8 = inlined_call_operand.vmem [shape: f32[2,1,32], index: 8, kind: input, shape index: {}]
  %s9 = inlined_call_operand.vmem [shape: bf16[2,32,128], index: 9, kind: input, shape index: {}]
  %s10 = inlined_call_operand.vmem [shape: f32[2,1,128], index: 10, kind: input, shape index: {}]
  %s11 = inlined_call_operand.vmem [shape: bf16[2,128,32], index: 11, kind: input, shape index: {}]
  %s12 = inlined_call_operand.vmem [shape: f32[2,1,32], index: 12, kind: input, shape index: {}]
  %s13 = inlined_call_operand.vmem [shape: bf16[32,128], index: 13, kind: input, shape index: {}]
  %s14 = inlined_call_operand.vmem [shape: f32[4,1], index: 14, kind: output, shape index: {}]
  %s15 = sld [smem:[#allocation0]]
  $region66: #{classifier_forward.1} parent=0
    _
  %s17 = ssub.s32 1, %s15
  %s18 = scalar_select 0, %s17, %s15
  // Predicated region
  $region2: #{classifier_forward.1} parent=0 // pred_check
    _
  $region3: #{classifier_forward.1} parent=0 // pred_check_branch
    %20 = sbr.rel (0) target = $region5
  $region4: #{classifier_forward.1} parent=0 // pred_region
    _
  $region5: #{classifier_forward.1} parent=0 // pred_fallthru
    _
  // Predicated region
  $region6: #{classifier_forward.1} parent=0 // pred_check
    _
  $region7: #{classifier_forward.1} parent=0 // pred_check_branch
    %22 = sbr.rel (0) target = $region9
  $region8: #{classifier_forward.1} parent=0 // pred_region
    _
  $region9: #{classifier_forward.1} parent=0 // pred_fallthru
    _
  // Predicated region
  $region10: #{classifier_forward.1} parent=0 // pred_check
    _
  $region11: #{classifier_forward.1} parent=0 // pred_check_branch
    %24 = sbr.rel (0) target = $region13
  $region12: #{classifier_forward.1} parent=0 // pred_region
    _
  $region13: #{classifier_forward.1} parent=0 // pred_fallthru
    _
  // Predicated region
  $region14: #{classifier_forward.1} parent=0 // pred_check
    _
  $region15: #{classifier_forward.1} parent=0 // pred_check_branch
    %26 = sbr.rel (0) target = $region17
  $region16: #{classifier_forward.1} parent=0 // pred_region
    _
  $region17: #{classifier_forward.1} parent=0 // pred_fallthru
    _
  // Predicated region
  $region18: #{classifier_forward.1} parent=0 // pred_check
    _
  $region19: #{classifier_forward.1} parent=0 // pred_check_branch
    %28 = sbr.rel (0) target = $region21
  $region20: #{classifier_forward.1} parent=0 // pred_region
    _
  $region21: #{classifier_forward.1} parent=0 // pred_fallthru
    _
  // Predicated region
  $region22: #{classifier_forward.1} parent=0 // pred_check
    _
  $region23: #{classifier_forward.1} parent=0 // pred_check_branch
    %30 = sbr.rel (0) target = $region25
  $region24: #{classifier_forward.1} parent=0 // pred_region
    _
  $region25: #{classifier_forward.1} parent=0 // pred_fallthru
    _
  // Predicated region
  $region26: #{classifier_forward.1} parent=0 // pred_check
    _
  $region27: #{classifier_forward.1} parent=0 // pred_check_branch
    %32 = sbr.rel (0) target = $region29
  $region28: #{classifier_forward.1} parent=0 // pred_region
    _
  $region29: #{classifier_forward.1} parent=0 // pred_fallthru
    _
  // Predicated region
  $region30: #{classifier_forward.1} parent=0 // pred_check
    _
  $region31: #{classifier_forward.1} parent=0 // pred_check_branch
    %34 = sbr.rel (0) target = $region33
  $region32: #{classifier_forward.1} parent=0 // pred_region
    _
  $region33: #{classifier_forward.1} parent=0 // pred_fallthru
    _
  // Predicated region
  $region34: #{classifier_forward.1} parent=0 // pred_check
    _
  $region35: #{classifier_forward.1} parent=0 // pred_check_branch
    %36 = sbr.rel (0) target = $region37
  $region36: #{classifier_forward.1} parent=0 // pred_region
    _
  $region37: #{classifier_forward.1} parent=0 // pred_fallthru
    _
  // Predicated region
  $region38: #{classifier_forward.1} parent=0 // pred_check
    _
  $region39: #{classifier_forward.1} parent=0 // pred_check_branch
    %38 = sbr.rel (0) target = $region41
  $region40: #{classifier_forward.1} parent=0 // pred_region
    _
  $region41: #{classifier_forward.1} parent=0 // pred_fallthru
    _
  // Predicated region
  $region42: #{classifier_forward.1} parent=0 // pred_check
    _
  $region43: #{classifier_forward.1} parent=0 // pred_check_branch
    %40 = sbr.rel (0) target = $region45
  $region44: #{classifier_forward.1} parent=0 // pred_region
    _
  $region45: #{classifier_forward.1} parent=0 // pred_fallthru
    _
  // Predicated region
  $region46: #{classifier_forward.1} parent=0 // pred_check
    _
  $region47: #{classifier_forward.1} parent=0 // pred_check_branch
    %42 = sbr.rel (0) target = $region49
  $region48: #{classifier_forward.1} parent=0 // pred_region
    _
  $region49: #{classifier_forward.1} parent=0 // pred_fallthru
    _
  // Predicated region
  $region50: #{classifier_forward.1} parent=0 // pred_check
    _
  $region51: #{classifier_forward.1} parent=0 // pred_check_branch
    %44 = sbr.rel (0) target = $region53
  $region52: #{classifier_forward.1} parent=0 // pred_region
    _
  $region53: #{classifier_forward.1} parent=0 // pred_fallthru
    _
  // Predicated region
  $region54: #{classifier_forward.1} parent=0 // pred_check
    _
  $region55: #{classifier_forward.1} parent=0 // pred_check_branch
    %46 = sbr.rel (0) target = $region57
  $region56: #{classifier_forward.1} parent=0 // pred_region
    _
  $region57: #{classifier_forward.1} parent=0 // pred_fallthru
    _
  %v48 = vld [vmem:[%s0] sm:$0xff]
  %v49 = vld [vmem:[%s0 + $0x8] sm:$0xff]
  %v50 = vld [vmem:[%s0 + $0x10] sm:$0xff]
  %v51 = vld [vmem:[%s0 + $0x18] sm:$0xff]
  %v52 = vld [vmem:[%s0 + $0x20] sm:$0xff]
  %v53 = vld [vmem:[%s0 + $0x28] sm:$0xff]
  %v54 = vld [vmem:[%s0 + $0x30] sm:$0xff]
  %v55 = vld [vmem:[%s0 + $0x38] sm:$0xff]
  %v56 = vlaneseq
  %v57 = vshrl.u32 %v56, 7
  %v58 = vadd.s32 %v57, 8
  %v59 = vlaneseq
  %v60 = vand.u32 %v59, 127
  %v61 = vld [vmem:[%s1] sm:$0xf]
  %v63 = vrot.slane %v61, 1
  %v64 = vrot.slane %v61, 2
  %v65 = vrot.slane %v61, 3
  %vm69 = vcmp.gt.f32.partialorder %v61, 0.0
  %vm70 = vcmp.gt.f32.partialorder %v63, 0.0
  %vm71 = vcmp.gt.f32.partialorder %v64, 0.0
  %vm72 = vcmp.gt.f32.partialorder %v65, 0.0
  %vm73 = vcmp.ge.s32.totalorder %v57, %v60
  %vm74 = vcmp.ge.s32.totalorder %v58, %v60
  %v75 = vsel %vm69, 1, 0
  %v76 = vsel %vm70, 1, 0
  %v77 = vsel %vm71, 1, 0
  %v78 = vsel %vm72, 1, 0
  %v79 = vperm.slane %v75, 0
  %v80 = vperm.slane %v76, 0
  %v81 = vperm.slane %v77, 0
  %v82 = vperm.slane %v78, 0
  %vm83 = vcmp.eq.s32.totalorder %v79, 1
  %vm84 = vcmp.eq.s32.totalorder %v80, 1
  %vm85 = vcmp.eq.s32.totalorder %v81, 1
  %vm86 = vcmp.eq.s32.totalorder %v82, 1
  %vm87 = vmand %vm73, %vm83
  %vm88 = vmand %vm74, %vm83
  %vm89 = vmand %vm73, %vm84
  %vm90 = vmand %vm74, %vm84
  %vm91 = vmand %vm73, %vm85
  %vm92 = vmand %vm74, %vm85
  %vm93 = vmand %vm73, %vm86
  %vm94 = vmand %vm74, %vm86
  %v95 = vsel %vm87, 0.0, -1e+09
  %v96 = vsel %vm88, 0.0, -1e+09
  %v97 = vsel %vm89, 0.0, -1e+09
  %v98 = vsel %vm90, 0.0, -1e+09
  %v99 = vsel %vm91, 0.0, -1e+09
  %v100 = vsel %vm92, 0.0, -1e+09
  %v101 = vsel %vm93, 0.0, -1e+09
  %v102 = vsel %vm94, 0.0, -1e+09
  %v103 = vld [vmem:[%s4] sm:$0x3]
  %vm104 = vcmask 261120
  %v105 = vsel %vm104, %v48, 0.0
  %106 = vadd.xlane.f32.xlu0 %v105
  %v107 = vpop.xlane.xlu0 %106
  %v108 = vsel %vm104, %v49, 0.0
  %109 = vadd.xlane.f32.xlu0 %v108
  %v110 = vpop.xlane.xlu0 %109
  %v111 = vsel %vm104, %v50, 0.0
  %112 = vadd.xlane.f32.xlu0 %v111
  %v113 = vpop.xlane.xlu0 %112
  %v114 = vsel %vm104, %v51, 0.0
  %115 = vadd.xlane.f32.xlu0 %v114
  %v116 = vpop.xlane.xlu0 %115
  %v117 = vsel %vm104, %v52, 0.0
  %118 = vadd.xlane.f32.xlu0 %v117
  %v119 = vpop.xlane.xlu0 %118
  %v120 = vsel %vm104, %v53, 0.0
  %121 = vadd.xlane.f32.xlu0 %v120
  %v122 = vpop.xlane.xlu0 %121
  %v123 = vsel %vm104, %v54, 0.0
  %124 = vadd.xlane.f32.xlu0 %v123
  %v125 = vpop.xlane.xlu0 %124
  %v126 = vsel %vm104, %v55, 0.0
  %127 = vadd.xlane.f32.xlu0 %v126
  %v128 = vpop.xlane.xlu0 %127
  %v129 = vrcp.pop 32.0
  %v130 = vmul.f32 32.0, %v129
  %v131 = vsub.f32 1.0, %v130
  %v132 = vmul.f32 %v129, %v131
  %v133 = vadd.f32 %v129, %v132
  %vm134 = vweird.f32 %v129
  %v135 = vsel %vm134, %v129, %v133
  %v136 = vmul.f32 %v107, %v135
  %v137 = vmul.f32 %v110, %v135
  %v138 = vmul.f32 %v113, %v135
  %v139 = vmul.f32 %v116, %v135
  %v140 = vmul.f32 %v119, %v135
  %v141 = vmul.f32 %v122, %v135
  %v142 = vmul.f32 %v125, %v135
  %v143 = vmul.f32 %v128, %v135
  %v144 = vsub.f32 %v48, %v136
  %v145 = vsub.f32 %v49, %v137
  %v146 = vsub.f32 %v50, %v138
  %v147 = vsub.f32 %v51, %v139
  %v148 = vsub.f32 %v52, %v140
  %v149 = vsub.f32 %v53, %v141
  %v150 = vsub.f32 %v54, %v142
  %v151 = vsub.f32 %v55, %v143
  %v152 = vmul.f32 %v144, %v144
  %v153 = vmul.f32 %v145, %v145
  %v154 = vmul.f32 %v146, %v146
  %v155 = vmul.f32 %v147, %v147
  %v156 = vmul.f32 %v148, %v148
  %v157 = vmul.f32 %v149, %v149
  %v158 = vmul.f32 %v150, %v150
  %v159 = vmul.f32 %v151, %v151
  %v160 = vsel %vm104, %v152, 0.0
  %161 = vadd.xlane.f32.xlu0 %v160
  %v162 = vpop.xlane.xlu0 %161
  %v163 = vsel %vm104, %v153, 0.0
  %164 = vadd.xlane.f32.xlu0 %v163
  %v165 = vpop.xlane.xlu0 %164
  %v166 = vsel %vm104, %v154, 0.0
  %167 = vadd.xlane.f32.xlu0 %v166
  %v168 = vpop.xlane.xlu0 %167
  %v169 = vsel %vm104, %v155, 0.0
  %170 = vadd.xlane.f32.xlu0 %v169
  %v171 = vpop.xlane.xlu0 %170
  %v172 = vsel %vm104, %v156, 0.0
  %173 = vadd.xlane.f32.xlu0 %v172
  %v174 = vpop.xlane.xlu0 %173
  %v175 = vsel %vm104, %v157, 0.0
  %176 = vadd.xlane.f32.xlu0 %v175
  %v177 = vpop.xlane.xlu0 %176
  %v178 = vsel %vm104, %v158, 0.0
  %179 = vadd.xlane.f32.xlu0 %v178
  %v180 = vpop.xlane.xlu0 %179
  %v181 = vsel %vm104, %v159, 0.0
  %182 = vadd.xlane.f32.xlu0 %v181
  %v183 = vpop.xlane.xlu0 %182
  %v184 = vmul.f32 %v162, %v135
  %v185 = vmul.f32 %v165, %v135
  %v186 = vmul.f32 %v168, %v135
  %v187 = vmul.f32 %v171, %v135
  %v188 = vmul.f32 %v174, %v135
  %v189 = vmul.f32 %v177, %v135
  %v190 = vmul.f32 %v180, %v135
  %v191 = vmul.f32 %v183, %v135
  %v192 = vadd.f32 %v184, 1e-05
  %v193 = vadd.f32 %v185, 1e-05
  %v194 = vadd.f32 %v186, 1e-05
  %v195 = vadd.f32 %v187, 1e-05
  %v196 = vadd.f32 %v188, 1e-05
  %v197 = vadd.f32 %v189, 1e-05
  %v198 = vadd.f32 %v190, 1e-05
  %v199 = vadd.f32 %v191, 1e-05
  %v200 = vrsqrt.pop %v192
  %v201 = vmul.f32 %v200, %v192
  %v202 = vmul.f32 %v201, %v200
  %v203 = vmul.f32 0.5, %v202
  %v204 = vsub.f32 1.5, %v203
  %v205 = vmul.f32 %v200, %v204
  %vm206 = vweird.f32 %v192
  %vm207 = vweird.f32 %v200
  %vm208 = vmor %vm206, %vm207
  %v209 = vsel %vm208, %v200, %v205
  %v210 = vrsqrt.pop %v193
  %v211 = vmul.f32 %v210, %v193
  %v212 = vmul.f32 %v211, %v210
  %v213 = vmul.f32 0.5, %v212
  %v214 = vsub.f32 1.5, %v213
  %v215 = vmul.f32 %v210, %v214
  %vm216 = vweird.f32 %v193
  %vm217 = vweird.f32 %v210
  %vm218 = vmor %vm216, %vm217
  %v219 = vsel %vm218, %v210, %v215
  %v220 = vrsqrt.pop %v194
  %v221 = vmul.f32 %v220, %v194
  %v222 = vmul.f32 %v221, %v220
  %v223 = vmul.f32 0.5, %v222
  %v224 = vsub.f32 1.5, %v223
  %v225 = vmul.f32 %v220, %v224
  %vm226 = vweird.f32 %v194
  %vm227 = vweird.f32 %v220
  %vm228 = vmor %vm226, %vm227
  %v229 = vsel %vm228, %v220, %v225
  %v230 = vrsqrt.pop %v195
  %v231 = vmul.f32 %v230, %v195
  %v232 = vmul.f32 %v231, %v230
  %v233 = vmul.f32 0.5, %v232
  %v234 = vsub.f32 1.5, %v233
  %v235 = vmul.f32 %v230, %v234
  %vm236 = vweird.f32 %v195
  %vm237 = vweird.f32 %v230
  %vm238 = vmor %vm236, %vm237
  %v239 = vsel %vm238, %v230, %v235
  %v240 = vrsqrt.pop %v196
  %v241 = vmul.f32 %v240, %v196
  %v242 = vmul.f32 %v241, %v240
  %v243 = vmul.f32 0.5, %v242
  %v244 = vsub.f32 1.5, %v243
  %v245 = vmul.f32 %v240, %v244
  %vm246 = vweird.f32 %v196
  %vm247 = vweird.f32 %v240
  %vm248 = vmor %vm246, %vm247
  %v249 = vsel %vm248, %v240, %v245
  %v250 = vrsqrt.pop %v197
  %v251 = vmul.f32 %v250, %v197
  %v252 = vmul.f32 %v251, %v250
  %v253 = vmul.f32 0.5, %v252
  %v254 = vsub.f32 1.5, %v253
  %v255 = vmul.f32 %v250, %v254
  %vm256 = vweird.f32 %v197
  %vm257 = vweird.f32 %v250
  %vm258 = vmor %vm256, %vm257
  %v259 = vsel %vm258, %v250, %v255
  %v260 = vrsqrt.pop %v198
  %v261 = vmul.f32 %v260, %v198
  %v262 = vmul.f32 %v261, %v260
  %v263 = vmul.f32 0.5, %v262
  %v264 = vsub.f32 1.5, %v263
  %v265 = vmul.f32 %v260, %v264
  %vm266 = vweird.f32 %v198
  %vm267 = vweird.f32 %v260
  %vm268 = vmor %vm266, %vm267
  %v269 = vsel %vm268, %v260, %v265
  %v270 = vrsqrt.pop %v199
  %v271 = vmul.f32 %v270, %v199
  %v272 = vmul.f32 %v271, %v270
  %v273 = vmul.f32 0.5, %v272
  %v274 = vsub.f32 1.5, %v273
  %v275 = vmul.f32 %v270, %v274
  %vm276 = vweird.f32 %v199
  %vm277 = vweird.f32 %v270
  %vm278 = vmor %vm276, %vm277
  %v279 = vsel %vm278, %v270, %v275
  %v280 = vmul.f32 %v144, %v209
  %v281 = vmul.f32 %v145, %v219
  %v282 = vmul.f32 %v146, %v229
  %v283 = vmul.f32 %v147, %v239
  %v284 = vmul.f32 %v148, %v249
  %v285 = vmul.f32 %v149, %v259
  %v286 = vmul.f32 %v150, %v269
  %v287 = vmul.f32 %v151, %v279
  %v288 = vperm.slane %v103, 0
  %v289 = vmul.f32 %v280, %v288
  %v290 = vmul.f32 %v281, %v288
  %v291 = vmul.f32 %v282, %v288
  %v292 = vmul.f32 %v283, %v288
  %v293 = vmul.f32 %v284, %v288
  %v294 = vmul.f32 %v285, %v288
  %v295 = vmul.f32 %v286, %v288
  %v296 = vmul.f32 %v287, %v288
  %v297 = vperm.slane %v103, 1
  %v298 = vadd.f32 %v289, %v297
  %v299 = vadd.f32 %v290, %v297
  %v300 = vadd.f32 %v291, %v297
  %v301 = vadd.f32 %v292, %v297
  %v302 = vadd.f32 %v293, %v297
  %v303 = vadd.f32 %v294, %v297
  %v304 = vadd.f32 %v295, %v297
  %v305 = vadd.f32 %v296, %v297
  %v306 = vpack.c.bf16 %v299, %v298
  %v307 = vpack.c.bf16 %v301, %v300
  %v308 = vpack.c.bf16 %v303, %v302
  %v309 = vpack.c.bf16 %v305, %v304
  %v310 = vld [vmem:[%s5] sm:$0xf]
  %v311 = vld [vmem:[%s5 + $0x4] sm:$0xf]
  %v312 = vld [vmem:[%s5 + $0x8] sm:$0xf]
  %v313 = vld [vmem:[%s5 + $0xc] sm:$0xf]
  %v314 = vld [vmem:[%s6] sm:$0x1]
  %v316 = vperm.slane %v314, 0
  %v322 = vunpack.c.l.b16 %v310
  %v323 = vunpack.c.l.b16 %v311
  %v324 = vunpack.c.l.b16 %v312
  %v325 = vunpack.c.l.b16 %v313
  %v326 = vpack.c.b16 %v323, %v322
  %v327 = vpack.c.b16 %v325, %v324
  %v331 = vsel %vm104, %v306, 0
  %v334 = vsel %vm104, %v307, 0
  %v337 = vsel %vm104, %v308, 0
  %v340 = vsel %vm104, %v309, 0
  %342 = vmatpush.bf16.msra.mxu0 0
  %343 = vmatpush.bf16.msra.mxu0 0
  %344 = vmatpush.bf16.msra.mxu0 0
  %345 = vmatpush.bf16.msra.mxu0 0
  %346 = vmatpush.bf16.msra.mxu0 0
  %347 = vmatpush.bf16.msra.mxu0 0
  %348 = vmatpush.bf16.msra.mxu0 %v327
  %349 = vmatpush.bf16.msra.mxu0 %v326
  %350 = vmatmul.bf16.gmra.mxu0 %v331
  %v351 = vpop.f32.mrf.mxu0
  %v352 = vadd.f32 %v316, %v351
  %v353 = vpop.f32.mrf.mxu0
  %v354 = vadd.f32 %v316, %v353
  %355 = vmatmul.bf16.gmra.mxu0 %v334
  %v356 = vpop.f32.mrf.mxu0
  %v357 = vadd.f32 %v316, %v356
  %v358 = vpop.f32.mrf.mxu0
  %v359 = vadd.f32 %v316, %v358
  %360 = vmatmul.bf16.gmra.mxu0 %v337
  %v361 = vpop.f32.mrf.mxu0
  %v362 = vadd.f32 %v316, %v361
  %v363 = vpop.f32.mrf.mxu0
  %v364 = vadd.f32 %v316, %v363
  %365 = vmatmul.bf16.gmra.mxu0 %v340
  %v366 = vpop.f32.mrf.mxu0
  %v367 = vadd.f32 %v316, %v366
  %v368 = vpop.f32.mrf.mxu0
  %v369 = vadd.f32 %v316, %v368
  %370 = vdwg.mxu0
  %v371 = vpack.c.bf16 %v352, %v352
  %v372 = vpack.c.bf16 %v354, %v354
  %v373 = vpack.c.bf16 %v357, %v357
  %v374 = vpack.c.bf16 %v359, %v359
  %v375 = vpack.c.bf16 %v362, %v362
  %v376 = vpack.c.bf16 %v364, %v364
  %v377 = vpack.c.bf16 %v367, %v367
  %v378 = vpack.c.bf16 %v369, %v369
  %v381 = vunpack.c.l.b16 %v371
  %v382 = vunpack.c.l.b16 %v372
  %v383 = vpack.c.b16 %v382, %v381
  %384 = vrot.lane.b32.xlu0 %v383, 96
  %v385 = vpop.permute.xlu0 %384
  %vm386 = vcmask 130048
  %v388 = vsel %vm386, %v383, 0
  %v391 = vsel %vm386, %v385, 0
  %393 = vmatpush.bf16.xpose.msra.mxu0 0
  %394 = vmatpush.bf16.xpose.msra.mxu0 0
  %395 = vmatpush.bf16.xpose.msra.mxu0 0
  %396 = vmatpush.bf16.xpose.msra.mxu0 0
  %397 = vmatpush.bf16.xpose.msra.mxu0 0
  %398 = vmatpush.bf16.xpose.msra.mxu0 0
  %399 = vmatpush.bf16.xpose.msra.mxu0 0
  %400 = vmatpush.bf16.xpose.msra.mxu0 %v391
  %401 = vmatmul.bf16.gmra.mxu0 %v388
  %v402 = vpop.f32.mrf.mxu0
  %v403 = vadd.f32 0.0, %v402
  %v404 = vpop.f32.mrf.mxu0
  %v405 = vadd.f32 0.0, %v404
  %406 = vdwg.mxu0
  %v409 = vunpack.c.l.b16 %v373
  %v410 = vunpack.c.l.b16 %v374
  %v411 = vpack.c.b16 %v410, %v409
  %412 = vrot.lane.b32.xlu0 %v411, 96
  %v413 = vpop.permute.xlu0 %412
  %v415 = vsel %vm386, %v411, 0
  %v418 = vsel %vm386, %v413, 0
  %420 = vmatpush.bf16.xpose.msra.mxu0 0
  %421 = vmatpush.bf16.xpose.msra.mxu0 0
  %422 = vmatpush.bf16.xpose.msra.mxu0 0
  %423 = vmatpush.bf16.xpose.msra.mxu0 0
  %424 = vmatpush.bf16.xpose.msra.mxu0 0
  %425 = vmatpush.bf16.xpose.msra.mxu0 0
  %426 = vmatpush.bf16.xpose.msra.mxu0 0
  %427 = vmatpush.bf16.xpose.msra.mxu0 %v418
  %428 = vmatmul.bf16.gmra.mxu0 %v415
  %v429 = vpop.f32.mrf.mxu0
  %v430 = vadd.f32 0.0, %v429
  %v431 = vpop.f32.mrf.mxu0
  %v432 = vadd.f32 0.0, %v431
  %433 = vdwg.mxu0
  %v436 = vunpack.c.l.b16 %v375
  %v437 = vunpack.c.l.b16 %v376
  %v438 = vpack.c.b16 %v437, %v436
  %439 = vrot.lane.b32.xlu0 %v438, 96
  %v440 = vpop.permute.xlu0 %439
  %v442 = vsel %vm386, %v438, 0
  %v445 = vsel %vm386, %v440, 0
  %447 = vmatpush.bf16.xpose.msra.mxu0 0
  %448 = vmatpush.bf16.xpose.msra.mxu0 0
  %449 = vmatpush.bf16.xpose.msra.mxu0 0
  %450 = vmatpush.bf16.xpose.msra.mxu0 0
  %451 = vmatpush.bf16.xpose.msra.mxu0 0
  %452 = vmatpush.bf16.xpose.msra.mxu0 0
  %453 = vmatpush.bf16.xpose.msra.mxu0 0
  %454 = vmatpush.bf16.xpose.msra.mxu0 %v445
  %455 = vmatmul.bf16.gmra.mxu0 %v442
  %v456 = vpop.f32.mrf.mxu0
  %v457 = vadd.f32 0.0, %v456
  %v458 = vpop.f32.mrf.mxu0
  %v459 = vadd.f32 0.0, %v458
  %460 = vdwg.mxu0
  %v463 = vunpack.c.l.b16 %v377
  %v464 = vunpack.c.l.b16 %v378
  %v465 = vpack.c.b16 %v464, %v463
  %466 = vrot.lane.b32.xlu0 %v465, 96
  %v467 = vpop.permute.xlu0 %466
  %v469 = vsel %vm386, %v465, 0
  %v472 = vsel %vm386, %v467, 0
  %474 = vmatpush.bf16.xpose.msra.mxu0 0
  %475 = vmatpush.bf16.xpose.msra.mxu0 0
  %476 = vmatpush.bf16.xpose.msra.mxu0 0
  %477 = vmatpush.bf16.xpose.msra.mxu0 0
  %478 = vmatpush.bf16.xpose.msra.mxu0 0
  %479 = vmatpush.bf16.xpose.msra.mxu0 0
  %480 = vmatpush.bf16.xpose.msra.mxu0 0
  %481 = vmatpush.bf16.xpose.msra.mxu0 %v472
  %482 = vmatmul.bf16.gmra.mxu0 %v469
  %v483 = vpop.f32.mrf.mxu0
  %v484 = vadd.f32 0.0, %v483
  %v485 = vpop.f32.mrf.mxu0
  %v486 = vadd.f32 0.0, %v485
  %487 = vdwg.mxu0
  %v488 = vmul.f32 %v403, 0.25
  %v489 = vmul.f32 %v405, 0.25
  %v490 = vmul.f32 %v430, 0.25
  %v491 = vmul.f32 %v432, 0.25
  %v492 = vmul.f32 %v457, 0.25
  %v493 = vmul.f32 %v459, 0.25
  %v494 = vmul.f32 %v484, 0.25
  %v495 = vmul.f32 %v486, 0.25
  %v496 = vadd.f32 %v488, %v95
  %v497 = vadd.f32 %v489, %v96
  %v498 = vadd.f32 %v490, %v97
  %v499 = vadd.f32 %v491, %v98
  %v500 = vadd.f32 %v492, %v99
  %v501 = vadd.f32 %v493, %v100
  %v502 = vadd.f32 %v494, %v101
  %v503 = vadd.f32 %v495, %v102
  %v504 = vsel %vm386, %v496, -inf
  %505 = vmax.xlane.f32.xlu0 %v504
  %v506 = vpop.xlane.xlu0 %505
  %v507 = vsel %vm386, %v497, -inf
  %508 = vmax.xlane.f32.xlu0 %v507
  %v509 = vpop.xlane.xlu0 %508
  %v510 = vsel %vm386, %v498, -inf
  %511 = vmax.xlane.f32.xlu0 %v510
  %v512 = vpop.xlane.xlu0 %511
  %v513 = vsel %vm386, %v499, -inf
  %514 = vmax.xlane.f32.xlu0 %v513
  %v515 = vpop.xlane.xlu0 %514
  %v516 = vsel %vm386, %v500, -inf
  %517 = vmax.xlane.f32.xlu0 %v516
  %v518 = vpop.xlane.xlu0 %517
  %v519 = vsel %vm386, %v501, -inf
  %520 = vmax.xlane.f32.xlu0 %v519
  %v521 = vpop.xlane.xlu0 %520
  %v522 = vsel %vm386, %v502, -inf
  %523 = vmax.xlane.f32.xlu0 %v522
  %v524 = vpop.xlane.xlu0 %523
  %v525 = vsel %vm386, %v503, -inf
  %526 = vmax.xlane.f32.xlu0 %v525
  %v527 = vpop.xlane.xlu0 %526
  %v528 = vsub.f32 %v496, %v506
  %v529 = vsub.f32 %v497, %v509
  %v530 = vsub.f32 %v498, %v512
  %v531 = vsub.f32 %v499, %v515
  %v532 = vsub.f32 %v500, %v518
  %v533 = vsub.f32 %v501, %v521
  %v534 = vsub.f32 %v502, %v524
  %v535 = vsub.f32 %v503, %v527
  %v536 = vmul.f32 %v528, 1.442695
  %v537 = vpow.pop %v536
  %v538 = vmul.f32 %v529, 1.442695
  %v539 = vpow.pop %v538
  %v540 = vmul.f32 %v530, 1.442695
  %v541 = vpow.pop %v540
  %v542 = vmul.f32 %v531, 1.442695
  %v543 = vpow.pop %v542
  %v544 = vmul.f32 %v532, 1.442695
  %v545 = vpow.pop %v544
  %v546 = vmul.f32 %v533, 1.442695
  %v547 = vpow.pop %v546
  %v548 = vmul.f32 %v534, 1.442695
  %v549 = vpow.pop %v548
  %v550 = vmul.f32 %v535, 1.442695
  %v551 = vpow.pop %v550
  %v552 = vsel %vm386, %v537, 0.0
  %553 = vadd.xlane.f32.xlu0 %v552
  %v554 = vpop.xlane.xlu0 %553
  %v555 = vsel %vm386, %v539, 0.0
  %556 = vadd.xlane.f32.xlu0 %v555
  %v557 = vpop.xlane.xlu0 %556
  %v558 = vsel %vm386, %v541, 0.0
  %559 = vadd.xlane.f32.xlu0 %v558
  %v560 = vpop.xlane.xlu0 %559
  %v561 = vsel %vm386, %v543, 0.0
  %562 = vadd.xlane.f32.xlu0 %v561
  %v563 = vpop.xlane.xlu0 %562
  %v564 = vsel %vm386, %v545, 0.0
  %565 = vadd.xlane.f32.xlu0 %v564
  %v566 = vpop.xlane.xlu0 %565
  %v567 = vsel %vm386, %v547, 0.0
  %568 = vadd.xlane.f32.xlu0 %v567
  %v569 = vpop.xlane.xlu0 %568
  %v570 = vsel %vm386, %v549, 0.0
  %571 = vadd.xlane.f32.xlu0 %v570
  %v572 = vpop.xlane.xlu0 %571
  %v573 = vsel %vm386, %v551, 0.0
  %574 = vadd.xlane.f32.xlu0 %v573
  %v575 = vpop.xlane.xlu0 %574
  %v576 = vrcp.pop %v554
  %v577 = vrcp.pop %v557
  %v578 = vrcp.pop %v560
  %v579 = vrcp.pop %v563
  %v580 = vrcp.pop %v566
  %v581 = vrcp.pop %v569
  %v582 = vrcp.pop %v572
  %v583 = vrcp.pop %v575
  %v584 = vmul.f32 %v537, %v576
  %v585 = vmul.f32 %v539, %v577
  %v586 = vmul.f32 %v541, %v578
  %v587 = vmul.f32 %v543, %v579
  %v588 = vmul.f32 %v545, %v580
  %v589 = vmul.f32 %v547, %v581
  %v590 = vmul.f32 %v549, %v582
  %v591 = vmul.f32 %v551, %v583
  %v592 = vpack.c.bf16 %v584, %v584
  %v593 = vpack.c.bf16 %v585, %v585
  %v594 = vpack.c.bf16 %v586, %v586
  %v595 = vpack.c.bf16 %v587, %v587
  %v596 = vpack.c.bf16 %v588, %v588
  %v597 = vpack.c.bf16 %v589, %v589
  %v598 = vpack.c.bf16 %v590, %v590
  %v599 = vpack.c.bf16 %v591, %v591
  %v602 = vunpack.c.l.b16 %v592
  %v603 = vunpack.c.l.b16 %v593
  %v604 = vpack.c.b16 %v603, %v602
  %605 = vrot.lane.b32.xlu0 %v383, 64
  %v606 = vpop.permute.xlu0 %605
  %v609 = vsel %vm386, %v604, 0
  %611 = vmatpush.bf16.msra.mxu0 0
  %612 = vmatpush.bf16.msra.mxu0 0
  %613 = vmatpush.bf16.msra.mxu0 0
  %614 = vmatpush.bf16.msra.mxu0 0
  %615 = vmatpush.bf16.msra.mxu0 0
  %616 = vmatpush.bf16.msra.mxu0 0
  %617 = vmatpush.bf16.msra.mxu0 0
  %618 = vmatpush.bf16.msra.mxu0 %v606
  %619 = vmatmul.bf16.gmra.mxu0 %v609
  %v620 = vpop.f32.mrf.mxu0
  %v621 = vadd.f32 0.0, %v620
  %v622 = vpop.f32.mrf.mxu0
  %v623 = vadd.f32 0.0, %v622
  %624 = vdwg.mxu0
  %v627 = vunpack.c.l.b16 %v594
  %v628 = vunpack.c.l.b16 %v595
  %v629 = vpack.c.b16 %v628, %v627
  %630 = vrot.lane.b32.xlu0 %v411, 64
  %v631 = vpop.permute.xlu0 %630
  %v634 = vsel %vm386, %v629, 0
  %636 = vmatpush.bf16.msra.mxu0 0
  %637 = vmatpush.bf16.msra.mxu0 0
  %638 = vmatpush.bf16.msra.mxu0 0
  %639 = vmatpush.bf16.msra.mxu0 0
  %640 = vmatpush.bf16.msra.mxu0 0
  %641 = vmatpush.bf16.msra.mxu0 0
  %642 = vmatpush.bf16.msra.mxu0 0
  %643 = vmatpush.bf16.msra.mxu0 %v631
  %644 = vmatmul.bf16.gmra.mxu0 %v634
  %v645 = vpop.f32.mrf.mxu0
  %v646 = vadd.f32 0.0, %v645
  %v647 = vpop.f32.mrf.mxu0
  %v648 = vadd.f32 0.0, %v647
  %649 = vdwg.mxu0
  %v652 = vunpack.c.l.b16 %v596
  %v653 = vunpack.c.l.b16 %v597
  %v654 = vpack.c.b16 %v653, %v652
  %655 = vrot.lane.b32.xlu0 %v438, 64
  %v656 = vpop.permute.xlu0 %655
  %v659 = vsel %vm386, %v654, 0
  %661 = vmatpush.bf16.msra.mxu0 0
  %662 = vmatpush.bf16.msra.mxu0 0
  %663 = vmatpush.bf16.msra.mxu0 0
  %664 = vmatpush.bf16.msra.mxu0 0
  %665 = vmatpush.bf16.msra.mxu0 0
  %666 = vmatpush.bf16.msra.mxu0 0
  %667 = vmatpush.bf16.msra.mxu0 0
  %668 = vmatpush.bf16.msra.mxu0 %v656
  %669 = vmatmul.bf16.gmra.mxu0 %v659
  %v670 = vpop.f32.mrf.mxu0
  %v671 = vadd.f32 0.0, %v670
  %v672 = vpop.f32.mrf.mxu0
  %v673 = vadd.f32 0.0, %v672
  %674 = vdwg.mxu0
  %v677 = vunpack.c.l.b16 %v598
  %v678 = vunpack.c.l.b16 %v599
  %v679 = vpack.c.b16 %v678, %v677
  %680 = vrot.lane.b32.xlu0 %v465, 64
  %v681 = vpop.permute.xlu0 %680
  %v684 = vsel %vm386, %v679, 0
  %686 = vmatpush.bf16.msra.mxu0 0
  %687 = vmatpush.bf16.msra.mxu0 0
  %688 = vmatpush.bf16.msra.mxu0 0
  %689 = vmatpush.bf16.msra.mxu0 0
  %690 = vmatpush.bf16.msra.mxu0 0
  %691 = vmatpush.bf16.msra.mxu0 0
  %692 = vmatpush.bf16.msra.mxu0 0
  %693 = vmatpush.bf16.msra.mxu0 %v681
  %694 = vmatmul.bf16.gmra.mxu0 %v684
  %v695 = vpop.f32.mrf.mxu0
  %v696 = vadd.f32 0.0, %v695
  %v697 = vpop.f32.mrf.mxu0
  %v698 = vadd.f32 0.0, %v697
  %699 = vdwg.mxu0
  %v700 = vpack.c.bf16 %v623, %v621
  %v701 = vpack.c.bf16 %v648, %v646
  %v702 = vpack.c.bf16 %v673, %v671
  %v703 = vpack.c.bf16 %v698, %v696
  %v704 = vld [vmem:[%s7] sm:$0xf]
  %v705 = vld [vmem:[%s7 + $0x4] sm:$0xf]
  %706 = vrot.lane.b32.xlu0 %v383, 112
  %v707 = vpop.permute.xlu0 %706
  %708 = vrot.lane.b32.xlu0 %v383, 80
  %v709 = vpop.permute.xlu0 %708
  %v711 = vsel %vm386, %v707, 0
  %v714 = vsel %vm386, %v709, 0
  %716 = vmatpush.bf16.xpose.msra.mxu0 0
  %717 = vmatpush.bf16.xpose.msra.mxu0 0
  %718 = vmatpush.bf16.xpose.msra.mxu0 0
  %719 = vmatpush.bf16.xpose.msra.mxu0 0
  %720 = vmatpush.bf16.xpose.msra.mxu0 0
  %721 = vmatpush.bf16.xpose.msra.mxu0 0
  %722 = vmatpush.bf16.xpose.msra.mxu0 0
  %723 = vmatpush.bf16.xpose.msra.mxu0 %v714
  %724 = vmatmul.bf16.gmra.mxu0 %v711
  %v725 = vpop.f32.mrf.mxu0
  %v726 = vadd.f32 0.0, %v725
  %v727 = vpop.f32.mrf.mxu0
  %v728 = vadd.f32 0.0, %v727
  %729 = vdwg.mxu0
  %730 = vrot.lane.b32.xlu0 %v411, 112
  %v731 = vpop.permute.xlu0 %730
  %732 = vrot.lane.b32.xlu0 %v411, 80
  %v733 = vpop.permute.xlu0 %732
  %v735 = vsel %vm386, %v731, 0
  %v738 = vsel %vm386, %v733, 0
  %740 = vmatpush.bf16.xpose.msra.mxu0 0
  %741 = vmatpush.bf16.xpose.msra.mxu0 0
  %742 = vmatpush.bf16.xpose.msra.mxu0 0
  %743 = vmatpush.bf16.xpose.msra.mxu0 0
  %744 = vmatpush.bf16.xpose.msra.mxu0 0
  %745 = vmatpush.bf16.xpose.msra.mxu0 0
  %746 = vmatpush.bf16.xpose.msra.mxu0 0
  %747 = vmatpush.bf16.xpose.msra.mxu0 %v738
  %748 = vmatmul.bf16.gmra.mxu0 %v735
  %v749 = vpop.f32.mrf.mxu0
  %v750 = vadd.f32 0.0, %v749
  %v751 = vpop.f32.mrf.mxu0
  %v752 = vadd.f32 0.0, %v751
  %753 = vdwg.mxu0
  %754 = vrot.lane.b32.xlu0 %v438, 112
  %v755 = vpop.permute.xlu0 %754
  %756 = vrot.lane.b32.xlu0 %v438, 80
  %v757 = vpop.permute.xlu0 %756
  %v759 = vsel %vm386, %v755, 0
  %v762 = vsel %vm386, %v757, 0
  %764 = vmatpush.bf16.xpose.msra.mxu0 0
  %765 = vmatpush.bf16.xpose.msra.mxu0 0
  %766 = vmatpush.bf16.xpose.msra.mxu0 0
  %767 = vmatpush.bf16.xpose.msra.mxu0 0
  %768 = vmatpush.bf16.xpose.msra.mxu0 0
  %769 = vmatpush.bf16.xpose.msra.mxu0 0
  %770 = vmatpush.bf16.xpose.msra.mxu0 0
  %771 = vmatpush.bf16.xpose.msra.mxu0 %v762
  %772 = vmatmul.bf16.gmra.mxu0 %v759
  %v773 = vpop.f32.mrf.mxu0
  %v774 = vadd.f32 0.0, %v773
  %v775 = vpop.f32.mrf.mxu0
  %v776 = vadd.f32 0.0, %v775
  %777 = vdwg.mxu0
  %778 = vrot.lane.b32.xlu0 %v465, 112
  %v779 = vpop.permute.xlu0 %778
  %780 = vrot.lane.b32.xlu0 %v465, 80
  %v781 = vpop.permute.xlu0 %780
  %v783 = vsel %vm386, %v779, 0
  %v786 = vsel %vm386, %v781, 0
  %788 = vmatpush.bf16.xpose.msra.mxu0 0
  %789 = vmatpush.bf16.xpose.msra.mxu0 0
  %790 = vmatpush.bf16.xpose.msra.mxu0 0
  %791 = vmatpush.bf16.xpose.msra.mxu0 0
  %792 = vmatpush.bf16.xpose.msra.mxu0 0
  %793 = vmatpush.bf16.xpose.msra.mxu0 0
  %794 = vmatpush.bf16.xpose.msra.mxu0 0
  %795 = vmatpush.bf16.xpose.msra.mxu0 %v786
  %796 = vmatmul.bf16.gmra.mxu0 %v783
  %v797 = vpop.f32.mrf.mxu0
  %v798 = vadd.f32 0.0, %v797
  %v799 = vpop.f32.mrf.mxu0
  %v800 = vadd.f32 0.0, %v799
  %801 = vdwg.mxu0
  %v802 = vmul.f32 %v726, 0.25
  %v803 = vmul.f32 %v728, 0.25
  %v804 = vmul.f32 %v750, 0.25
  %v805 = vmul.f32 %v752, 0.25
  %v806 = vmul.f32 %v774, 0.25
  %v807 = vmul.f32 %v776, 0.25
  %v808 = vmul.f32 %v798, 0.25
  %v809 = vmul.f32 %v800, 0.25
  %v810 = vadd.f32 %v802, %v95
  %v811 = vadd.f32 %v803, %v96
  %v812 = vadd.f32 %v804, %v97
  %v813 = vadd.f32 %v805, %v98
  %v814 = vadd.f32 %v806, %v99
  %v815 = vadd.f32 %v807, %v100
  %v816 = vadd.f32 %v808, %v101
  %v817 = vadd.f32 %v809, %v102
  %v818 = vsel %vm386, %v810, -inf
  %819 = vmax.xlane.f32.xlu0 %v818
  %v820 = vpop.xlane.xlu0 %819
  %v821 = vsel %vm386, %v811, -inf
  %822 = vmax.xlane.f32.xlu0 %v821
  %v823 = vpop.xlane.xlu0 %822
  %v824 = vsel %vm386, %v812, -inf
  %825 = vmax.xlane.f32.xlu0 %v824
  %v826 = vpop.xlane.xlu0 %825
  %v827 = vsel %vm386, %v813, -inf
  %828 = vmax.xlane.f32.xlu0 %v827
  %v829 = vpop.xlane.xlu0 %828
  %v830 = vsel %vm386, %v814, -inf
  %831 = vmax.xlane.f32.xlu0 %v830
  %v832 = vpop.xlane.xlu0 %831
  %v833 = vsel %vm386, %v815, -inf
  %834 = vmax.xlane.f32.xlu0 %v833
  %v835 = vpop.xlane.xlu0 %834
  %v836 = vsel %vm386, %v816, -inf
  %837 = vmax.xlane.f32.xlu0 %v836
  %v838 = vpop.xlane.xlu0 %837
  %v839 = vsel %vm386, %v817, -inf
  %840 = vmax.xlane.f32.xlu0 %v839
  %v841 = vpop.xlane.xlu0 %840
  %v842 = vsub.f32 %v810, %v820
  %v843 = vsub.f32 %v811, %v823
  %v844 = vsub.f32 %v812, %v826
  %v845 = vsub.f32 %v813, %v829
  %v846 = vsub.f32 %v814, %v832
  %v847 = vsub.f32 %v815, %v835
  %v848 = vsub.f32 %v816, %v838
  %v849 = vsub.f32 %v817, %v841
  %v850 = vmul.f32 %v842, 1.442695
  %v851 = vpow.pop %v850
  %v852 = vmul.f32 %v843, 1.442695
  %v853 = vpow.pop %v852
  %v854 = vmul.f32 %v844, 1.442695
  %v855 = vpow.pop %v854
  %v856 = vmul.f32 %v845, 1.442695
  %v857 = vpow.pop %v856
  %v858 = vmul.f32 %v846, 1.442695
  %v859 = vpow.pop %v858
  %v860 = vmul.f32 %v847, 1.442695
  %v861 = vpow.pop %v860
  %v862 = vmul.f32 %v848, 1.442695
  %v863 = vpow.pop %v862
  %v864 = vmul.f32 %v849, 1.442695
  %v865 = vpow.pop %v864
  %v866 = vsel %vm386, %v851, 0.0
  %867 = vadd.xlane.f32.xlu0 %v866
  %v868 = vpop.xlane.xlu0 %867
  %v869 = vsel %vm386, %v853, 0.0
  %870 = vadd.xlane.f32.xlu0 %v869
  %v871 = vpop.xlane.xlu0 %870
  %v872 = vsel %vm386, %v855, 0.0
  %873 = vadd.xlane.f32.xlu0 %v872
  %v874 = vpop.xlane.xlu0 %873
  %v875 = vsel %vm386, %v857, 0.0
  %876 = vadd.xlane.f32.xlu0 %v875
  %v877 = vpop.xlane.xlu0 %876
  %v878 = vsel %vm386, %v859, 0.0
  %879 = vadd.xlane.f32.xlu0 %v878
  %v880 = vpop.xlane.xlu0 %879
  %v881 = vsel %vm386, %v861, 0.0
  %882 = vadd.xlane.f32.xlu0 %v881
  %v883 = vpop.xlane.xlu0 %882
  %v884 = vsel %vm386, %v863, 0.0
  %885 = vadd.xlane.f32.xlu0 %v884
  %v886 = vpop.xlane.xlu0 %885
  %v887 = vsel %vm386, %v865, 0.0
  %888 = vadd.xlane.f32.xlu0 %v887
  %v889 = vpop.xlane.xlu0 %888
  %v890 = vrcp.pop %v868
  %v891 = vrcp.pop %v871
  %v892 = vrcp.pop %v874
  %v893 = vrcp.pop %v877
  %v894 = vrcp.pop %v880
  %v895 = vrcp.pop %v883
  %v896 = vrcp.pop %v886
  %v897 = vrcp.pop %v889
  %v898 = vmul.f32 %v851, %v890
  %v899 = vmul.f32 %v853, %v891
  %v900 = vmul.f32 %v855, %v892
  %v901 = vmul.f32 %v857, %v893
  %v902 = vmul.f32 %v859, %v894
  %v903 = vmul.f32 %v861, %v895
  %v904 = vmul.f32 %v863, %v896
  %v905 = vmul.f32 %v865, %v897
  %v906 = vpack.c.bf16 %v898, %v898
  %v907 = vpack.c.bf16 %v899, %v899
  %v908 = vpack.c.bf16 %v900, %v900
  %v909 = vpack.c.bf16 %v901, %v901
  %v910 = vpack.c.bf16 %v902, %v902
  %v911 = vpack.c.bf16 %v903, %v903
  %v912 = vpack.c.bf16 %v904, %v904
  %v913 = vpack.c.bf16 %v905, %v905
  %v916 = vunpack.c.l.b16 %v906
  %v917 = vunpack.c.l.b16 %v907
  %v918 = vpack.c.b16 %v917, %v916
  %919 = vrot.lane.b32.xlu0 %v383, 48
  %v920 = vpop.permute.xlu0 %919
  %v923 = vsel %vm386, %v918, 0
  %925 = vmatpush.bf16.msra.mxu0 0
  %926 = vmatpush.bf16.msra.mxu0 0
  %927 = vmatpush.bf16.msra.mxu0 0
  %928 = vmatpush.bf16.msra.mxu0 0
  %929 = vmatpush.bf16.msra.mxu0 0
  %930 = vmatpush.bf16.msra.mxu0 0
  %931 = vmatpush.bf16.msra.mxu0 0
  %932 = vmatpush.bf16.msra.mxu0 %v920
  %933 = vmatmul.bf16.gmra.mxu0 %v923
  %v934 = vpop.f32.mrf.mxu0
  %v935 = vadd.f32 0.0, %v934
  %v936 = vpop.f32.mrf.mxu0
  %v937 = vadd.f32 0.0, %v936
  %938 = vdwg.mxu0
  %v941 = vunpack.c.l.b16 %v908
  %v942 = vunpack.c.l.b16 %v909
  %v943 = vpack.c.b16 %v942, %v941
  %944 = vrot.lane.b32.xlu0 %v411, 48
  %v945 = vpop.permute.xlu0 %944
  %v948 = vsel %vm386, %v943, 0
  %950 = vmatpush.bf16.msra.mxu0 0
  %951 = vmatpush.bf16.msra.mxu0 0
  %952 = vmatpush.bf16.msra.mxu0 0
  %953 = vmatpush.bf16.msra.mxu0 0
  %954 = vmatpush.bf16.msra.mxu0 0
  %955 = vmatpush.bf16.msra.mxu0 0
  %956 = vmatpush.bf16.msra.mxu0 0
  %957 = vmatpush.bf16.msra.mxu0 %v945
  %958 = vmatmul.bf16.gmra.mxu0 %v948
  %v959 = vpop.f32.mrf.mxu0
  %v960 = vadd.f32 0.0, %v959
  %v961 = vpop.f32.mrf.mxu0
  %v962 = vadd.f32 0.0, %v961
  %963 = vdwg.mxu0
  %v966 = vunpack.c.l.b16 %v910
  %v967 = vunpack.c.l.b16 %v911
  %v968 = vpack.c.b16 %v967, %v966
  %969 = vrot.lane.b32.xlu0 %v438, 48
  %v970 = vpop.permute.xlu0 %969
  %v973 = vsel %vm386, %v968, 0
  %975 = vmatpush.bf16.msra.mxu0 0
  %976 = vmatpush.bf16.msra.mxu0 0
  %977 = vmatpush.bf16.msra.mxu0 0
  %978 = vmatpush.bf16.msra.mxu0 0
  %979 = vmatpush.bf16.msra.mxu0 0
  %980 = vmatpush.bf16.msra.mxu0 0
  %981 = vmatpush.bf16.msra.mxu0 0
  %982 = vmatpush.bf16.msra.mxu0 %v970
  %983 = vmatmul.bf16.gmra.mxu0 %v973
  %v984 = vpop.f32.mrf.mxu0
  %v985 = vadd.f32 0.0, %v984
  %v986 = vpop.f32.mrf.mxu0
  %v987 = vadd.f32 0.0, %v986
  %988 = vdwg.mxu0
  %v991 = vunpack.c.l.b16 %v912
  %v992 = vunpack.c.l.b16 %v913
  %v993 = vpack.c.b16 %v992, %v991
  %994 = vrot.lane.b32.xlu0 %v465, 48
  %v995 = vpop.permute.xlu0 %994
  %v998 = vsel %vm386, %v993, 0
  %1000 = vmatpush.bf16.msra.mxu0 0
  %1001 = vmatpush.bf16.msra.mxu0 0
  %1002 = vmatpush.bf16.msra.mxu0 0
  %1003 = vmatpush.bf16.msra.mxu0 0
  %1004 = vmatpush.bf16.msra.mxu0 0
  %1005 = vmatpush.bf16.msra.mxu0 0
  %1006 = vmatpush.bf16.msra.mxu0 0
  %1007 = vmatpush.bf16.msra.mxu0 %v995
  %1008 = vmatmul.bf16.gmra.mxu0 %v998
  %v1009 = vpop.f32.mrf.mxu0
  %v1010 = vadd.f32 0.0, %v1009
  %v1011 = vpop.f32.mrf.mxu0
  %v1012 = vadd.f32 0.0, %v1011
  %1013 = vdwg.mxu0
  %v1014 = vpack.c.bf16 %v937, %v935
  %v1015 = vpack.c.bf16 %v962, %v960
  %v1016 = vpack.c.bf16 %v987, %v985
  %v1017 = vpack.c.bf16 %v1012, %v1010
  %v1018 = vld [vmem:[%s7 + $0x8] sm:$0xf]
  %v1019 = vld [vmem:[%s7 + $0xc] sm:$0xf]
  %v1022 = vunpack.c.l.b16 %v1018
  %v1023 = vunpack.c.l.b16 %v1019
  %v1024 = vpack.c.b16 %v1023, %v1022
  %v1027 = vsel %vm386, %v1014, 0
  %v1030 = vsel %vm386, %v1015, 0
  %v1033 = vsel %vm386, %v1016, 0
  %v1036 = vsel %vm386, %v1017, 0
  %1038 = vmatpush.bf16.msra.mxu0 0
  %1039 = vmatpush.bf16.msra.mxu0 0
  %1040 = vmatpush.bf16.msra.mxu0 0
  %1041 = vmatpush.bf16.msra.mxu0 0
  %1042 = vmatpush.bf16.msra.mxu0 0
  %1043 = vmatpush.bf16.msra.mxu0 0
  %1044 = vmatpush.bf16.msra.mxu0 0
  %1045 = vmatpush.bf16.msra.mxu0 %v1024
  %1046 = vmatmul.bf16.gmra.mxu0 %v1027
  %v1047 = vpop.f32.mrf.mxu0
  %v1048 = vadd.f32 0.0, %v1047
  %v1049 = vpop.f32.mrf.mxu0
  %v1050 = vadd.f32 0.0, %v1049
  %1051 = vmatmul.bf16.gmra.mxu0 %v1030
  %v1052 = vpop.f32.mrf.mxu0
  %v1053 = vadd.f32 0.0, %v1052
  %v1054 = vpop.f32.mrf.mxu0
  %v1055 = vadd.f32 0.0, %v1054
  %1056 = vmatmul.bf16.gmra.mxu0 %v1033
  %v1057 = vpop.f32.mrf.mxu0
  %v1058 = vadd.f32 0.0, %v1057
  %v1059 = vpop.f32.mrf.mxu0
  %v1060 = vadd.f32 0.0, %v1059
  %1061 = vmatmul.bf16.gmra.mxu0 %v1036
  %v1062 = vpop.f32.mrf.mxu0
  %v1063 = vadd.f32 0.0, %v1062
  %v1064 = vpop.f32.mrf.mxu0
  %v1065 = vadd.f32 0.0, %v1064
  %1066 = vdwg.mxu0
  %v1069 = vunpack.c.l.b16 %v704
  %v1070 = vunpack.c.l.b16 %v705
  %v1071 = vpack.c.b16 %v1070, %v1069
  %v1074 = vsel %vm386, %v700, 0
  %v1077 = vsel %vm386, %v701, 0
  %v1080 = vsel %vm386, %v702, 0
  %v1083 = vsel %vm386, %v703, 0
  %1085 = vmatpush.bf16.msra.mxu0 0
  %1086 = vmatpush.bf16.msra.mxu0 0
  %1087 = vmatpush.bf16.msra.mxu0 0
  %1088 = vmatpush.bf16.msra.mxu0 0
  %1089 = vmatpush.bf16.msra.mxu0 0
  %1090 = vmatpush.bf16.msra.mxu0 0
  %1091 = vmatpush.bf16.msra.mxu0 0
  %1092 = vmatpush.bf16.msra.mxu0 %v1071
  %1093 = vmatmul.bf16.gmra.mxu0 %v1074
  %v1094 = vpop.f32.mrf.mxu0
  %v1095 = vadd.f32 %v1048, %v1094
  %v1096 = vpop.f32.mrf.mxu0
  %v1097 = vadd.f32 %v1050, %v1096
  %1098 = vmatmul.bf16.gmra.mxu0 %v1077
  %v1099 = vpop.f32.mrf.mxu0
  %v1100 = vadd.f32 %v1053, %v1099
  %v1101 = vpop.f32.mrf.mxu0
  %v1102 = vadd.f32 %v1055, %v1101
  %1103 = vmatmul.bf16.gmra.mxu0 %v1080
  %v1104 = vpop.f32.mrf.mxu0
  %v1105 = vadd.f32 %v1058, %v1104
  %v1106 = vpop.f32.mrf.mxu0
  %v1107 = vadd.f32 %v1060, %v1106
  %1108 = vmatmul.bf16.gmra.mxu0 %v1083
  %v1109 = vpop.f32.mrf.mxu0
  %v1110 = vadd.f32 %v1063, %v1109
  %v1111 = vpop.f32.mrf.mxu0
  %v1112 = vadd.f32 %v1065, %v1111
  %1113 = vdwg.mxu0
  %v1114 = vadd.f32 %v48, %v1095
  %v1115 = vadd.f32 %v49, %v1097
  %v1116 = vadd.f32 %v50, %v1100
  %v1117 = vadd.f32 %v51, %v1102
  %v1118 = vadd.f32 %v52, %v1105
  %v1119 = vadd.f32 %v53, %v1107
  %v1120 = vadd.f32 %v54, %v1110
  %v1121 = vadd.f32 %v55, %v1112
  %v1122 = vld [vmem:[%s8] sm:$0x1]
  %v1124 = vperm.slane %v1122, 0
  %v1126 = vadd.f32 %v1114, %v1124
  %v1127 = vadd.f32 %v1115, %v1124
  %v1128 = vadd.f32 %v1116, %v1124
  %v1129 = vadd.f32 %v1117, %v1124
  %v1130 = vadd.f32 %v1118, %v1124
  %v1131 = vadd.f32 %v1119, %v1124
  %v1132 = vadd.f32 %v1120, %v1124
  %v1133 = vadd.f32 %v1121, %v1124
  %s1134 = scalar_lea.vmem %s4, 2
  %v1135 = vld [vmem:[%s1134] sm:$0x3]
  %v1136 = vsel %vm104, %v1126, 0.0
  %1137 = vadd.xlane.f32.xlu0 %v1136
  %v1138 = vpop.xlane.xlu0 %1137
  %v1139 = vsel %vm104, %v1127, 0.0
  %1140 = vadd.xlane.f32.xlu0 %v1139
  %v1141 = vpop.xlane.xlu0 %1140
  %v1142 = vsel %vm104, %v1128, 0.0
  %1143 = vadd.xlane.f32.xlu0 %v1142
  %v1144 = vpop.xlane.xlu0 %1143
  %v1145 = vsel %vm104, %v1129, 0.0
  %1146 = vadd.xlane.f32.xlu0 %v1145
  %v1147 = vpop.xlane.xlu0 %1146
  %v1148 = vsel %vm104, %v1130, 0.0
  %1149 = vadd.xlane.f32.xlu0 %v1148
  %v1150 = vpop.xlane.xlu0 %1149
  %v1151 = vsel %vm104, %v1131, 0.0
  %1152 = vadd.xlane.f32.xlu0 %v1151
  %v1153 = vpop.xlane.xlu0 %1152
  %v1154 = vsel %vm104, %v1132, 0.0
  %1155 = vadd.xlane.f32.xlu0 %v1154
  %v1156 = vpop.xlane.xlu0 %1155
  %v1157 = vsel %vm104, %v1133, 0.0
  %1158 = vadd.xlane.f32.xlu0 %v1157
  %v1159 = vpop.xlane.xlu0 %1158
  %v1160 = vmul.f32 %v1138, %v135
  %v1161 = vmul.f32 %v1141, %v135
  %v1162 = vmul.f32 %v1144, %v135
  %v1163 = vmul.f32 %v1147, %v135
  %v1164 = vmul.f32 %v1150, %v135
  %v1165 = vmul.f32 %v1153, %v135
  %v1166 = vmul.f32 %v1156, %v135
  %v1167 = vmul.f32 %v1159, %v135
  %v1168 = vsub.f32 %v1126, %v1160
  %v1169 = vsub.f32 %v1127, %v1161
  %v1170 = vsub.f32 %v1128, %v1162
  %v1171 = vsub.f32 %v1129, %v1163
  %v1172 = vsub.f32 %v1130, %v1164
  %v1173 = vsub.f32 %v1131, %v1165
  %v1174 = vsub.f32 %v1132, %v1166
  %v1175 = vsub.f32 %v1133, %v1167
  %v1176 = vmul.f32 %v1168, %v1168
  %v1177 = vmul.f32 %v1169, %v1169
  %v1178 = vmul.f32 %v1170, %v1170
  %v1179 = vmul.f32 %v1171, %v1171
  %v1180 = vmul.f32 %v1172, %v1172
  %v1181 = vmul.f32 %v1173, %v1173
  %v1182 = vmul.f32 %v1174, %v1174
  %v1183 = vmul.f32 %v1175, %v1175
  %v1184 = vsel %vm104, %v1176, 0.0
  %1185 = vadd.xlane.f32.xlu0 %v1184
  %v1186 = vpop.xlane.xlu0 %1185
  %v1187 = vsel %vm104, %v1177, 0.0
  %1188 = vadd.xlane.f32.xlu0 %v1187
  %v1189 = vpop.xlane.xlu0 %1188
  %v1190 = vsel %vm104, %v1178, 0.0
  %1191 = vadd.xlane.f32.xlu0 %v1190
  %v1192 = vpop.xlane.xlu0 %1191
  %v1193 = vsel %vm104, %v1179, 0.0
  %1194 = vadd.xlane.f32.xlu0 %v1193
  %v1195 = vpop.xlane.xlu0 %1194
  %v1196 = vsel %vm104, %v1180, 0.0
  %1197 = vadd.xlane.f32.xlu0 %v1196
  %v1198 = vpop.xlane.xlu0 %1197
  %v1199 = vsel %vm104, %v1181, 0.0
  %1200 = vadd.xlane.f32.xlu0 %v1199
  %v1201 = vpop.xlane.xlu0 %1200
  %v1202 = vsel %vm104, %v1182, 0.0
  %1203 = vadd.xlane.f32.xlu0 %v1202
  %v1204 = vpop.xlane.xlu0 %1203
  %v1205 = vsel %vm104, %v1183, 0.0
  %1206 = vadd.xlane.f32.xlu0 %v1205
  %v1207 = vpop.xlane.xlu0 %1206
  %v1208 = vmul.f32 %v1186, %v135
  %v1209 = vmul.f32 %v1189, %v135
  %v1210 = vmul.f32 %v1192, %v135
  %v1211 = vmul.f32 %v1195, %v135
  %v1212 = vmul.f32 %v1198, %v135
  %v1213 = vmul.f32 %v1201, %v135
  %v1214 = vmul.f32 %v1204, %v135
  %v1215 = vmul.f32 %v1207, %v135
  %v1216 = vadd.f32 %v1208, 1e-05
  %v1217 = vadd.f32 %v1209, 1e-05
  %v1218 = vadd.f32 %v1210, 1e-05
  %v1219 = vadd.f32 %v1211, 1e-05
  %v1220 = vadd.f32 %v1212, 1e-05
  %v1221 = vadd.f32 %v1213, 1e-05
  %v1222 = vadd.f32 %v1214, 1e-05
  %v1223 = vadd.f32 %v1215, 1e-05
  %v1224 = vrsqrt.pop %v1216
  %v1225 = vmul.f32 %v1224, %v1216
  %v1226 = vmul.f32 %v1225, %v1224
  %v1227 = vmul.f32 0.5, %v1226
  %v1228 = vsub.f32 1.5, %v1227
  %v1229 = vmul.f32 %v1224, %v1228
  %vm1230 = vweird.f32 %v1216
  %vm1231 = vweird.f32 %v1224
  %vm1232 = vmor %vm1230, %vm1231
  %v1233 = vsel %vm1232, %v1224, %v1229
  %v1234 = vrsqrt.pop %v1217
  %v1235 = vmul.f32 %v1234, %v1217
  %v1236 = vmul.f32 %v1235, %v1234
  %v1237 = vmul.f32 0.5, %v1236
  %v1238 = vsub.f32 1.5, %v1237
  %v1239 = vmul.f32 %v1234, %v1238
  %vm1240 = vweird.f32 %v1217
  %vm1241 = vweird.f32 %v1234
  %vm1242 = vmor %vm1240, %vm1241
  %v1243 = vsel %vm1242, %v1234, %v1239
  %v1244 = vrsqrt.pop %v1218
  %v1245 = vmul.f32 %v1244, %v1218
  %v1246 = vmul.f32 %v1245, %v1244
  %v1247 = vmul.f32 0.5, %v1246
  %v1248 = vsub.f32 1.5, %v1247
  %v1249 = vmul.f32 %v1244, %v1248
  %vm1250 = vweird.f32 %v1218
  %vm1251 = vweird.f32 %v1244
  %vm1252 = vmor %vm1250, %vm1251
  %v1253 = vsel %vm1252, %v1244, %v1249
  %v1254 = vrsqrt.pop %v1219
  %v1255 = vmul.f32 %v1254, %v1219
  %v1256 = vmul.f32 %v1255, %v1254
  %v1257 = vmul.f32 0.5, %v1256
  %v1258 = vsub.f32 1.5, %v1257
  %v1259 = vmul.f32 %v1254, %v1258
  %vm1260 = vweird.f32 %v1219
  %vm1261 = vweird.f32 %v1254
  %vm1262 = vmor %vm1260, %vm1261
  %v1263 = vsel %vm1262, %v1254, %v1259
  %v1264 = vrsqrt.pop %v1220
  %v1265 = vmul.f32 %v1264, %v1220
  %v1266 = vmul.f32 %v1265, %v1264
  %v1267 = vmul.f32 0.5, %v1266
  %v1268 = vsub.f32 1.5, %v1267
  %v1269 = vmul.f32 %v1264, %v1268
  %vm1270 = vweird.f32 %v1220
  %vm1271 = vweird.f32 %v1264
  %vm1272 = vmor %vm1270, %vm1271
  %v1273 = vsel %vm1272, %v1264, %v1269
  %v1274 = vrsqrt.pop %v1221
  %v1275 = vmul.f32 %v1274, %v1221
  %v1276 = vmul.f32 %v1275, %v1274
  %v1277 = vmul.f32 0.5, %v1276
  %v1278 = vsub.f32 1.5, %v1277
  %v1279 = vmul.f32 %v1274, %v1278
  %vm1280 = vweird.f32 %v1221
  %vm1281 = vweird.f32 %v1274
  %vm1282 = vmor %vm1280, %vm1281
  %v1283 = vsel %vm1282, %v1274, %v1279
  %v1284 = vrsqrt.pop %v1222
  %v1285 = vmul.f32 %v1284, %v1222
  %v1286 = vmul.f32 %v1285, %v1284
  %v1287 = vmul.f32 0.5, %v1286
  %v1288 = vsub.f32 1.5, %v1287
  %v1289 = vmul.f32 %v1284, %v1288
  %vm1290 = vweird.f32 %v1222
  %vm1291 = vweird.f32 %v1284
  %vm1292 = vmor %vm1290, %vm1291
  %v1293 = vsel %vm1292, %v1284, %v1289
  %v1294 = vrsqrt.pop %v1223
  %v1295 = vmul.f32 %v1294, %v1223
  %v1296 = vmul.f32 %v1295, %v1294
  %v1297 = vmul.f32 0.5, %v1296
  %v1298 = vsub.f32 1.5, %v1297
  %v1299 = vmul.f32 %v1294, %v1298
  %vm1300 = vweird.f32 %v1223
  %vm1301 = vweird.f32 %v1294
  %vm1302 = vmor %vm1300, %vm1301
  %v1303 = vsel %vm1302, %v1294, %v1299
  %v1304 = vmul.f32 %v1168, %v1233
  %v1305 = vmul.f32 %v1169, %v1243
  %v1306 = vmul.f32 %v1170, %v1253
  %v1307 = vmul.f32 %v1171, %v1263
  %v1308 = vmul.f32 %v1172, %v1273
  %v1309 = vmul.f32 %v1173, %v1283
  %v1310 = vmul.f32 %v1174, %v1293
  %v1311 = vmul.f32 %v1175, %v1303
  %v1312 = vperm.slane %v1135, 0
  %v1313 = vmul.f32 %v1304, %v1312
  %v1314 = vmul.f32 %v1305, %v1312
  %v1315 = vmul.f32 %v1306, %v1312
  %v1316 = vmul.f32 %v1307, %v1312
  %v1317 = vmul.f32 %v1308, %v1312
  %v1318 = vmul.f32 %v1309, %v1312
  %v1319 = vmul.f32 %v1310, %v1312
  %v1320 = vmul.f32 %v1311, %v1312
  %v1321 = vperm.slane %v1135, 1
  %v1322 = vadd.f32 %v1313, %v1321
  %v1323 = vadd.f32 %v1314, %v1321
  %v1324 = vadd.f32 %v1315, %v1321
  %v1325 = vadd.f32 %v1316, %v1321
  %v1326 = vadd.f32 %v1317, %v1321
  %v1327 = vadd.f32 %v1318, %v1321
  %v1328 = vadd.f32 %v1319, %v1321
  %v1329 = vadd.f32 %v1320, %v1321
  %v1330 = vpack.c.bf16 %v1323, %v1322
  %v1331 = vpack.c.bf16 %v1325, %v1324
  %v1332 = vpack.c.bf16 %v1327, %v1326
  %v1333 = vpack.c.bf16 %v1329, %v1328
  %v1334 = vld [vmem:[%s9] sm:$0xf]
  %v1335 = vld [vmem:[%s9 + $0x4] sm:$0xf]
  %v1336 = vld [vmem:[%s9 + $0x8] sm:$0xf]
  %v1337 = vld [vmem:[%s9 + $0xc] sm:$0xf]
  %v1338 = vld [vmem:[%s10] sm:$0x1]
  %v1340 = vperm.slane %v1338, 0
  %v1346 = vunpack.c.l.b16 %v1334
  %v1347 = vunpack.c.l.b16 %v1335
  %v1348 = vunpack.c.l.b16 %v1336
  %v1349 = vunpack.c.l.b16 %v1337
  %v1350 = vpack.c.b16 %v1347, %v1346
  %v1351 = vpack.c.b16 %v1349, %v1348
  %v1355 = vsel %vm104, %v1330, 0
  %v1358 = vsel %vm104, %v1331, 0
  %v1361 = vsel %vm104, %v1332, 0
  %v1364 = vsel %vm104, %v1333, 0
  %1366 = vmatpush.bf16.msra.mxu0 0
  %1367 = vmatpush.bf16.msra.mxu0 0
  %1368 = vmatpush.bf16.msra.mxu0 0
  %1369 = vmatpush.bf16.msra.mxu0 0
  %1370 = vmatpush.bf16.msra.mxu0 0
  %1371 = vmatpush.bf16.msra.mxu0 0
  %1372 = vmatpush.bf16.msra.mxu0 %v1351
  %1373 = vmatpush.bf16.msra.mxu0 %v1350
  %1374 = vmatmul.bf16.gmra.mxu0 %v1355
  %v1375 = vpop.f32.mrf.mxu0
  %v1376 = vadd.f32 %v1340, %v1375
  %v1377 = vpop.f32.mrf.mxu0
  %v1378 = vadd.f32 %v1340, %v1377
  %1379 = vmatmul.bf16.gmra.mxu0 %v1358
  %v1380 = vpop.f32.mrf.mxu0
  %v1381 = vadd.f32 %v1340, %v1380
  %v1382 = vpop.f32.mrf.mxu0
  %v1383 = vadd.f32 %v1340, %v1382
  %1384 = vmatmul.bf16.gmra.mxu0 %v1361
  %v1385 = vpop.f32.mrf.mxu0
  %v1386 = vadd.f32 %v1340, %v1385
  %v1387 = vpop.f32.mrf.mxu0
  %v1388 = vadd.f32 %v1340, %v1387
  %1389 = vmatmul.bf16.gmra.mxu0 %v1364
  %v1390 = vpop.f32.mrf.mxu0
  %v1391 = vadd.f32 %v1340, %v1390
  %v1392 = vpop.f32.mrf.mxu0
  %v1393 = vadd.f32 %v1340, %v1392
  %1394 = vdwg.mxu0
  %v1395 = vmul.f32 %v1376, %v1376
  %v1396 = vmul.f32 %v1378, %v1378
  %v1397 = vmul.f32 %v1381, %v1381
  %v1398 = vmul.f32 %v1383, %v1383
  %v1399 = vmul.f32 %v1386, %v1386
  %v1400 = vmul.f32 %v1388, %v1388
  %v1401 = vmul.f32 %v1391, %v1391
  %v1402 = vmul.f32 %v1393, %v1393
  %v1403 = vmul.f32 %v1376, %v1395
  %v1404 = vmul.f32 %v1378, %v1396
  %v1405 = vmul.f32 %v1381, %v1397
  %v1406 = vmul.f32 %v1383, %v1398
  %v1407 = vmul.f32 %v1386, %v1399
  %v1408 = vmul.f32 %v1388, %v1400
  %v1409 = vmul.f32 %v1391, %v1401
  %v1410 = vmul.f32 %v1393, %v1402
  %v1411 = vmul.f32 %v1403, 0.044715
  %v1412 = vmul.f32 %v1404, 0.044715
  %v1413 = vmul.f32 %v1405, 0.044715
  %v1414 = vmul.f32 %v1406, 0.044715
  %v1415 = vmul.f32 %v1407, 0.044715
  %v1416 = vmul.f32 %v1408, 0.044715
  %v1417 = vmul.f32 %v1409, 0.044715
  %v1418 = vmul.f32 %v1410, 0.044715
  %v1419 = vadd.f32 %v1376, %v1411
  %v1420 = vadd.f32 %v1378, %v1412
  %v1421 = vadd.f32 %v1381, %v1413
  %v1422 = vadd.f32 %v1383, %v1414
  %v1423 = vadd.f32 %v1386, %v1415
  %v1424 = vadd.f32 %v1388, %v1416
  %v1425 = vadd.f32 %v1391, %v1417
  %v1426 = vadd.f32 %v1393, %v1418
  %v1427 = vmul.f32 %v1419, 0.7978846
  %v1428 = vmul.f32 %v1420, 0.7978846
  %v1429 = vmul.f32 %v1421, 0.7978846
  %v1430 = vmul.f32 %v1422, 0.7978846
  %v1431 = vmul.f32 %v1423, 0.7978846
  %v1432 = vmul.f32 %v1424, 0.7978846
  %v1433 = vmul.f32 %v1425, 0.7978846
  %v1434 = vmul.f32 %v1426, 0.7978846
  %v1435 = vtanh.pop %v1427
  %v1436 = vtanh.pop %v1428
  %v1437 = vtanh.pop %v1429
  %v1438 = vtanh.pop %v1430
  %v1439 = vtanh.pop %v1431
  %v1440 = vtanh.pop %v1432
  %v1441 = vtanh.pop %v1433
  %v1442 = vtanh.pop %v1434
  %v1443 = vadd.f32 %v1435, 1.0
  %v1444 = vadd.f32 %v1436, 1.0
  %v1445 = vadd.f32 %v1437, 1.0
  %v1446 = vadd.f32 %v1438, 1.0
  %v1447 = vadd.f32 %v1439, 1.0
  %v1448 = vadd.f32 %v1440, 1.0
  %v1449 = vadd.f32 %v1441, 1.0
  %v1450 = vadd.f32 %v1442, 1.0
  %v1451 = vmul.f32 %v1443, 0.5
  %v1452 = vmul.f32 %v1444, 0.5
  %v1453 = vmul.f32 %v1445, 0.5
  %v1454 = vmul.f32 %v1446, 0.5
  %v1455 = vmul.f32 %v1447, 0.5
  %v1456 = vmul.f32 %v1448, 0.5
  %v1457 = vmul.f32 %v1449, 0.5
  %v1458 = vmul.f32 %v1450, 0.5
  %v1459 = vmul.f32 %v1376, %v1451
  %v1460 = vmul.f32 %v1378, %v1452
  %v1461 = vmul.f32 %v1381, %v1453
  %v1462 = vmul.f32 %v1383, %v1454
  %v1463 = vmul.f32 %v1386, %v1455
  %v1464 = vmul.f32 %v1388, %v1456
  %v1465 = vmul.f32 %v1391, %v1457
  %v1466 = vmul.f32 %v1393, %v1458
  %v1467 = vpack.c.bf16 %v1460, %v1459
  %v1468 = vpack.c.bf16 %v1462, %v1461
  %v1469 = vpack.c.bf16 %v1464, %v1463
  %v1470 = vpack.c.bf16 %v1466, %v1465
  %v1471 = vld [vmem:[%s11] sm:$0xf]
  %v1472 = vld [vmem:[%s11 + $0x4] sm:$0xf]
  %v1473 = vld [vmem:[%s11 + $0x8] sm:$0xf]
  %v1474 = vld [vmem:[%s11 + $0xc] sm:$0xf]
  %v1475 = vld [vmem:[%s11 + $0x10] sm:$0xf]
  %v1476 = vld [vmem:[%s11 + $0x14] sm:$0xf]
  %v1477 = vld [vmem:[%s11 + $0x18] sm:$0xf]
  %v1478 = vld [vmem:[%s11 + $0x1c] sm:$0xf]
  %v1479 = vld [vmem:[%s11 + $0x20] sm:$0xf]
  %v1480 = vld [vmem:[%s11 + $0x24] sm:$0xf]
  %v1481 = vld [vmem:[%s11 + $0x28] sm:$0xf]
  %v1482 = vld [vmem:[%s11 + $0x2c] sm:$0xf]
  %v1483 = vld [vmem:[%s11 + $0x30] sm:$0xf]
  %v1484 = vld [vmem:[%s11 + $0x34] sm:$0xf]
  %v1485 = vld [vmem:[%s11 + $0x38] sm:$0xf]
  %v1486 = vld [vmem:[%s11 + $0x3c] sm:$0xf]
  %v1503 = vunpack.c.l.b16 %v1471
  %v1504 = vunpack.c.l.b16 %v1472
  %v1505 = vunpack.c.l.b16 %v1473
  %v1506 = vunpack.c.l.b16 %v1474
  %v1507 = vunpack.c.l.b16 %v1475
  %v1508 = vunpack.c.l.b16 %v1476
  %v1509 = vunpack.c.l.b16 %v1477
  %v1510 = vunpack.c.l.b16 %v1478
  %v1511 = vunpack.c.l.b16 %v1479
  %v1512 = vunpack.c.l.b16 %v1480
  %v1513 = vunpack.c.l.b16 %v1481
  %v1514 = vunpack.c.l.b16 %v1482
  %v1515 = vunpack.c.l.b16 %v1483
  %v1516 = vunpack.c.l.b16 %v1484
  %v1517 = vunpack.c.l.b16 %v1485
  %v1518 = vunpack.c.l.b16 %v1486
  %v1519 = vpack.c.b16 %v1504, %v1503
  %v1520 = vpack.c.b16 %v1506, %v1505
  %v1521 = vpack.c.b16 %v1508, %v1507
  %v1522 = vpack.c.b16 %v1510, %v1509
  %v1523 = vpack.c.b16 %v1512, %v1511
  %v1524 = vpack.c.b16 %v1514, %v1513
  %v1525 = vpack.c.b16 %v1516, %v1515
  %v1526 = vpack.c.b16 %v1518, %v1517
  %1535 = vmatpush.bf16.msra.mxu0 %v1526
  %1536 = vmatpush.bf16.msra.mxu0 %v1525
  %1537 = vmatpush.bf16.msra.mxu0 %v1524
  %1538 = vmatpush.bf16.msra.mxu0 %v1523
  %1539 = vmatpush.bf16.msra.mxu0 %v1522
  %1540 = vmatpush.bf16.msra.mxu0 %v1521
  %1541 = vmatpush.bf16.msra.mxu0 %v1520
  %1542 = vmatpush.bf16.msra.mxu0 %v1519
  %1543 = vmatmul.bf16.gmra.mxu0 %v1467
  %v1544 = vpop.f32.mrf.mxu0
  %v1545 = vadd.f32 0.0, %v1544
  %v1546 = vpop.f32.mrf.mxu0
  %v1547 = vadd.f32 0.0, %v1546
  %1548 = vmatmul.bf16.gmra.mxu0 %v1468
  %v1549 = vpop.f32.mrf.mxu0
  %v1550 = vadd.f32 0.0, %v1549
  %v1551 = vpop.f32.mrf.mxu0
  %v1552 = vadd.f32 0.0, %v1551
  %1553 = vmatmul.bf16.gmra.mxu0 %v1469
  %v1554 = vpop.f32.mrf.mxu0
  %v1555 = vadd.f32 0.0, %v1554
  %v1556 = vpop.f32.mrf.mxu0
  %v1557 = vadd.f32 0.0, %v1556
  %1558 = vmatmul.bf16.gmra.mxu0 %v1470
  %v1559 = vpop.f32.mrf.mxu0
  %v1560 = vadd.f32 0.0, %v1559
  %v1561 = vpop.f32.mrf.mxu0
  %v1562 = vadd.f32 0.0, %v1561
  %1563 = vdwg.mxu0
  %v1564 = vadd.f32 %v1126, %v1545
  %v1565 = vadd.f32 %v1127, %v1547
  %v1566 = vadd.f32 %v1128, %v1550
  %v1567 = vadd.f32 %v1129, %v1552
  %v1568 = vadd.f32 %v1130, %v1555
  %v1569 = vadd.f32 %v1131, %v1557
  %v1570 = vadd.f32 %v1132, %v1560
  %v1571 = vadd.f32 %v1133, %v1562
  %v1572 = vld [vmem:[%s12] sm:$0x1]
  %v1574 = vperm.slane %v1572, 0
  %v1576 = vadd.f32 %v1564, %v1574
  %v1577 = vadd.f32 %v1565, %v1574
  %v1578 = vadd.f32 %v1566, %v1574
  %v1579 = vadd.f32 %v1567, %v1574
  %v1580 = vadd.f32 %v1568, %v1574
  %v1581 = vadd.f32 %v1569, %v1574
  %v1582 = vadd.f32 %v1570, %v1574
  %v1583 = vadd.f32 %v1571, %v1574
  %s1584 = scalar_lea.vmem %s4, 4
  %v1585 = vld [vmem:[%s1584] sm:$0x3]
  %v1586 = vsel %vm104, %v1576, 0.0
  %1587 = vadd.xlane.f32.xlu0 %v1586
  %v1588 = vpop.xlane.xlu0 %1587
  %v1589 = vsel %vm104, %v1577, 0.0
  %1590 = vadd.xlane.f32.xlu0 %v1589
  %v1591 = vpop.xlane.xlu0 %1590
  %v1592 = vsel %vm104, %v1578, 0.0
  %1593 = vadd.xlane.f32.xlu0 %v1592
  %v1594 = vpop.xlane.xlu0 %1593
  %v1595 = vsel %vm104, %v1579, 0.0
  %1596 = vadd.xlane.f32.xlu0 %v1595
  %v1597 = vpop.xlane.xlu0 %1596
  %v1598 = vsel %vm104, %v1580, 0.0
  %1599 = vadd.xlane.f32.xlu0 %v1598
  %v1600 = vpop.xlane.xlu0 %1599
  %v1601 = vsel %vm104, %v1581, 0.0
  %1602 = vadd.xlane.f32.xlu0 %v1601
  %v1603 = vpop.xlane.xlu0 %1602
  %v1604 = vsel %vm104, %v1582, 0.0
  %1605 = vadd.xlane.f32.xlu0 %v1604
  %v1606 = vpop.xlane.xlu0 %1605
  %v1607 = vsel %vm104, %v1583, 0.0
  %1608 = vadd.xlane.f32.xlu0 %v1607
  %v1609 = vpop.xlane.xlu0 %1608
  %v1610 = vmul.f32 %v1588, %v135
  %v1611 = vmul.f32 %v1591, %v135
  %v1612 = vmul.f32 %v1594, %v135
  %v1613 = vmul.f32 %v1597, %v135
  %v1614 = vmul.f32 %v1600, %v135
  %v1615 = vmul.f32 %v1603, %v135
  %v1616 = vmul.f32 %v1606, %v135
  %v1617 = vmul.f32 %v1609, %v135
  %v1618 = vsub.f32 %v1576, %v1610
  %v1619 = vsub.f32 %v1577, %v1611
  %v1620 = vsub.f32 %v1578, %v1612
  %v1621 = vsub.f32 %v1579, %v1613
  %v1622 = vsub.f32 %v1580, %v1614
  %v1623 = vsub.f32 %v1581, %v1615
  %v1624 = vsub.f32 %v1582, %v1616
  %v1625 = vsub.f32 %v1583, %v1617
  %v1626 = vmul.f32 %v1618, %v1618
  %v1627 = vmul.f32 %v1619, %v1619
  %v1628 = vmul.f32 %v1620, %v1620
  %v1629 = vmul.f32 %v1621, %v1621
  %v1630 = vmul.f32 %v1622, %v1622
  %v1631 = vmul.f32 %v1623, %v1623
  %v1632 = vmul.f32 %v1624, %v1624
  %v1633 = vmul.f32 %v1625, %v1625
  %v1634 = vsel %vm104, %v1626, 0.0
  %1635 = vadd.xlane.f32.xlu0 %v1634
  %v1636 = vpop.xlane.xlu0 %1635
  %v1637 = vsel %vm104, %v1627, 0.0
  %1638 = vadd.xlane.f32.xlu0 %v1637
  %v1639 = vpop.xlane.xlu0 %1638
  %v1640 = vsel %vm104, %v1628, 0.0
  %1641 = vadd.xlane.f32.xlu0 %v1640
  %v1642 = vpop.xlane.xlu0 %1641
  %v1643 = vsel %vm104, %v1629, 0.0
  %1644 = vadd.xlane.f32.xlu0 %v1643
  %v1645 = vpop.xlane.xlu0 %1644
  %v1646 = vsel %vm104, %v1630, 0.0
  %1647 = vadd.xlane.f32.xlu0 %v1646
  %v1648 = vpop.xlane.xlu0 %1647
  %v1649 = vsel %vm104, %v1631, 0.0
  %1650 = vadd.xlane.f32.xlu0 %v1649
  %v1651 = vpop.xlane.xlu0 %1650
  %v1652 = vsel %vm104, %v1632, 0.0
  %1653 = vadd.xlane.f32.xlu0 %v1652
  %v1654 = vpop.xlane.xlu0 %1653
  %v1655 = vsel %vm104, %v1633, 0.0
  %1656 = vadd.xlane.f32.xlu0 %v1655
  %v1657 = vpop.xlane.xlu0 %1656
  %v1658 = vmul.f32 %v1636, %v135
  %v1659 = vmul.f32 %v1639, %v135
  %v1660 = vmul.f32 %v1642, %v135
  %v1661 = vmul.f32 %v1645, %v135
  %v1662 = vmul.f32 %v1648, %v135
  %v1663 = vmul.f32 %v1651, %v135
  %v1664 = vmul.f32 %v1654, %v135
  %v1665 = vmul.f32 %v1657, %v135
  %v1666 = vadd.f32 %v1658, 1e-05
  %v1667 = vadd.f32 %v1659, 1e-05
  %v1668 = vadd.f32 %v1660, 1e-05
  %v1669 = vadd.f32 %v1661, 1e-05
  %v1670 = vadd.f32 %v1662, 1e-05
  %v1671 = vadd.f32 %v1663, 1e-05
  %v1672 = vadd.f32 %v1664, 1e-05
  %v1673 = vadd.f32 %v1665, 1e-05
  %v1674 = vrsqrt.pop %v1666
  %v1675 = vmul.f32 %v1674, %v1666
  %v1676 = vmul.f32 %v1675, %v1674
  %v1677 = vmul.f32 0.5, %v1676
  %v1678 = vsub.f32 1.5, %v1677
  %v1679 = vmul.f32 %v1674, %v1678
  %vm1680 = vweird.f32 %v1666
  %vm1681 = vweird.f32 %v1674
  %vm1682 = vmor %vm1680, %vm1681
  %v1683 = vsel %vm1682, %v1674, %v1679
  %v1684 = vrsqrt.pop %v1667
  %v1685 = vmul.f32 %v1684, %v1667
  %v1686 = vmul.f32 %v1685, %v1684
  %v1687 = vmul.f32 0.5, %v1686
  %v1688 = vsub.f32 1.5, %v1687
  %v1689 = vmul.f32 %v1684, %v1688
  %vm1690 = vweird.f32 %v1667
  %vm1691 = vweird.f32 %v1684
  %vm1692 = vmor %vm1690, %vm1691
  %v1693 = vsel %vm1692, %v1684, %v1689
  %v1694 = vrsqrt.pop %v1668
  %v1695 = vmul.f32 %v1694, %v1668
  %v1696 = vmul.f32 %v1695, %v1694
  %v1697 = vmul.f32 0.5, %v1696
  %v1698 = vsub.f32 1.5, %v1697
  %v1699 = vmul.f32 %v1694, %v1698
  %vm1700 = vweird.f32 %v1668
  %vm1701 = vweird.f32 %v1694
  %vm1702 = vmor %vm1700, %vm1701
  %v1703 = vsel %vm1702, %v1694, %v1699
  %v1704 = vrsqrt.pop %v1669
  %v1705 = vmul.f32 %v1704, %v1669
  %v1706 = vmul.f32 %v1705, %v1704
  %v1707 = vmul.f32 0.5, %v1706
  %v1708 = vsub.f32 1.5, %v1707
  %v1709 = vmul.f32 %v1704, %v1708
  %vm1710 = vweird.f32 %v1669
  %vm1711 = vweird.f32 %v1704
  %vm1712 = vmor %vm1710, %vm1711
  %v1713 = vsel %vm1712, %v1704, %v1709
  %v1714 = vrsqrt.pop %v1670
  %v1715 = vmul.f32 %v1714, %v1670
  %v1716 = vmul.f32 %v1715, %v1714
  %v1717 = vmul.f32 0.5, %v1716
  %v1718 = vsub.f32 1.5, %v1717
  %v1719 = vmul.f32 %v1714, %v1718
  %vm1720 = vweird.f32 %v1670
  %vm1721 = vweird.f32 %v1714
  %vm1722 = vmor %vm1720, %vm1721
  %v1723 = vsel %vm1722, %v1714, %v1719
  %v1724 = vrsqrt.pop %v1671
  %v1725 = vmul.f32 %v1724, %v1671
  %v1726 = vmul.f32 %v1725, %v1724
  %v1727 = vmul.f32 0.5, %v1726
  %v1728 = vsub.f32 1.5, %v1727
  %v1729 = vmul.f32 %v1724, %v1728
  %vm1730 = vweird.f32 %v1671
  %vm1731 = vweird.f32 %v1724
  %vm1732 = vmor %vm1730, %vm1731
  %v1733 = vsel %vm1732, %v1724, %v1729
  %v1734 = vrsqrt.pop %v1672
  %v1735 = vmul.f32 %v1734, %v1672
  %v1736 = vmul.f32 %v1735, %v1734
  %v1737 = vmul.f32 0.5, %v1736
  %v1738 = vsub.f32 1.5, %v1737
  %v1739 = vmul.f32 %v1734, %v1738
  %vm1740 = vweird.f32 %v1672
  %vm1741 = vweird.f32 %v1734
  %vm1742 = vmor %vm1740, %vm1741
  %v1743 = vsel %vm1742, %v1734, %v1739
  %v1744 = vrsqrt.pop %v1673
  %v1745 = vmul.f32 %v1744, %v1673
  %v1746 = vmul.f32 %v1745, %v1744
  %v1747 = vmul.f32 0.5, %v1746
  %v1748 = vsub.f32 1.5, %v1747
  %v1749 = vmul.f32 %v1744, %v1748
  %vm1750 = vweird.f32 %v1673
  %vm1751 = vweird.f32 %v1744
  %vm1752 = vmor %vm1750, %vm1751
  %v1753 = vsel %vm1752, %v1744, %v1749
  %v1754 = vmul.f32 %v1618, %v1683
  %v1755 = vmul.f32 %v1619, %v1693
  %v1756 = vmul.f32 %v1620, %v1703
  %v1757 = vmul.f32 %v1621, %v1713
  %v1758 = vmul.f32 %v1622, %v1723
  %v1759 = vmul.f32 %v1623, %v1733
  %v1760 = vmul.f32 %v1624, %v1743
  %v1761 = vmul.f32 %v1625, %v1753
  %v1762 = vperm.slane %v1585, 0
  %v1763 = vmul.f32 %v1754, %v1762
  %v1764 = vmul.f32 %v1755, %v1762
  %v1765 = vmul.f32 %v1756, %v1762
  %v1766 = vmul.f32 %v1757, %v1762
  %v1767 = vmul.f32 %v1758, %v1762
  %v1768 = vmul.f32 %v1759, %v1762
  %v1769 = vmul.f32 %v1760, %v1762
  %v1770 = vmul.f32 %v1761, %v1762
  %v1771 = vperm.slane %v1585, 1
  %v1772 = vadd.f32 %v1763, %v1771
  %v1773 = vadd.f32 %v1764, %v1771
  %v1774 = vadd.f32 %v1765, %v1771
  %v1775 = vadd.f32 %v1766, %v1771
  %v1776 = vadd.f32 %v1767, %v1771
  %v1777 = vadd.f32 %v1768, %v1771
  %v1778 = vadd.f32 %v1769, %v1771
  %v1779 = vadd.f32 %v1770, %v1771
  %v1780 = vpack.c.bf16 %v1773, %v1772
  %v1781 = vpack.c.bf16 %v1775, %v1774
  %v1782 = vpack.c.bf16 %v1777, %v1776
  %v1783 = vpack.c.bf16 %v1779, %v1778
  %s1784 = scalar_lea.vmem %s5, 16
  %v1785 = vld [vmem:[%s1784] sm:$0xf]
  %v1786 = vld [vmem:[%s1784 + $0x4] sm:$0xf]
  %v1787 = vld [vmem:[%s1784 + $0x8] sm:$0xf]
  %v1788 = vld [vmem:[%s1784 + $0xc] sm:$0xf]
  %s1789 = scalar_lea.vmem %s6, 1
  %v1790 = vld [vmem:[%s1789] sm:$0x1]
  %v1792 = vperm.slane %v1790, 0
  %v1798 = vunpack.c.l.b16 %v1785
  %v1799 = vunpack.c.l.b16 %v1786
  %v1800 = vunpack.c.l.b16 %v1787
  %v1801 = vunpack.c.l.b16 %v1788
  %v1802 = vpack.c.b16 %v1799, %v1798
  %v1803 = vpack.c.b16 %v1801, %v1800
  %v1807 = vsel %vm104, %v1780, 0
  %v1810 = vsel %vm104, %v1781, 0
  %v1813 = vsel %vm104, %v1782, 0
  %v1816 = vsel %vm104, %v1783, 0
  %1818 = vmatpush.bf16.msra.mxu0 0
  %1819 = vmatpush.bf16.msra.mxu0 0
  %1820 = vmatpush.bf16.msra.mxu0 0
  %1821 = vmatpush.bf16.msra.mxu0 0
  %1822 = vmatpush.bf16.msra.mxu0 0
  %1823 = vmatpush.bf16.msra.mxu0 0
  %1824 = vmatpush.bf16.msra.mxu0 %v1803
  %1825 = vmatpush.bf16.msra.mxu0 %v1802
  %1826 = vmatmul.bf16.gmra.mxu0 %v1807
  %v1827 = vpop.f32.mrf.mxu0
  %v1828 = vadd.f32 %v1792, %v1827
  %v1829 = vpop.f32.mrf.mxu0
  %v1830 = vadd.f32 %v1792, %v1829
  %1831 = vmatmul.bf16.gmra.mxu0 %v1810
  %v1832 = vpop.f32.mrf.mxu0
  %v1833 = vadd.f32 %v1792, %v1832
  %v1834 = vpop.f32.mrf.mxu0
  %v1835 = vadd.f32 %v1792, %v1834
  %1836 = vmatmul.bf16.gmra.mxu0 %v1813
  %v1837 = vpop.f32.mrf.mxu0
  %v1838 = vadd.f32 %v1792, %v1837
  %v1839 = vpop.f32.mrf.mxu0
  %v1840 = vadd.f32 %v1792, %v1839
  %1841 = vmatmul.bf16.gmra.mxu0 %v1816
  %v1842 = vpop.f32.mrf.mxu0
  %v1843 = vadd.f32 %v1792, %v1842
  %v1844 = vpop.f32.mrf.mxu0
  %v1845 = vadd.f32 %v1792, %v1844
  %1846 = vdwg.mxu0
  %v1847 = vpack.c.bf16 %v1828, %v1828
  %v1848 = vpack.c.bf16 %v1830, %v1830
  %v1849 = vpack.c.bf16 %v1833, %v1833
  %v1850 = vpack.c.bf16 %v1835, %v1835
  %v1851 = vpack.c.bf16 %v1838, %v1838
  %v1852 = vpack.c.bf16 %v1840, %v1840
  %v1853 = vpack.c.bf16 %v1843, %v1843
  %v1854 = vpack.c.bf16 %v1845, %v1845
  %v1857 = vunpack.c.l.b16 %v1847
  %v1858 = vunpack.c.l.b16 %v1848
  %v1859 = vpack.c.b16 %v1858, %v1857
  %1860 = vrot.lane.b32.xlu0 %v1859, 96
  %v1861 = vpop.permute.xlu0 %1860
  %v1863 = vsel %vm386, %v1859, 0
  %v1866 = vsel %vm386, %v1861, 0
  %1868 = vmatpush.bf16.xpose.msra.mxu0 0
  %1869 = vmatpush.bf16.xpose.msra.mxu0 0
  %1870 = vmatpush.bf16.xpose.msra.mxu0 0
  %1871 = vmatpush.bf16.xpose.msra.mxu0 0
  %1872 = vmatpush.bf16.xpose.msra.mxu0 0
  %1873 = vmatpush.bf16.xpose.msra.mxu0 0
  %1874 = vmatpush.bf16.xpose.msra.mxu0 0
  %1875 = vmatpush.bf16.xpose.msra.mxu0 %v1866
  %1876 = vmatmul.bf16.gmra.mxu0 %v1863
  %v1877 = vpop.f32.mrf.mxu0
  %v1878 = vadd.f32 0.0, %v1877
  %v1879 = vpop.f32.mrf.mxu0
  %v1880 = vadd.f32 0.0, %v1879
  %1881 = vdwg.mxu0
  %v1884 = vunpack.c.l.b16 %v1849
  %v1885 = vunpack.c.l.b16 %v1850
  %v1886 = vpack.c.b16 %v1885, %v1884
  %1887 = vrot.lane.b32.xlu0 %v1886, 96
  %v1888 = vpop.permute.xlu0 %1887
  %v1890 = vsel %vm386, %v1886, 0
  %v1893 = vsel %vm386, %v1888, 0
  %1895 = vmatpush.bf16.xpose.msra.mxu0 0
  %1896 = vmatpush.bf16.xpose.msra.mxu0 0
  %1897 = vmatpush.bf16.xpose.msra.mxu0 0
  %1898 = vmatpush.bf16.xpose.msra.mxu0 0
  %1899 = vmatpush.bf16.xpose.msra.mxu0 0
  %1900 = vmatpush.bf16.xpose.msra.mxu0 0
  %1901 = vmatpush.bf16.xpose.msra.mxu0 0
  %1902 = vmatpush.bf16.xpose.msra.mxu0 %v1893
  %1903 = vmatmul.bf16.gmra.mxu0 %v1890
  %v1904 = vpop.f32.mrf.mxu0
  %v1905 = vadd.f32 0.0, %v1904
  %v1906 = vpop.f32.mrf.mxu0
  %v1907 = vadd.f32 0.0, %v1906
  %1908 = vdwg.mxu0
  %v1911 = vunpack.c.l.b16 %v1851
  %v1912 = vunpack.c.l.b16 %v1852
  %v1913 = vpack.c.b16 %v1912, %v1911
  %1914 = vrot.lane.b32.xlu0 %v1913, 96
  %v1915 = vpop.permute.xlu0 %1914
  %v1917 = vsel %vm386, %v1913, 0
  %v1920 = vsel %vm386, %v1915, 0
  %1922 = vmatpush.bf16.xpose.msra.mxu0 0
  %1923 = vmatpush.bf16.xpose.msra.mxu0 0
  %1924 = vmatpush.bf16.xpose.msra.mxu0 0
  %1925 = vmatpush.bf16.xpose.msra.mxu0 0
  %1926 = vmatpush.bf16.xpose.msra.mxu0 0
  %1927 = vmatpush.bf16.xpose.msra.mxu0 0
  %1928 = vmatpush.bf16.xpose.msra.mxu0 0
  %1929 = vmatpush.bf16.xpose.msra.mxu0 %v1920
  %1930 = vmatmul.bf16.gmra.mxu0 %v1917
  %v1931 = vpop.f32.mrf.mxu0
  %v1932 = vadd.f32 0.0, %v1931
  %v1933 = vpop.f32.mrf.mxu0
  %v1934 = vadd.f32 0.0, %v1933
  %1935 = vdwg.mxu0
  %v1938 = vunpack.c.l.b16 %v1853
  %v1939 = vunpack.c.l.b16 %v1854
  %v1940 = vpack.c.b16 %v1939, %v1938
  %1941 = vrot.lane.b32.xlu0 %v1940, 96
  %v1942 = vpop.permute.xlu0 %1941
  %v1944 = vsel %vm386, %v1940, 0
  %v1947 = vsel %vm386, %v1942, 0
  %1949 = vmatpush.bf16.xpose.msra.mxu0 0
  %1950 = vmatpush.bf16.xpose.msra.mxu0 0
  %1951 = vmatpush.bf16.xpose.msra.mxu0 0
  %1952 = vmatpush.bf16.xpose.msra.mxu0 0
  %1953 = vmatpush.bf16.xpose.msra.mxu0 0
  %1954 = vmatpush.bf16.xpose.msra.mxu0 0
  %1955 = vmatpush.bf16.xpose.msra.mxu0 0
  %1956 = vmatpush.bf16.xpose.msra.mxu0 %v1947
  %1957 = vmatmul.bf16.gmra.mxu0 %v1944
  %v1958 = vpop.f32.mrf.mxu0
  %v1959 = vadd.f32 0.0, %v1958
  %v1960 = vpop.f32.mrf.mxu0
  %v1961 = vadd.f32 0.0, %v1960
  %1962 = vdwg.mxu0
  %v1963 = vmul.f32 %v1878, 0.25
  %v1964 = vmul.f32 %v1880, 0.25
  %v1965 = vmul.f32 %v1905, 0.25
  %v1966 = vmul.f32 %v1907, 0.25
  %v1967 = vmul.f32 %v1932, 0.25
  %v1968 = vmul.f32 %v1934, 0.25
  %v1969 = vmul.f32 %v1959, 0.25
  %v1970 = vmul.f32 %v1961, 0.25
  %v1971 = vadd.f32 %v1963, %v95
  %v1972 = vadd.f32 %v1964, %v96
  %v1973 = vadd.f32 %v1965, %v97
  %v1974 = vadd.f32 %v1966, %v98
  %v1975 = vadd.f32 %v1967, %v99
  %v1976 = vadd.f32 %v1968, %v100
  %v1977 = vadd.f32 %v1969, %v101
  %v1978 = vadd.f32 %v1970, %v102
  %v1979 = vsel %vm386, %v1971, -inf
  %1980 = vmax.xlane.f32.xlu0 %v1979
  %v1981 = vpop.xlane.xlu0 %1980
  %v1982 = vsel %vm386, %v1972, -inf
  %1983 = vmax.xlane.f32.xlu0 %v1982
  %v1984 = vpop.xlane.xlu0 %1983
  %v1985 = vsel %vm386, %v1973, -inf
  %1986 = vmax.xlane.f32.xlu0 %v1985
  %v1987 = vpop.xlane.xlu0 %1986
  %v1988 = vsel %vm386, %v1974, -inf
  %1989 = vmax.xlane.f32.xlu0 %v1988
  %v1990 = vpop.xlane.xlu0 %1989
  %v1991 = vsel %vm386, %v1975, -inf
  %1992 = vmax.xlane.f32.xlu0 %v1991
  %v1993 = vpop.xlane.xlu0 %1992
  %v1994 = vsel %vm386, %v1976, -inf
  %1995 = vmax.xlane.f32.xlu0 %v1994
  %v1996 = vpop.xlane.xlu0 %1995
  %v1997 = vsel %vm386, %v1977, -inf
  %1998 = vmax.xlane.f32.xlu0 %v1997
  %v1999 = vpop.xlane.xlu0 %1998
  %v2000 = vsel %vm386, %v1978, -inf
  %2001 = vmax.xlane.f32.xlu0 %v2000
  %v2002 = vpop.xlane.xlu0 %2001
  %v2003 = vsub.f32 %v1971, %v1981
  %v2004 = vsub.f32 %v1972, %v1984
  %v2005 = vsub.f32 %v1973, %v1987
  %v2006 = vsub.f32 %v1974, %v1990
  %v2007 = vsub.f32 %v1975, %v1993
  %v2008 = vsub.f32 %v1976, %v1996
  %v2009 = vsub.f32 %v1977, %v1999
  %v2010 = vsub.f32 %v1978, %v2002
  %v2011 = vmul.f32 %v2003, 1.442695
  %v2012 = vpow.pop %v2011
  %v2013 = vmul.f32 %v2004, 1.442695
  %v2014 = vpow.pop %v2013
  %v2015 = vmul.f32 %v2005, 1.442695
  %v2016 = vpow.pop %v2015
  %v2017 = vmul.f32 %v2006, 1.442695
  %v2018 = vpow.pop %v2017
  %v2019 = vmul.f32 %v2007, 1.442695
  %v2020 = vpow.pop %v2019
  %v2021 = vmul.f32 %v2008, 1.442695
  %v2022 = vpow.pop %v2021
  %v2023 = vmul.f32 %v2009, 1.442695
  %v2024 = vpow.pop %v2023
  %v2025 = vmul.f32 %v2010, 1.442695
  %v2026 = vpow.pop %v2025
  %v2027 = vsel %vm386, %v2012, 0.0
  %2028 = vadd.xlane.f32.xlu0 %v2027
  %v2029 = vpop.xlane.xlu0 %2028
  %v2030 = vsel %vm386, %v2014, 0.0
  %2031 = vadd.xlane.f32.xlu0 %v2030
  %v2032 = vpop.xlane.xlu0 %2031
  %v2033 = vsel %vm386, %v2016, 0.0
  %2034 = vadd.xlane.f32.xlu0 %v2033
  %v2035 = vpop.xlane.xlu0 %2034
  %v2036 = vsel %vm386, %v2018, 0.0
  %2037 = vadd.xlane.f32.xlu0 %v2036
  %v2038 = vpop.xlane.xlu0 %2037
  %v2039 = vsel %vm386, %v2020, 0.0
  %2040 = vadd.xlane.f32.xlu0 %v2039
  %v2041 = vpop.xlane.xlu0 %2040
  %v2042 = vsel %vm386, %v2022, 0.0
  %2043 = vadd.xlane.f32.xlu0 %v2042
  %v2044 = vpop.xlane.xlu0 %2043
  %v2045 = vsel %vm386, %v2024, 0.0
  %2046 = vadd.xlane.f32.xlu0 %v2045
  %v2047 = vpop.xlane.xlu0 %2046
  %v2048 = vsel %vm386, %v2026, 0.0
  %2049 = vadd.xlane.f32.xlu0 %v2048
  %v2050 = vpop.xlane.xlu0 %2049
  %v2051 = vrcp.pop %v2029
  %v2052 = vrcp.pop %v2032
  %v2053 = vrcp.pop %v2035
  %v2054 = vrcp.pop %v2038
  %v2055 = vrcp.pop %v2041
  %v2056 = vrcp.pop %v2044
  %v2057 = vrcp.pop %v2047
  %v2058 = vrcp.pop %v2050
  %v2059 = vmul.f32 %v2012, %v2051
  %v2060 = vmul.f32 %v2014, %v2052
  %v2061 = vmul.f32 %v2016, %v2053
  %v2062 = vmul.f32 %v2018, %v2054
  %v2063 = vmul.f32 %v2020, %v2055
  %v2064 = vmul.f32 %v2022, %v2056
  %v2065 = vmul.f32 %v2024, %v2057
  %v2066 = vmul.f32 %v2026, %v2058
  %v2067 = vpack.c.bf16 %v2059, %v2059
  %v2068 = vpack.c.bf16 %v2060, %v2060
  %v2069 = vpack.c.bf16 %v2061, %v2061
  %v2070 = vpack.c.bf16 %v2062, %v2062
  %v2071 = vpack.c.bf16 %v2063, %v2063
  %v2072 = vpack.c.bf16 %v2064, %v2064
  %v2073 = vpack.c.bf16 %v2065, %v2065
  %v2074 = vpack.c.bf16 %v2066, %v2066
  %v2077 = vunpack.c.l.b16 %v2067
  %v2078 = vunpack.c.l.b16 %v2068
  %v2079 = vpack.c.b16 %v2078, %v2077
  %2080 = vrot.lane.b32.xlu0 %v1859, 64
  %v2081 = vpop.permute.xlu0 %2080
  %v2084 = vsel %vm386, %v2079, 0
  %2086 = vmatpush.bf16.msra.mxu0 0
  %2087 = vmatpush.bf16.msra.mxu0 0
  %2088 = vmatpush.bf16.msra.mxu0 0
  %2089 = vmatpush.bf16.msra.mxu0 0
  %2090 = vmatpush.bf16.msra.mxu0 0
  %2091 = vmatpush.bf16.msra.mxu0 0
  %2092 = vmatpush.bf16.msra.mxu0 0
  %2093 = vmatpush.bf16.msra.mxu0 %v2081
  %2094 = vmatmul.bf16.gmra.mxu0 %v2084
  %v2095 = vpop.f32.mrf.mxu0
  %v2096 = vadd.f32 0.0, %v2095
  %v2097 = vpop.f32.mrf.mxu0
  %v2098 = vadd.f32 0.0, %v2097
  %2099 = vdwg.mxu0
  %v2102 = vunpack.c.l.b16 %v2069
  %v2103 = vunpack.c.l.b16 %v2070
  %v2104 = vpack.c.b16 %v2103, %v2102
  %2105 = vrot.lane.b32.xlu0 %v1886, 64
  %v2106 = vpop.permute.xlu0 %2105
  %v2109 = vsel %vm386, %v2104, 0
  %2111 = vmatpush.bf16.msra.mxu0 0
  %2112 = vmatpush.bf16.msra.mxu0 0
  %2113 = vmatpush.bf16.msra.mxu0 0
  %2114 = vmatpush.bf16.msra.mxu0 0
  %2115 = vmatpush.bf16.msra.mxu0 0
  %2116 = vmatpush.bf16.msra.mxu0 0
  %2117 = vmatpush.bf16.msra.mxu0 0
  %2118 = vmatpush.bf16.msra.mxu0 %v2106
  %2119 = vmatmul.bf16.gmra.mxu0 %v2109
  %v2120 = vpop.f32.mrf.mxu0
  %v2121 = vadd.f32 0.0, %v2120
  %v2122 = vpop.f32.mrf.mxu0
  %v2123 = vadd.f32 0.0, %v2122
  %2124 = vdwg.mxu0
  %v2127 = vunpack.c.l.b16 %v2071
  %v2128 = vunpack.c.l.b16 %v2072
  %v2129 = vpack.c.b16 %v2128, %v2127
  %2130 = vrot.lane.b32.xlu0 %v1913, 64
  %v2131 = vpop.permute.xlu0 %2130
  %v2134 = vsel %vm386, %v2129, 0
  %2136 = vmatpush.bf16.msra.mxu0 0
  %2137 = vmatpush.bf16.msra.mxu0 0
  %2138 = vmatpush.bf16.msra.mxu0 0
  %2139 = vmatpush.bf16.msra.mxu0 0
  %2140 = vmatpush.bf16.msra.mxu0 0
  %2141 = vmatpush.bf16.msra.mxu0 0
  %2142 = vmatpush.bf16.msra.mxu0 0
  %2143 = vmatpush.bf16.msra.mxu0 %v2131
  %2144 = vmatmul.bf16.gmra.mxu0 %v2134
  %v2145 = vpop.f32.mrf.mxu0
  %v2146 = vadd.f32 0.0, %v2145
  %v2147 = vpop.f32.mrf.mxu0
  %v2148 = vadd.f32 0.0, %v2147
  %2149 = vdwg.mxu0
  %v2152 = vunpack.c.l.b16 %v2073
  %v2153 = vunpack.c.l.b16 %v2074
  %v2154 = vpack.c.b16 %v2153, %v2152
  %2155 = vrot.lane.b32.xlu0 %v1940, 64
  %v2156 = vpop.permute.xlu0 %2155
  %v2159 = vsel %vm386, %v2154, 0
  %2161 = vmatpush.bf16.msra.mxu0 0
  %2162 = vmatpush.bf16.msra.mxu0 0
  %2163 = vmatpush.bf16.msra.mxu0 0
  %2164 = vmatpush.bf16.msra.mxu0 0
  %2165 = vmatpush.bf16.msra.mxu0 0
  %2166 = vmatpush.bf16.msra.mxu0 0
  %2167 = vmatpush.bf16.msra.mxu0 0
  %2168 = vmatpush.bf16.msra.mxu0 %v2156
  %2169 = vmatmul.bf16.gmra.mxu0 %v2159
  %v2170 = vpop.f32.mrf.mxu0
  %v2171 = vadd.f32 0.0, %v2170
  %v2172 = vpop.f32.mrf.mxu0
  %v2173 = vadd.f32 0.0, %v2172
  %2174 = vdwg.mxu0
  %v2175 = vpack.c.bf16 %v2098, %v2096
  %v2176 = vpack.c.bf16 %v2123, %v2121
  %v2177 = vpack.c.bf16 %v2148, %v2146
  %v2178 = vpack.c.bf16 %v2173, %v2171
  %s2179 = scalar_lea.vmem %s7, 16
  %v2180 = vld [vmem:[%s2179] sm:$0xf]
  %v2181 = vld [vmem:[%s2179 + $0x4] sm:$0xf]
  %2182 = vrot.lane.b32.xlu0 %v1859, 112
  %v2183 = vpop.permute.xlu0 %2182
  %2184 = vrot.lane.b32.xlu0 %v1859, 80
  %v2185 = vpop.permute.xlu0 %2184
  %v2187 = vsel %vm386, %v2183, 0
  %v2190 = vsel %vm386, %v2185, 0
  %2192 = vmatpush.bf16.xpose.msra.mxu0 0
  %2193 = vmatpush.bf16.xpose.msra.mxu0 0
  %2194 = vmatpush.bf16.xpose.msra.mxu0 0
  %2195 = vmatpush.bf16.xpose.msra.mxu0 0
  %2196 = vmatpush.bf16.xpose.msra.mxu0 0
  %2197 = vmatpush.bf16.xpose.msra.mxu0 0
  %2198 = vmatpush.bf16.xpose.msra.mxu0 0
  %2199 = vmatpush.bf16.xpose.msra.mxu0 %v2190
  %2200 = vmatmul.bf16.gmra.mxu0 %v2187
  %v2201 = vpop.f32.mrf.mxu0
  %v2202 = vadd.f32 0.0, %v2201
  %v2203 = vpop.f32.mrf.mxu0
  %v2204 = vadd.f32 0.0, %v2203
  %2205 = vdwg.mxu0
  %2206 = vrot.lane.b32.xlu0 %v1886, 112
  %v2207 = vpop.permute.xlu0 %2206
  %2208 = vrot.lane.b32.xlu0 %v1886, 80
  %v2209 = vpop.permute.xlu0 %2208
  %v2211 = vsel %vm386, %v2207, 0
  %v2214 = vsel %vm386, %v2209, 0
  %2216 = vmatpush.bf16.xpose.msra.mxu0 0
  %2217 = vmatpush.bf16.xpose.msra.mxu0 0
  %2218 = vmatpush.bf16.xpose.msra.mxu0 0
  %2219 = vmatpush.bf16.xpose.msra.mxu0 0
  %2220 = vmatpush.bf16.xpose.msra.mxu0 0
  %2221 = vmatpush.bf16.xpose.msra.mxu0 0
  %2222 = vmatpush.bf16.xpose.msra.mxu0 0
  %2223 = vmatpush.bf16.xpose.msra.mxu0 %v2214
  %2224 = vmatmul.bf16.gmra.mxu0 %v2211
  %v2225 = vpop.f32.mrf.mxu0
  %v2226 = vadd.f32 0.0, %v2225
  %v2227 = vpop.f32.mrf.mxu0
  %v2228 = vadd.f32 0.0, %v2227
  %2229 = vdwg.mxu0
  %2230 = vrot.lane.b32.xlu0 %v1913, 112
  %v2231 = vpop.permute.xlu0 %2230
  %2232 = vrot.lane.b32.xlu0 %v1913, 80
  %v2233 = vpop.permute.xlu0 %2232
  %v2235 = vsel %vm386, %v2231, 0
  %v2238 = vsel %vm386, %v2233, 0
  %2240 = vmatpush.bf16.xpose.msra.mxu0 0
  %2241 = vmatpush.bf16.xpose.msra.mxu0 0
  %2242 = vmatpush.bf16.xpose.msra.mxu0 0
  %2243 = vmatpush.bf16.xpose.msra.mxu0 0
  %2244 = vmatpush.bf16.xpose.msra.mxu0 0
  %2245 = vmatpush.bf16.xpose.msra.mxu0 0
  %2246 = vmatpush.bf16.xpose.msra.mxu0 0
  %2247 = vmatpush.bf16.xpose.msra.mxu0 %v2238
  %2248 = vmatmul.bf16.gmra.mxu0 %v2235
  %v2249 = vpop.f32.mrf.mxu0
  %v2250 = vadd.f32 0.0, %v2249
  %v2251 = vpop.f32.mrf.mxu0
  %v2252 = vadd.f32 0.0, %v2251
  %2253 = vdwg.mxu0
  %2254 = vrot.lane.b32.xlu0 %v1940, 112
  %v2255 = vpop.permute.xlu0 %2254
  %2256 = vrot.lane.b32.xlu0 %v1940, 80
  %v2257 = vpop.permute.xlu0 %2256
  %v2259 = vsel %vm386, %v2255, 0
  %v2262 = vsel %vm386, %v2257, 0
  %2264 = vmatpush.bf16.xpose.msra.mxu0 0
  %2265 = vmatpush.bf16.xpose.msra.mxu0 0
  %2266 = vmatpush.bf16.xpose.msra.mxu0 0
  %2267 = vmatpush.bf16.xpose.msra.mxu0 0
  %2268 = vmatpush.bf16.xpose.msra.mxu0 0
  %2269 = vmatpush.bf16.xpose.msra.mxu0 0
  %2270 = vmatpush.bf16.xpose.msra.mxu0 0
  %2271 = vmatpush.bf16.xpose.msra.mxu0 %v2262
  %2272 = vmatmul.bf16.gmra.mxu0 %v2259
  %v2273 = vpop.f32.mrf.mxu0
  %v2274 = vadd.f32 0.0, %v2273
  %v2275 = vpop.f32.mrf.mxu0
  %v2276 = vadd.f32 0.0, %v2275
  %2277 = vdwg.mxu0
  %v2278 = vmul.f32 %v2202, 0.25
  %v2279 = vmul.f32 %v2204, 0.25
  %v2280 = vmul.f32 %v2226, 0.25
  %v2281 = vmul.f32 %v2228, 0.25
  %v2282 = vmul.f32 %v2250, 0.25
  %v2283 = vmul.f32 %v2252, 0.25
  %v2284 = vmul.f32 %v2274, 0.25
  %v2285 = vmul.f32 %v2276, 0.25
  %v2286 = vadd.f32 %v2278, %v95
  %v2287 = vadd.f32 %v2279, %v96
  %v2288 = vadd.f32 %v2280, %v97
  %v2289 = vadd.f32 %v2281, %v98
  %v2290 = vadd.f32 %v2282, %v99
  %v2291 = vadd.f32 %v2283, %v100
  %v2292 = vadd.f32 %v2284, %v101
  %v2293 = vadd.f32 %v2285, %v102
  %v2294 = vsel %vm386, %v2286, -inf
  %2295 = vmax.xlane.f32.xlu0 %v2294
  %v2296 = vpop.xlane.xlu0 %2295
  %v2297 = vsel %vm386, %v2287, -inf
  %2298 = vmax.xlane.f32.xlu0 %v2297
  %v2299 = vpop.xlane.xlu0 %2298
  %v2300 = vsel %vm386, %v2288, -inf
  %2301 = vmax.xlane.f32.xlu0 %v2300
  %v2302 = vpop.xlane.xlu0 %2301
  %v2303 = vsel %vm386, %v2289, -inf
  %2304 = vmax.xlane.f32.xlu0 %v2303
  %v2305 = vpop.xlane.xlu0 %2304
  %v2306 = vsel %vm386, %v2290, -inf
  %2307 = vmax.xlane.f32.xlu0 %v2306
  %v2308 = vpop.xlane.xlu0 %2307
  %v2309 = vsel %vm386, %v2291, -inf
  %2310 = vmax.xlane.f32.xlu0 %v2309
  %v2311 = vpop.xlane.xlu0 %2310
  %v2312 = vsel %vm386, %v2292, -inf
  %2313 = vmax.xlane.f32.xlu0 %v2312
  %v2314 = vpop.xlane.xlu0 %2313
  %v2315 = vsel %vm386, %v2293, -inf
  %2316 = vmax.xlane.f32.xlu0 %v2315
  %v2317 = vpop.xlane.xlu0 %2316
  %v2318 = vsub.f32 %v2286, %v2296
  %v2319 = vsub.f32 %v2287, %v2299
  %v2320 = vsub.f32 %v2288, %v2302
  %v2321 = vsub.f32 %v2289, %v2305
  %v2322 = vsub.f32 %v2290, %v2308
  %v2323 = vsub.f32 %v2291, %v2311
  %v2324 = vsub.f32 %v2292, %v2314
  %v2325 = vsub.f32 %v2293, %v2317
  %v2326 = vmul.f32 %v2318, 1.442695
  %v2327 = vpow.pop %v2326
  %v2328 = vmul.f32 %v2319, 1.442695
  %v2329 = vpow.pop %v2328
  %v2330 = vmul.f32 %v2320, 1.442695
  %v2331 = vpow.pop %v2330
  %v2332 = vmul.f32 %v2321, 1.442695
  %v2333 = vpow.pop %v2332
  %v2334 = vmul.f32 %v2322, 1.442695
  %v2335 = vpow.pop %v2334
  %v2336 = vmul.f32 %v2323, 1.442695
  %v2337 = vpow.pop %v2336
  %v2338 = vmul.f32 %v2324, 1.442695
  %v2339 = vpow.pop %v2338
  %v2340 = vmul.f32 %v2325, 1.442695
  %v2341 = vpow.pop %v2340
  %v2342 = vsel %vm386, %v2327, 0.0
  %2343 = vadd.xlane.f32.xlu0 %v2342
  %v2344 = vpop.xlane.xlu0 %2343
  %v2345 = vsel %vm386, %v2329, 0.0
  %2346 = vadd.xlane.f32.xlu0 %v2345
  %v2347 = vpop.xlane.xlu0 %2346
  %v2348 = vsel %vm386, %v2331, 0.0
  %2349 = vadd.xlane.f32.xlu0 %v2348
  %v2350 = vpop.xlane.xlu0 %2349
  %v2351 = vsel %vm386, %v2333, 0.0
  %2352 = vadd.xlane.f32.xlu0 %v2351
  %v2353 = vpop.xlane.xlu0 %2352
  %v2354 = vsel %vm386, %v2335, 0.0
  %2355 = vadd.xlane.f32.xlu0 %v2354
  %v2356 = vpop.xlane.xlu0 %2355
  %v2357 = vsel %vm386, %v2337, 0.0
  %2358 = vadd.xlane.f32.xlu0 %v2357
  %v2359 = vpop.xlane.xlu0 %2358
  %v2360 = vsel %vm386, %v2339, 0.0
  %2361 = vadd.xlane.f32.xlu0 %v2360
  %v2362 = vpop.xlane.xlu0 %2361
  %v2363 = vsel %vm386, %v2341, 0.0
  %2364 = vadd.xlane.f32.xlu0 %v2363
  %v2365 = vpop.xlane.xlu0 %2364
  %v2366 = vrcp.pop %v2344
  %v2367 = vrcp.pop %v2347
  %v2368 = vrcp.pop %v2350
  %v2369 = vrcp.pop %v2353
  %v2370 = vrcp.pop %v2356
  %v2371 = vrcp.pop %v2359
  %v2372 = vrcp.pop %v2362
  %v2373 = vrcp.pop %v2365
  %v2374 = vmul.f32 %v2327, %v2366
  %v2375 = vmul.f32 %v2329, %v2367
  %v2376 = vmul.f32 %v2331, %v2368
  %v2377 = vmul.f32 %v2333, %v2369
  %v2378 = vmul.f32 %v2335, %v2370
  %v2379 = vmul.f32 %v2337, %v2371
  %v2380 = vmul.f32 %v2339, %v2372
  %v2381 = vmul.f32 %v2341, %v2373
  %v2382 = vpack.c.bf16 %v2374, %v2374
  %v2383 = vpack.c.bf16 %v2375, %v2375
  %v2384 = vpack.c.bf16 %v2376, %v2376
  %v2385 = vpack.c.bf16 %v2377, %v2377
  %v2386 = vpack.c.bf16 %v2378, %v2378
  %v2387 = vpack.c.bf16 %v2379, %v2379
  %v2388 = vpack.c.bf16 %v2380, %v2380
  %v2389 = vpack.c.bf16 %v2381, %v2381
  %v2392 = vunpack.c.l.b16 %v2382
  %v2393 = vunpack.c.l.b16 %v2383
  %v2394 = vpack.c.b16 %v2393, %v2392
  %2395 = vrot.lane.b32.xlu0 %v1859, 48
  %v2396 = vpop.permute.xlu0 %2395
  %v2399 = vsel %vm386, %v2394, 0
  %2401 = vmatpush.bf16.msra.mxu0 0
  %2402 = vmatpush.bf16.msra.mxu0 0
  %2403 = vmatpush.bf16.msra.mxu0 0
  %2404 = vmatpush.bf16.msra.mxu0 0
  %2405 = vmatpush.bf16.msra.mxu0 0
  %2406 = vmatpush.bf16.msra.mxu0 0
  %2407 = vmatpush.bf16.msra.mxu0 0
  %2408 = vmatpush.bf16.msra.mxu0 %v2396
  %2409 = vmatmul.bf16.gmra.mxu0 %v2399
  %v2410 = vpop.f32.mrf.mxu0
  %v2411 = vadd.f32 0.0, %v2410
  %v2412 = vpop.f32.mrf.mxu0
  %v2413 = vadd.f32 0.0, %v2412
  %2414 = vdwg.mxu0
  %v2417 = vunpack.c.l.b16 %v2384
  %v2418 = vunpack.c.l.b16 %v2385
  %v2419 = vpack.c.b16 %v2418, %v2417
  %2420 = vrot.lane.b32.xlu0 %v1886, 48
  %v2421 = vpop.permute.xlu0 %2420
  %v2424 = vsel %vm386, %v2419, 0
  %2426 = vmatpush.bf16.msra.mxu0 0
  %2427 = vmatpush.bf16.msra.mxu0 0
  %2428 = vmatpush.bf16.msra.mxu0 0
  %2429 = vmatpush.bf16.msra.mxu0 0
  %2430 = vmatpush.bf16.msra.mxu0 0
  %2431 = vmatpush.bf16.msra.mxu0 0
  %2432 = vmatpush.bf16.msra.mxu0 0
  %2433 = vmatpush.bf16.msra.mxu0 %v2421
  %2434 = vmatmul.bf16.gmra.mxu0 %v2424
  %v2435 = vpop.f32.mrf.mxu0
  %v2436 = vadd.f32 0.0, %v2435
  %v2437 = vpop.f32.mrf.mxu0
  %v2438 = vadd.f32 0.0, %v2437
  %2439 = vdwg.mxu0
  %v2442 = vunpack.c.l.b16 %v2386
  %v2443 = vunpack.c.l.b16 %v2387
  %v2444 = vpack.c.b16 %v2443, %v2442
  %2445 = vrot.lane.b32.xlu0 %v1913, 48
  %v2446 = vpop.permute.xlu0 %2445
  %v2449 = vsel %vm386, %v2444, 0
  %2451 = vmatpush.bf16.msra.mxu0 0
  %2452 = vmatpush.bf16.msra.mxu0 0
  %2453 = vmatpush.bf16.msra.mxu0 0
  %2454 = vmatpush.bf16.msra.mxu0 0
  %2455 = vmatpush.bf16.msra.mxu0 0
  %2456 = vmatpush.bf16.msra.mxu0 0
  %2457 = vmatpush.bf16.msra.mxu0 0
  %2458 = vmatpush.bf16.msra.mxu0 %v2446
  %2459 = vmatmul.bf16.gmra.mxu0 %v2449
  %v2460 = vpop.f32.mrf.mxu0
  %v2461 = vadd.f32 0.0, %v2460
  %v2462 = vpop.f32.mrf.mxu0
  %v2463 = vadd.f32 0.0, %v2462
  %2464 = vdwg.mxu0
  %v2467 = vunpack.c.l.b16 %v2388
  %v2468 = vunpack.c.l.b16 %v2389
  %v2469 = vpack.c.b16 %v2468, %v2467
  %2470 = vrot.lane.b32.xlu0 %v1940, 48
  %v2471 = vpop.permute.xlu0 %2470
  %v2474 = vsel %vm386, %v2469, 0
  %2476 = vmatpush.bf16.msra.mxu0 0
  %2477 = vmatpush.bf16.msra.mxu0 0
  %2478 = vmatpush.bf16.msra.mxu0 0
  %2479 = vmatpush.bf16.msra.mxu0 0
  %2480 = vmatpush.bf16.msra.mxu0 0
  %2481 = vmatpush.bf16.msra.mxu0 0
  %2482 = vmatpush.bf16.msra.mxu0 0
  %2483 = vmatpush.bf16.msra.mxu0 %v2471
  %2484 = vmatmul.bf16.gmra.mxu0 %v2474
  %v2485 = vpop.f32.mrf.mxu0
  %v2486 = vadd.f32 0.0, %v2485
  %v2487 = vpop.f32.mrf.mxu0
  %v2488 = vadd.f32 0.0, %v2487
  %2489 = vdwg.mxu0
  %v2490 = vpack.c.bf16 %v2413, %v2411
  %v2491 = vpack.c.bf16 %v2438, %v2436
  %v2492 = vpack.c.bf16 %v2463, %v2461
  %v2493 = vpack.c.bf16 %v2488, %v2486
  %v2494 = vld [vmem:[%s2179 + $0x8] sm:$0xf]
  %v2495 = vld [vmem:[%s2179 + $0xc] sm:$0xf]
  %v2498 = vunpack.c.l.b16 %v2494
  %v2499 = vunpack.c.l.b16 %v2495
  %v2500 = vpack.c.b16 %v2499, %v2498
  %v2503 = vsel %vm386, %v2490, 0
  %v2506 = vsel %vm386, %v2491, 0
  %v2509 = vsel %vm386, %v2492, 0
  %v2512 = vsel %vm386, %v2493, 0
  %2514 = vmatpush.bf16.msra.mxu0 0
  %2515 = vmatpush.bf16.msra.mxu0 0
  %2516 = vmatpush.bf16.msra.mxu0 0
  %2517 = vmatpush.bf16.msra.mxu0 0
  %2518 = vmatpush.bf16.msra.mxu0 0
  %2519 = vmatpush.bf16.msra.mxu0 0
  %2520 = vmatpush.bf16.msra.mxu0 0
  %2521 = vmatpush.bf16.msra.mxu0 %v2500
  %2522 = vmatmul.bf16.gmra.mxu0 %v2503
  %v2523 = vpop.f32.mrf.mxu0
  %v2524 = vadd.f32 0.0, %v2523
  %v2525 = vpop.f32.mrf.mxu0
  %v2526 = vadd.f32 0.0, %v2525
  %2527 = vmatmul.bf16.gmra.mxu0 %v2506
  %v2528 = vpop.f32.mrf.mxu0
  %v2529 = vadd.f32 0.0, %v2528
  %v2530 = vpop.f32.mrf.mxu0
  %v2531 = vadd.f32 0.0, %v2530
  %2532 = vmatmul.bf16.gmra.mxu0 %v2509
  %v2533 = vpop.f32.mrf.mxu0
  %v2534 = vadd.f32 0.0, %v2533
  %v2535 = vpop.f32.mrf.mxu0
  %v2536 = vadd.f32 0.0, %v2535
  %2537 = vmatmul.bf16.gmra.mxu0 %v2512
  %v2538 = vpop.f32.mrf.mxu0
  %v2539 = vadd.f32 0.0, %v2538
  %v2540 = vpop.f32.mrf.mxu0
  %v2541 = vadd.f32 0.0, %v2540
  %2542 = vdwg.mxu0
  %v2545 = vunpack.c.l.b16 %v2180
  %v2546 = vunpack.c.l.b16 %v2181
  %v2547 = vpack.c.b16 %v2546, %v2545
  %v2550 = vsel %vm386, %v2175, 0
  %v2553 = vsel %vm386, %v2176, 0
  %v2556 = vsel %vm386, %v2177, 0
  %v2559 = vsel %vm386, %v2178, 0
  %2561 = vmatpush.bf16.msra.mxu0 0
  %2562 = vmatpush.bf16.msra.mxu0 0
  %2563 = vmatpush.bf16.msra.mxu0 0
  %2564 = vmatpush.bf16.msra.mxu0 0
  %2565 = vmatpush.bf16.msra.mxu0 0
  %2566 = vmatpush.bf16.msra.mxu0 0
  %2567 = vmatpush.bf16.msra.mxu0 0
  %2568 = vmatpush.bf16.msra.mxu0 %v2547
  %2569 = vmatmul.bf16.gmra.mxu0 %v2550
  %v2570 = vpop.f32.mrf.mxu0
  %v2571 = vadd.f32 %v2524, %v2570
  %v2572 = vpop.f32.mrf.mxu0
  %v2573 = vadd.f32 %v2526, %v2572
  %2574 = vmatmul.bf16.gmra.mxu0 %v2553
  %v2575 = vpop.f32.mrf.mxu0
  %v2576 = vadd.f32 %v2529, %v2575
  %v2577 = vpop.f32.mrf.mxu0
  %v2578 = vadd.f32 %v2531, %v2577
  %2579 = vmatmul.bf16.gmra.mxu0 %v2556
  %v2580 = vpop.f32.mrf.mxu0
  %v2581 = vadd.f32 %v2534, %v2580
  %v2582 = vpop.f32.mrf.mxu0
  %v2583 = vadd.f32 %v2536, %v2582
  %2584 = vmatmul.bf16.gmra.mxu0 %v2559
  %v2585 = vpop.f32.mrf.mxu0
  %v2586 = vadd.f32 %v2539, %v2585
  %v2587 = vpop.f32.mrf.mxu0
  %v2588 = vadd.f32 %v2541, %v2587
  %2589 = vdwg.mxu0
  %v2590 = vadd.f32 %v1576, %v2571
  %v2591 = vadd.f32 %v1577, %v2573
  %v2592 = vadd.f32 %v1578, %v2576
  %v2593 = vadd.f32 %v1579, %v2578
  %v2594 = vadd.f32 %v1580, %v2581
  %v2595 = vadd.f32 %v1581, %v2583
  %v2596 = vadd.f32 %v1582, %v2586
  %v2597 = vadd.f32 %v1583, %v2588
  %s2598 = scalar_lea.vmem %s8, 1
  %v2599 = vld [vmem:[%s2598] sm:$0x1]
  %v2601 = vperm.slane %v2599, 0
  %v2603 = vadd.f32 %v2590, %v2601
  %v2604 = vadd.f32 %v2591, %v2601
  %v2605 = vadd.f32 %v2592, %v2601
  %v2606 = vadd.f32 %v2593, %v2601
  %v2607 = vadd.f32 %v2594, %v2601
  %v2608 = vadd.f32 %v2595, %v2601
  %v2609 = vadd.f32 %v2596, %v2601
  %v2610 = vadd.f32 %v2597, %v2601
  %s2611 = scalar_lea.vmem %s4, 6
  %v2612 = vld [vmem:[%s2611] sm:$0x3]
  %v2613 = vsel %vm104, %v2603, 0.0
  %2614 = vadd.xlane.f32.xlu0 %v2613
  %v2615 = vpop.xlane.xlu0 %2614
  %v2616 = vsel %vm104, %v2604, 0.0
  %2617 = vadd.xlane.f32.xlu0 %v2616
  %v2618 = vpop.xlane.xlu0 %2617
  %v2619 = vsel %vm104, %v2605, 0.0
  %2620 = vadd.xlane.f32.xlu0 %v2619
  %v2621 = vpop.xlane.xlu0 %2620
  %v2622 = vsel %vm104, %v2606, 0.0
  %2623 = vadd.xlane.f32.xlu0 %v2622
  %v2624 = vpop.xlane.xlu0 %2623
  %v2625 = vsel %vm104, %v2607, 0.0
  %2626 = vadd.xlane.f32.xlu0 %v2625
  %v2627 = vpop.xlane.xlu0 %2626
  %v2628 = vsel %vm104, %v2608, 0.0
  %2629 = vadd.xlane.f32.xlu0 %v2628
  %v2630 = vpop.xlane.xlu0 %2629
  %v2631 = vsel %vm104, %v2609, 0.0
  %2632 = vadd.xlane.f32.xlu0 %v2631
  %v2633 = vpop.xlane.xlu0 %2632
  %v2634 = vsel %vm104, %v2610, 0.0
  %2635 = vadd.xlane.f32.xlu0 %v2634
  %v2636 = vpop.xlane.xlu0 %2635
  %v2637 = vmul.f32 %v2615, %v135
  %v2638 = vmul.f32 %v2618, %v135
  %v2639 = vmul.f32 %v2621, %v135
  %v2640 = vmul.f32 %v2624, %v135
  %v2641 = vmul.f32 %v2627, %v135
  %v2642 = vmul.f32 %v2630, %v135
  %v2643 = vmul.f32 %v2633, %v135
  %v2644 = vmul.f32 %v2636, %v135
  %v2645 = vsub.f32 %v2603, %v2637
  %v2646 = vsub.f32 %v2604, %v2638
  %v2647 = vsub.f32 %v2605, %v2639
  %v2648 = vsub.f32 %v2606, %v2640
  %v2649 = vsub.f32 %v2607, %v2641
  %v2650 = vsub.f32 %v2608, %v2642
  %v2651 = vsub.f32 %v2609, %v2643
  %v2652 = vsub.f32 %v2610, %v2644
  %v2653 = vmul.f32 %v2645, %v2645
  %v2654 = vmul.f32 %v2646, %v2646
  %v2655 = vmul.f32 %v2647, %v2647
  %v2656 = vmul.f32 %v2648, %v2648
  %v2657 = vmul.f32 %v2649, %v2649
  %v2658 = vmul.f32 %v2650, %v2650
  %v2659 = vmul.f32 %v2651, %v2651
  %v2660 = vmul.f32 %v2652, %v2652
  %v2661 = vsel %vm104, %v2653, 0.0
  %2662 = vadd.xlane.f32.xlu0 %v2661
  %v2663 = vpop.xlane.xlu0 %2662
  %v2664 = vsel %vm104, %v2654, 0.0
  %2665 = vadd.xlane.f32.xlu0 %v2664
  %v2666 = vpop.xlane.xlu0 %2665
  %v2667 = vsel %vm104, %v2655, 0.0
  %2668 = vadd.xlane.f32.xlu0 %v2667
  %v2669 = vpop.xlane.xlu0 %2668
  %v2670 = vsel %vm104, %v2656, 0.0
  %2671 = vadd.xlane.f32.xlu0 %v2670
  %v2672 = vpop.xlane.xlu0 %2671
  %v2673 = vsel %vm104, %v2657, 0.0
  %2674 = vadd.xlane.f32.xlu0 %v2673
  %v2675 = vpop.xlane.xlu0 %2674
  %v2676 = vsel %vm104, %v2658, 0.0
  %2677 = vadd.xlane.f32.xlu0 %v2676
  %v2678 = vpop.xlane.xlu0 %2677
  %v2679 = vsel %vm104, %v2659, 0.0
  %2680 = vadd.xlane.f32.xlu0 %v2679
  %v2681 = vpop.xlane.xlu0 %2680
  %v2682 = vsel %vm104, %v2660, 0.0
  %2683 = vadd.xlane.f32.xlu0 %v2682
  %v2684 = vpop.xlane.xlu0 %2683
  %v2685 = vmul.f32 %v2663, %v135
  %v2686 = vmul.f32 %v2666, %v135
  %v2687 = vmul.f32 %v2669, %v135
  %v2688 = vmul.f32 %v2672, %v135
  %v2689 = vmul.f32 %v2675, %v135
  %v2690 = vmul.f32 %v2678, %v135
  %v2691 = vmul.f32 %v2681, %v135
  %v2692 = vmul.f32 %v2684, %v135
  %v2693 = vadd.f32 %v2685, 1e-05
  %v2694 = vadd.f32 %v2686, 1e-05
  %v2695 = vadd.f32 %v2687, 1e-05
  %v2696 = vadd.f32 %v2688, 1e-05
  %v2697 = vadd.f32 %v2689, 1e-05
  %v2698 = vadd.f32 %v2690, 1e-05
  %v2699 = vadd.f32 %v2691, 1e-05
  %v2700 = vadd.f32 %v2692, 1e-05
  %v2701 = vrsqrt.pop %v2693
  %v2702 = vmul.f32 %v2701, %v2693
  %v2703 = vmul.f32 %v2702, %v2701
  %v2704 = vmul.f32 0.5, %v2703
  %v2705 = vsub.f32 1.5, %v2704
  %v2706 = vmul.f32 %v2701, %v2705
  %vm2707 = vweird.f32 %v2693
  %vm2708 = vweird.f32 %v2701
  %vm2709 = vmor %vm2707, %vm2708
  %v2710 = vsel %vm2709, %v2701, %v2706
  %v2711 = vrsqrt.pop %v2694
  %v2712 = vmul.f32 %v2711, %v2694
  %v2713 = vmul.f32 %v2712, %v2711
  %v2714 = vmul.f32 0.5, %v2713
  %v2715 = vsub.f32 1.5, %v2714
  %v2716 = vmul.f32 %v2711, %v2715
  %vm2717 = vweird.f32 %v2694
  %vm2718 = vweird.f32 %v2711
  %vm2719 = vmor %vm2717, %vm2718
  %v2720 = vsel %vm2719, %v2711, %v2716
  %v2721 = vrsqrt.pop %v2695
  %v2722 = vmul.f32 %v2721, %v2695
  %v2723 = vmul.f32 %v2722, %v2721
  %v2724 = vmul.f32 0.5, %v2723
  %v2725 = vsub.f32 1.5, %v2724
  %v2726 = vmul.f32 %v2721, %v2725
  %vm2727 = vweird.f32 %v2695
  %vm2728 = vweird.f32 %v2721
  %vm2729 = vmor %vm2727, %vm2728
  %v2730 = vsel %vm2729, %v2721, %v2726
  %v2731 = vrsqrt.pop %v2696
  %v2732 = vmul.f32 %v2731, %v2696
  %v2733 = vmul.f32 %v2732, %v2731
  %v2734 = vmul.f32 0.5, %v2733
  %v2735 = vsub.f32 1.5, %v2734
  %v2736 = vmul.f32 %v2731, %v2735
  %vm2737 = vweird.f32 %v2696
  %vm2738 = vweird.f32 %v2731
  %vm2739 = vmor %vm2737, %vm2738
  %v2740 = vsel %vm2739, %v2731, %v2736
  %v2741 = vrsqrt.pop %v2697
  %v2742 = vmul.f32 %v2741, %v2697
  %v2743 = vmul.f32 %v2742, %v2741
  %v2744 = vmul.f32 0.5, %v2743
  %v2745 = vsub.f32 1.5, %v2744
  %v2746 = vmul.f32 %v2741, %v2745
  %vm2747 = vweird.f32 %v2697
  %vm2748 = vweird.f32 %v2741
  %vm2749 = vmor %vm2747, %vm2748
  %v2750 = vsel %vm2749, %v2741, %v2746
  %v2751 = vrsqrt.pop %v2698
  %v2752 = vmul.f32 %v2751, %v2698
  %v2753 = vmul.f32 %v2752, %v2751
  %v2754 = vmul.f32 0.5, %v2753
  %v2755 = vsub.f32 1.5, %v2754
  %v2756 = vmul.f32 %v2751, %v2755
  %vm2757 = vweird.f32 %v2698
  %vm2758 = vweird.f32 %v2751
  %vm2759 = vmor %vm2757, %vm2758
  %v2760 = vsel %vm2759, %v2751, %v2756
  %v2761 = vrsqrt.pop %v2699
  %v2762 = vmul.f32 %v2761, %v2699
  %v2763 = vmul.f32 %v2762, %v2761
  %v2764 = vmul.f32 0.5, %v2763
  %v2765 = vsub.f32 1.5, %v2764
  %v2766 = vmul.f32 %v2761, %v2765
  %vm2767 = vweird.f32 %v2699
  %vm2768 = vweird.f32 %v2761
  %vm2769 = vmor %vm2767, %vm2768
  %v2770 = vsel %vm2769, %v2761, %v2766
  %v2771 = vrsqrt.pop %v2700
  %v2772 = vmul.f32 %v2771, %v2700
  %v2773 = vmul.f32 %v2772, %v2771
  %v2774 = vmul.f32 0.5, %v2773
  %v2775 = vsub.f32 1.5, %v2774
  %v2776 = vmul.f32 %v2771, %v2775
  %vm2777 = vweird.f32 %v2700
  %vm2778 = vweird.f32 %v2771
  %vm2779 = vmor %vm2777, %vm2778
  %v2780 = vsel %vm2779, %v2771, %v2776
  %v2781 = vmul.f32 %v2645, %v2710
  %v2782 = vmul.f32 %v2646, %v2720
  %v2783 = vmul.f32 %v2647, %v2730
  %v2784 = vmul.f32 %v2648, %v2740
  %v2785 = vmul.f32 %v2649, %v2750
  %v2786 = vmul.f32 %v2650, %v2760
  %v2787 = vmul.f32 %v2651, %v2770
  %v2788 = vmul.f32 %v2652, %v2780
  %v2789 = vperm.slane %v2612, 0
  %v2790 = vmul.f32 %v2781, %v2789
  %v2791 = vmul.f32 %v2782, %v2789
  %v2792 = vmul.f32 %v2783, %v2789
  %v2793 = vmul.f32 %v2784, %v2789
  %v2794 = vmul.f32 %v2785, %v2789
  %v2795 = vmul.f32 %v2786, %v2789
  %v2796 = vmul.f32 %v2787, %v2789
  %v2797 = vmul.f32 %v2788, %v2789
  %v2798 = vperm.slane %v2612, 1
  %v2799 = vadd.f32 %v2790, %v2798
  %v2800 = vadd.f32 %v2791, %v2798
  %v2801 = vadd.f32 %v2792, %v2798
  %v2802 = vadd.f32 %v2793, %v2798
  %v2803 = vadd.f32 %v2794, %v2798
  %v2804 = vadd.f32 %v2795, %v2798
  %v2805 = vadd.f32 %v2796, %v2798
  %v2806 = vadd.f32 %v2797, %v2798
  %v2807 = vpack.c.bf16 %v2800, %v2799
  %v2808 = vpack.c.bf16 %v2802, %v2801
  %v2809 = vpack.c.bf16 %v2804, %v2803
  %v2810 = vpack.c.bf16 %v2806, %v2805
  %s2811 = scalar_lea.vmem %s9, 16
  %v2812 = vld [vmem:[%s2811] sm:$0xf]
  %v2813 = vld [vmem:[%s2811 + $0x4] sm:$0xf]
  %v2814 = vld [vmem:[%s2811 + $0x8] sm:$0xf]
  %v2815 = vld [vmem:[%s2811 + $0xc] sm:$0xf]
  %s2816 = scalar_lea.vmem %s10, 1
  %v2817 = vld [vmem:[%s2816] sm:$0x1]
  %v2819 = vperm.slane %v2817, 0
  %v2825 = vunpack.c.l.b16 %v2812
  %v2826 = vunpack.c.l.b16 %v2813
  %v2827 = vunpack.c.l.b16 %v2814
  %v2828 = vunpack.c.l.b16 %v2815
  %v2829 = vpack.c.b16 %v2826, %v2825
  %v2830 = vpack.c.b16 %v2828, %v2827
  %v2834 = vsel %vm104, %v2807, 0
  %v2837 = vsel %vm104, %v2808, 0
  %v2840 = vsel %vm104, %v2809, 0
  %v2843 = vsel %vm104, %v2810, 0
  %2845 = vmatpush.bf16.msra.mxu0 0
  %2846 = vmatpush.bf16.msra.mxu0 0
  %2847 = vmatpush.bf16.msra.mxu0 0
  %2848 = vmatpush.bf16.msra.mxu0 0
  %2849 = vmatpush.bf16.msra.mxu0 0
  %2850 = vmatpush.bf16.msra.mxu0 0
  %2851 = vmatpush.bf16.msra.mxu0 %v2830
  %2852 = vmatpush.bf16.msra.mxu0 %v2829
  %2853 = vmatmul.bf16.gmra.mxu0 %v2834
  %v2854 = vpop.f32.mrf.mxu0
  %v2855 = vadd.f32 %v2819, %v2854
  %v2856 = vpop.f32.mrf.mxu0
  %v2857 = vadd.f32 %v2819, %v2856
  %2858 = vmatmul.bf16.gmra.mxu0 %v2837
  %v2859 = vpop.f32.mrf.mxu0
  %v2860 = vadd.f32 %v2819, %v2859
  %v2861 = vpop.f32.mrf.mxu0
  %v2862 = vadd.f32 %v2819, %v2861
  %2863 = vmatmul.bf16.gmra.mxu0 %v2840
  %v2864 = vpop.f32.mrf.mxu0
  %v2865 = vadd.f32 %v2819, %v2864
  %v2866 = vpop.f32.mrf.mxu0
  %v2867 = vadd.f32 %v2819, %v2866
  %2868 = vmatmul.bf16.gmra.mxu0 %v2843
  %v2869 = vpop.f32.mrf.mxu0
  %v2870 = vadd.f32 %v2819, %v2869
  %v2871 = vpop.f32.mrf.mxu0
  %v2872 = vadd.f32 %v2819, %v2871
  %2873 = vdwg.mxu0
  %v2874 = vmul.f32 %v2855, %v2855
  %v2875 = vmul.f32 %v2857, %v2857
  %v2876 = vmul.f32 %v2860, %v2860
  %v2877 = vmul.f32 %v2862, %v2862
  %v2878 = vmul.f32 %v2865, %v2865
  %v2879 = vmul.f32 %v2867, %v2867
  %v2880 = vmul.f32 %v2870, %v2870
  %v2881 = vmul.f32 %v2872, %v2872
  %v2882 = vmul.f32 %v2855, %v2874
  %v2883 = vmul.f32 %v2857, %v2875
  %v2884 = vmul.f32 %v2860, %v2876
  %v2885 = vmul.f32 %v2862, %v2877
  %v2886 = vmul.f32 %v2865, %v2878
  %v2887 = vmul.f32 %v2867, %v2879
  %v2888 = vmul.f32 %v2870, %v2880
  %v2889 = vmul.f32 %v2872, %v2881
  %v2890 = vmul.f32 %v2882, 0.044715
  %v2891 = vmul.f32 %v2883, 0.044715
  %v2892 = vmul.f32 %v2884, 0.044715
  %v2893 = vmul.f32 %v2885, 0.044715
  %v2894 = vmul.f32 %v2886, 0.044715
  %v2895 = vmul.f32 %v2887, 0.044715
  %v2896 = vmul.f32 %v2888, 0.044715
  %v2897 = vmul.f32 %v2889, 0.044715
  %v2898 = vadd.f32 %v2855, %v2890
  %v2899 = vadd.f32 %v2857, %v2891
  %v2900 = vadd.f32 %v2860, %v2892
  %v2901 = vadd.f32 %v2862, %v2893
  %v2902 = vadd.f32 %v2865, %v2894
  %v2903 = vadd.f32 %v2867, %v2895
  %v2904 = vadd.f32 %v2870, %v2896
  %v2905 = vadd.f32 %v2872, %v2897
  %v2906 = vmul.f32 %v2898, 0.7978846
  %v2907 = vmul.f32 %v2899, 0.7978846
  %v2908 = vmul.f32 %v2900, 0.7978846
  %v2909 = vmul.f32 %v2901, 0.7978846
  %v2910 = vmul.f32 %v2902, 0.7978846
  %v2911 = vmul.f32 %v2903, 0.7978846
  %v2912 = vmul.f32 %v2904, 0.7978846
  %v2913 = vmul.f32 %v2905, 0.7978846
  %v2914 = vtanh.pop %v2906
  %v2915 = vtanh.pop %v2907
  %v2916 = vtanh.pop %v2908
  %v2917 = vtanh.pop %v2909
  %v2918 = vtanh.pop %v2910
  %v2919 = vtanh.pop %v2911
  %v2920 = vtanh.pop %v2912
  %v2921 = vtanh.pop %v2913
  %v2922 = vadd.f32 %v2914, 1.0
  %v2923 = vadd.f32 %v2915, 1.0
  %v2924 = vadd.f32 %v2916, 1.0
  %v2925 = vadd.f32 %v2917, 1.0
  %v2926 = vadd.f32 %v2918, 1.0
  %v2927 = vadd.f32 %v2919, 1.0
  %v2928 = vadd.f32 %v2920, 1.0
  %v2929 = vadd.f32 %v2921, 1.0
  %v2930 = vmul.f32 %v2922, 0.5
  %v2931 = vmul.f32 %v2923, 0.5
  %v2932 = vmul.f32 %v2924, 0.5
  %v2933 = vmul.f32 %v2925, 0.5
  %v2934 = vmul.f32 %v2926, 0.5
  %v2935 = vmul.f32 %v2927, 0.5
  %v2936 = vmul.f32 %v2928, 0.5
  %v2937 = vmul.f32 %v2929, 0.5
  %v2938 = vmul.f32 %v2855, %v2930
  %v2939 = vmul.f32 %v2857, %v2931
  %v2940 = vmul.f32 %v2860, %v2932
  %v2941 = vmul.f32 %v2862, %v2933
  %v2942 = vmul.f32 %v2865, %v2934
  %v2943 = vmul.f32 %v2867, %v2935
  %v2944 = vmul.f32 %v2870, %v2936
  %v2945 = vmul.f32 %v2872, %v2937
  %v2946 = vpack.c.bf16 %v2939, %v2938
  %v2947 = vpack.c.bf16 %v2941, %v2940
  %v2948 = vpack.c.bf16 %v2943, %v2942
  %v2949 = vpack.c.bf16 %v2945, %v2944
  %s2950 = scalar_lea.vmem %s11, 64
  %v2951 = vld [vmem:[%s2950] sm:$0xf]
  %v2952 = vld [vmem:[%s2950 + $0x4] sm:$0xf]
  %v2953 = vld [vmem:[%s2950 + $0x8] sm:$0xf]
  %v2954 = vld [vmem:[%s2950 + $0xc] sm:$0xf]
  %v2955 = vld [vmem:[%s2950 + $0x10] sm:$0xf]
  %v2956 = vld [vmem:[%s2950 + $0x14] sm:$0xf]
  %v2957 = vld [vmem:[%s2950 + $0x18] sm:$0xf]
  %v2958 = vld [vmem:[%s2950 + $0x1c] sm:$0xf]
  %v2959 = vld [vmem:[%s2950 + $0x20] sm:$0xf]
  %v2960 = vld [vmem:[%s2950 + $0x24] sm:$0xf]
  %v2961 = vld [vmem:[%s2950 + $0x28] sm:$0xf]
  %v2962 = vld [vmem:[%s2950 + $0x2c] sm:$0xf]
  %v2963 = vld [vmem:[%s2950 + $0x30] sm:$0xf]
  %v2964 = vld [vmem:[%s2950 + $0x34] sm:$0xf]
  %v2965 = vld [vmem:[%s2950 + $0x38] sm:$0xf]
  %v2966 = vld [vmem:[%s2950 + $0x3c] sm:$0xf]
  %v2983 = vunpack.c.l.b16 %v2951
  %v2984 = vunpack.c.l.b16 %v2952
  %v2985 = vunpack.c.l.b16 %v2953
  %v2986 = vunpack.c.l.b16 %v2954
  %v2987 = vunpack.c.l.b16 %v2955
  %v2988 = vunpack.c.l.b16 %v2956
  %v2989 = vunpack.c.l.b16 %v2957
  %v2990 = vunpack.c.l.b16 %v2958
  %v2991 = vunpack.c.l.b16 %v2959
  %v2992 = vunpack.c.l.b16 %v2960
  %v2993 = vunpack.c.l.b16 %v2961
  %v2994 = vunpack.c.l.b16 %v2962
  %v2995 = vunpack.c.l.b16 %v2963
  %v2996 = vunpack.c.l.b16 %v2964
  %v2997 = vunpack.c.l.b16 %v2965
  %v2998 = vunpack.c.l.b16 %v2966
  %v2999 = vpack.c.b16 %v2984, %v2983
  %v3000 = vpack.c.b16 %v2986, %v2985
  %v3001 = vpack.c.b16 %v2988, %v2987
  %v3002 = vpack.c.b16 %v2990, %v2989
  %v3003 = vpack.c.b16 %v2992, %v2991
  %v3004 = vpack.c.b16 %v2994, %v2993
  %v3005 = vpack.c.b16 %v2996, %v2995
  %v3006 = vpack.c.b16 %v2998, %v2997
  %3015 = vmatpush.bf16.msra.mxu0 %v3006
  %3016 = vmatpush.bf16.msra.mxu0 %v3005
  %3017 = vmatpush.bf16.msra.mxu0 %v3004
  %3018 = vmatpush.bf16.msra.mxu0 %v3003
  %3019 = vmatpush.bf16.msra.mxu0 %v3002
  %3020 = vmatpush.bf16.msra.mxu0 %v3001
  %3021 = vmatpush.bf16.msra.mxu0 %v3000
  %3022 = vmatpush.bf16.msra.mxu0 %v2999
  %3023 = vmatmul.bf16.gmra.mxu0 %v2946
  %v3024 = vpop.f32.mrf.mxu0
  %v3025 = vadd.f32 0.0, %v3024
  %v3026 = vpop.f32.mrf.mxu0
  %v3027 = vadd.f32 0.0, %v3026
  %3028 = vmatmul.bf16.gmra.mxu0 %v2947
  %v3029 = vpop.f32.mrf.mxu0
  %v3030 = vadd.f32 0.0, %v3029
  %v3031 = vpop.f32.mrf.mxu0
  %v3032 = vadd.f32 0.0, %v3031
  %3033 = vmatmul.bf16.gmra.mxu0 %v2948
  %v3034 = vpop.f32.mrf.mxu0
  %v3035 = vadd.f32 0.0, %v3034
  %v3036 = vpop.f32.mrf.mxu0
  %v3037 = vadd.f32 0.0, %v3036
  %3038 = vmatmul.bf16.gmra.mxu0 %v2949
  %v3039 = vpop.f32.mrf.mxu0
  %v3040 = vadd.f32 0.0, %v3039
  %v3041 = vpop.f32.mrf.mxu0
  %v3042 = vadd.f32 0.0, %v3041
  %3043 = vdwg.mxu0
  %v3044 = vadd.f32 %v2603, %v3025
  %v3045 = vadd.f32 %v2604, %v3027
  %v3046 = vadd.f32 %v2605, %v3030
  %v3047 = vadd.f32 %v2606, %v3032
  %v3048 = vadd.f32 %v2607, %v3035
  %v3049 = vadd.f32 %v2608, %v3037
  %v3050 = vadd.f32 %v2609, %v3040
  %v3051 = vadd.f32 %v2610, %v3042
  %s3052 = scalar_lea.vmem %s12, 1
  %v3053 = vld [vmem:[%s3052] sm:$0x1]
  %v3055 = vperm.slane %v3053, 0
  %v3057 = vadd.f32 %v3044, %v3055
  %v3058 = vadd.f32 %v3045, %v3055
  %v3059 = vadd.f32 %v3046, %v3055
  %v3060 = vadd.f32 %v3047, %v3055
  %v3061 = vadd.f32 %v3048, %v3055
  %v3062 = vadd.f32 %v3049, %v3055
  %v3063 = vadd.f32 %v3050, %v3055
  %v3064 = vadd.f32 %v3051, %v3055
  %s3065 = scalar_lea.vmem %s4, 8
  %v3066 = vld [vmem:[%s3065] sm:$0x3]
  %v3067 = vsel %vm104, %v3057, 0.0
  %3068 = vadd.xlane.f32.xlu0 %v3067
  %v3069 = vpop.xlane.xlu0 %3068
  %v3070 = vsel %vm104, %v3058, 0.0
  %3071 = vadd.xlane.f32.xlu0 %v3070
  %v3072 = vpop.xlane.xlu0 %3071
  %v3073 = vsel %vm104, %v3059, 0.0
  %3074 = vadd.xlane.f32.xlu0 %v3073
  %v3075 = vpop.xlane.xlu0 %3074
  %v3076 = vsel %vm104, %v3060, 0.0
  %3077 = vadd.xlane.f32.xlu0 %v3076
  %v3078 = vpop.xlane.xlu0 %3077
  %v3079 = vsel %vm104, %v3061, 0.0
  %3080 = vadd.xlane.f32.xlu0 %v3079
  %v3081 = vpop.xlane.xlu0 %3080
  %v3082 = vsel %vm104, %v3062, 0.0
  %3083 = vadd.xlane.f32.xlu0 %v3082
  %v3084 = vpop.xlane.xlu0 %3083
  %v3085 = vsel %vm104, %v3063, 0.0
  %3086 = vadd.xlane.f32.xlu0 %v3085
  %v3087 = vpop.xlane.xlu0 %3086
  %v3088 = vsel %vm104, %v3064, 0.0
  %3089 = vadd.xlane.f32.xlu0 %v3088
  %v3090 = vpop.xlane.xlu0 %3089
  %v3091 = vmul.f32 %v3069, %v135
  %v3092 = vmul.f32 %v3072, %v135
  %v3093 = vmul.f32 %v3075, %v135
  %v3094 = vmul.f32 %v3078, %v135
  %v3095 = vmul.f32 %v3081, %v135
  %v3096 = vmul.f32 %v3084, %v135
  %v3097 = vmul.f32 %v3087, %v135
  %v3098 = vmul.f32 %v3090, %v135
  %v3099 = vsub.f32 %v3057, %v3091
  %v3100 = vsub.f32 %v3058, %v3092
  %v3101 = vsub.f32 %v3059, %v3093
  %v3102 = vsub.f32 %v3060, %v3094
  %v3103 = vsub.f32 %v3061, %v3095
  %v3104 = vsub.f32 %v3062, %v3096
  %v3105 = vsub.f32 %v3063, %v3097
  %v3106 = vsub.f32 %v3064, %v3098
  %v3107 = vmul.f32 %v3099, %v3099
  %v3108 = vmul.f32 %v3100, %v3100
  %v3109 = vmul.f32 %v3101, %v3101
  %v3110 = vmul.f32 %v3102, %v3102
  %v3111 = vmul.f32 %v3103, %v3103
  %v3112 = vmul.f32 %v3104, %v3104
  %v3113 = vmul.f32 %v3105, %v3105
  %v3114 = vmul.f32 %v3106, %v3106
  %v3115 = vsel %vm104, %v3107, 0.0
  %3116 = vadd.xlane.f32.xlu0 %v3115
  %v3117 = vpop.xlane.xlu0 %3116
  %v3118 = vsel %vm104, %v3108, 0.0
  %3119 = vadd.xlane.f32.xlu0 %v3118
  %v3120 = vpop.xlane.xlu0 %3119
  %v3121 = vsel %vm104, %v3109, 0.0
  %3122 = vadd.xlane.f32.xlu0 %v3121
  %v3123 = vpop.xlane.xlu0 %3122
  %v3124 = vsel %vm104, %v3110, 0.0
  %3125 = vadd.xlane.f32.xlu0 %v3124
  %v3126 = vpop.xlane.xlu0 %3125
  %v3127 = vsel %vm104, %v3111, 0.0
  %3128 = vadd.xlane.f32.xlu0 %v3127
  %v3129 = vpop.xlane.xlu0 %3128
  %v3130 = vsel %vm104, %v3112, 0.0
  %3131 = vadd.xlane.f32.xlu0 %v3130
  %v3132 = vpop.xlane.xlu0 %3131
  %v3133 = vsel %vm104, %v3113, 0.0
  %3134 = vadd.xlane.f32.xlu0 %v3133
  %v3135 = vpop.xlane.xlu0 %3134
  %v3136 = vsel %vm104, %v3114, 0.0
  %3137 = vadd.xlane.f32.xlu0 %v3136
  %v3138 = vpop.xlane.xlu0 %3137
  %v3139 = vmul.f32 %v3117, %v135
  %v3140 = vmul.f32 %v3120, %v135
  %v3141 = vmul.f32 %v3123, %v135
  %v3142 = vmul.f32 %v3126, %v135
  %v3143 = vmul.f32 %v3129, %v135
  %v3144 = vmul.f32 %v3132, %v135
  %v3145 = vmul.f32 %v3135, %v135
  %v3146 = vmul.f32 %v3138, %v135
  %v3147 = vadd.f32 %v3139, 1e-05
  %v3148 = vadd.f32 %v3140, 1e-05
  %v3149 = vadd.f32 %v3141, 1e-05
  %v3150 = vadd.f32 %v3142, 1e-05
  %v3151 = vadd.f32 %v3143, 1e-05
  %v3152 = vadd.f32 %v3144, 1e-05
  %v3153 = vadd.f32 %v3145, 1e-05
  %v3154 = vadd.f32 %v3146, 1e-05
  %v3155 = vrsqrt.pop %v3147
  %v3156 = vmul.f32 %v3155, %v3147
  %v3157 = vmul.f32 %v3156, %v3155
  %v3158 = vmul.f32 0.5, %v3157
  %v3159 = vsub.f32 1.5, %v3158
  %v3160 = vmul.f32 %v3155, %v3159
  %vm3161 = vweird.f32 %v3147
  %vm3162 = vweird.f32 %v3155
  %vm3163 = vmor %vm3161, %vm3162
  %v3164 = vsel %vm3163, %v3155, %v3160
  %v3165 = vrsqrt.pop %v3148
  %v3166 = vmul.f32 %v3165, %v3148
  %v3167 = vmul.f32 %v3166, %v3165
  %v3168 = vmul.f32 0.5, %v3167
  %v3169 = vsub.f32 1.5, %v3168
  %v3170 = vmul.f32 %v3165, %v3169
  %vm3171 = vweird.f32 %v3148
  %vm3172 = vweird.f32 %v3165
  %vm3173 = vmor %vm3171, %vm3172
  %v3174 = vsel %vm3173, %v3165, %v3170
  %v3175 = vrsqrt.pop %v3149
  %v3176 = vmul.f32 %v3175, %v3149
  %v3177 = vmul.f32 %v3176, %v3175
  %v3178 = vmul.f32 0.5, %v3177
  %v3179 = vsub.f32 1.5, %v3178
  %v3180 = vmul.f32 %v3175, %v3179
  %vm3181 = vweird.f32 %v3149
  %vm3182 = vweird.f32 %v3175
  %vm3183 = vmor %vm3181, %vm3182
  %v3184 = vsel %vm3183, %v3175, %v3180
  %v3185 = vrsqrt.pop %v3150
  %v3186 = vmul.f32 %v3185, %v3150
  %v3187 = vmul.f32 %v3186, %v3185
  %v3188 = vmul.f32 0.5, %v3187
  %v3189 = vsub.f32 1.5, %v3188
  %v3190 = vmul.f32 %v3185, %v3189
  %vm3191 = vweird.f32 %v3150
  %vm3192 = vweird.f32 %v3185
  %vm3193 = vmor %vm3191, %vm3192
  %v3194 = vsel %vm3193, %v3185, %v3190
  %v3195 = vrsqrt.pop %v3151
  %v3196 = vmul.f32 %v3195, %v3151
  %v3197 = vmul.f32 %v3196, %v3195
  %v3198 = vmul.f32 0.5, %v3197
  %v3199 = vsub.f32 1.5, %v3198
  %v3200 = vmul.f32 %v3195, %v3199
  %vm3201 = vweird.f32 %v3151
  %vm3202 = vweird.f32 %v3195
  %vm3203 = vmor %vm3201, %vm3202
  %v3204 = vsel %vm3203, %v3195, %v3200
  %v3205 = vrsqrt.pop %v3152
  %v3206 = vmul.f32 %v3205, %v3152
  %v3207 = vmul.f32 %v3206, %v3205
  %v3208 = vmul.f32 0.5, %v3207
  %v3209 = vsub.f32 1.5, %v3208
  %v3210 = vmul.f32 %v3205, %v3209
  %vm3211 = vweird.f32 %v3152
  %vm3212 = vweird.f32 %v3205
  %vm3213 = vmor %vm3211, %vm3212
  %v3214 = vsel %vm3213, %v3205, %v3210
  %v3215 = vrsqrt.pop %v3153
  %v3216 = vmul.f32 %v3215, %v3153
  %v3217 = vmul.f32 %v3216, %v3215
  %v3218 = vmul.f32 0.5, %v3217
  %v3219 = vsub.f32 1.5, %v3218
  %v3220 = vmul.f32 %v3215, %v3219
  %vm3221 = vweird.f32 %v3153
  %vm3222 = vweird.f32 %v3215
  %vm3223 = vmor %vm3221, %vm3222
  %v3224 = vsel %vm3223, %v3215, %v3220
  %v3225 = vrsqrt.pop %v3154
  %v3226 = vmul.f32 %v3225, %v3154
  %v3227 = vmul.f32 %v3226, %v3225
  %v3228 = vmul.f32 0.5, %v3227
  %v3229 = vsub.f32 1.5, %v3228
  %v3230 = vmul.f32 %v3225, %v3229
  %vm3231 = vweird.f32 %v3154
  %vm3232 = vweird.f32 %v3225
  %vm3233 = vmor %vm3231, %vm3232
  %v3234 = vsel %vm3233, %v3225, %v3230
  %v3235 = vmul.f32 %v3099, %v3164
  %v3236 = vmul.f32 %v3100, %v3174
  %v3237 = vmul.f32 %v3101, %v3184
  %v3238 = vmul.f32 %v3102, %v3194
  %v3239 = vmul.f32 %v3103, %v3204
  %v3240 = vmul.f32 %v3104, %v3214
  %v3241 = vmul.f32 %v3105, %v3224
  %v3242 = vmul.f32 %v3106, %v3234
  %v3243 = vperm.slane %v3066, 0
  %v3244 = vmul.f32 %v3235, %v3243
  %v3245 = vmul.f32 %v3236, %v3243
  %v3246 = vmul.f32 %v3237, %v3243
  %v3247 = vmul.f32 %v3238, %v3243
  %v3248 = vmul.f32 %v3239, %v3243
  %v3249 = vmul.f32 %v3240, %v3243
  %v3250 = vmul.f32 %v3241, %v3243
  %v3251 = vmul.f32 %v3242, %v3243
  %v3252 = vperm.slane %v3066, 1
  %v3253 = vadd.f32 %v3244, %v3252
  %v3254 = vadd.f32 %v3245, %v3252
  %v3255 = vadd.f32 %v3246, %v3252
  %v3256 = vadd.f32 %v3247, %v3252
  %v3257 = vadd.f32 %v3248, %v3252
  %v3258 = vadd.f32 %v3249, %v3252
  %v3259 = vadd.f32 %v3250, %v3252
  %v3260 = vadd.f32 %v3251, %v3252
  %v3261 = vpack.c.bf16 %v3254, %v3253
  %v3262 = vpack.c.bf16 %v3256, %v3255
  %v3263 = vpack.c.bf16 %v3258, %v3257
  %v3264 = vpack.c.bf16 %v3260, %v3259
  %v3265 = vld [vmem:[%s13] sm:$0xf]
  %v3266 = vld [vmem:[%s13 + $0x4] sm:$0xf]
  %v3267 = vld [vmem:[%s13 + $0x8] sm:$0xf]
  %v3268 = vld [vmem:[%s13 + $0xc] sm:$0xf]
  %v3273 = vunpack.c.l.b16 %v3265
  %v3274 = vunpack.c.l.b16 %v3266
  %v3275 = vunpack.c.l.b16 %v3267
  %v3276 = vunpack.c.l.b16 %v3268
  %v3277 = vpack.c.b16 %v3274, %v3273
  %v3278 = vpack.c.b16 %v3276, %v3275
  %v3282 = vsel %vm104, %v3261, 0
  %v3285 = vsel %vm104, %v3262, 0
  %v3288 = vsel %vm104, %v3263, 0
  %v3291 = vsel %vm104, %v3264, 0
  %3293 = vmatpush.bf16.msra.mxu0 0
  %3294 = vmatpush.bf16.msra.mxu0 0
  %3295 = vmatpush.bf16.msra.mxu0 0
  %3296 = vmatpush.bf16.msra.mxu0 0
  %3297 = vmatpush.bf16.msra.mxu0 0
  %3298 = vmatpush.bf16.msra.mxu0 0
  %3299 = vmatpush.bf16.msra.mxu0 %v3278
  %3300 = vmatpush.bf16.msra.mxu0 %v3277
  %3301 = vmatmul.bf16.gmra.mxu0 %v3282
  %v3302 = vpop.f32.mrf.mxu0
  %v3303 = vadd.f32 0.0, %v3302
  %v3304 = vpop.f32.mrf.mxu0
  %v3305 = vadd.f32 0.0, %v3304
  %3306 = vmatmul.bf16.gmra.mxu0 %v3285
  %v3307 = vpop.f32.mrf.mxu0
  %v3308 = vadd.f32 0.0, %v3307
  %v3309 = vpop.f32.mrf.mxu0
  %v3310 = vadd.f32 0.0, %v3309
  %3311 = vmatmul.bf16.gmra.mxu0 %v3288
  %v3312 = vpop.f32.mrf.mxu0
  %v3313 = vadd.f32 0.0, %v3312
  %v3314 = vpop.f32.mrf.mxu0
  %v3315 = vadd.f32 0.0, %v3314
  %3316 = vmatmul.bf16.gmra.mxu0 %v3291
  %v3317 = vpop.f32.mrf.mxu0
  %v3318 = vadd.f32 0.0, %v3317
  %v3319 = vpop.f32.mrf.mxu0
  %v3320 = vadd.f32 0.0, %v3319
  %3321 = vdwg.mxu0
  %3322 = vmax.xlane.f32.xlu0 %v3303
  %v3323 = vpop.xlane.xlu0 %3322
  %3324 = vmax.xlane.f32.xlu0 %v3305
  %v3325 = vpop.xlane.xlu0 %3324
  %3326 = vmax.xlane.f32.xlu0 %v3308
  %v3327 = vpop.xlane.xlu0 %3326
  %3328 = vmax.xlane.f32.xlu0 %v3310
  %v3329 = vpop.xlane.xlu0 %3328
  %3330 = vmax.xlane.f32.xlu0 %v3313
  %v3331 = vpop.xlane.xlu0 %3330
  %3332 = vmax.xlane.f32.xlu0 %v3315
  %v3333 = vpop.xlane.xlu0 %3332
  %3334 = vmax.xlane.f32.xlu0 %v3318
  %v3335 = vpop.xlane.xlu0 %3334
  %3336 = vmax.xlane.f32.xlu0 %v3320
  %v3337 = vpop.xlane.xlu0 %3336
  %v3338 = vsub.f32 %v3303, %v3323
  %v3339 = vsub.f32 %v3305, %v3325
  %v3340 = vsub.f32 %v3308, %v3327
  %v3341 = vsub.f32 %v3310, %v3329
  %v3342 = vsub.f32 %v3313, %v3331
  %v3343 = vsub.f32 %v3315, %v3333
  %v3344 = vsub.f32 %v3318, %v3335
  %v3345 = vsub.f32 %v3320, %v3337
  %v3346 = vmul.f32 %v3338, 1.442695
  %v3347 = vpow.pop %v3346
  %v3348 = vmul.f32 %v3339, 1.442695
  %v3349 = vpow.pop %v3348
  %v3350 = vmul.f32 %v3340, 1.442695
  %v3351 = vpow.pop %v3350
  %v3352 = vmul.f32 %v3341, 1.442695
  %v3353 = vpow.pop %v3352
  %v3354 = vmul.f32 %v3342, 1.442695
  %v3355 = vpow.pop %v3354
  %v3356 = vmul.f32 %v3343, 1.442695
  %v3357 = vpow.pop %v3356
  %v3358 = vmul.f32 %v3344, 1.442695
  %v3359 = vpow.pop %v3358
  %v3360 = vmul.f32 %v3345, 1.442695
  %v3361 = vpow.pop %v3360
  %3362 = vadd.xlane.f32.xlu0 %v3347
  %v3363 = vpop.xlane.xlu0 %3362
  %3364 = vadd.xlane.f32.xlu0 %v3349
  %v3365 = vpop.xlane.xlu0 %3364
  %3366 = vadd.xlane.f32.xlu0 %v3351
  %v3367 = vpop.xlane.xlu0 %3366
  %3368 = vadd.xlane.f32.xlu0 %v3353
  %v3369 = vpop.xlane.xlu0 %3368
  %3370 = vadd.xlane.f32.xlu0 %v3355
  %v3371 = vpop.xlane.xlu0 %3370
  %3372 = vadd.xlane.f32.xlu0 %v3357
  %v3373 = vpop.xlane.xlu0 %3372
  %3374 = vadd.xlane.f32.xlu0 %v3359
  %v3375 = vpop.xlane.xlu0 %3374
  %3376 = vadd.xlane.f32.xlu0 %v3361
  %v3377 = vpop.xlane.xlu0 %3376
  %v3378 = vlog2.pop %v3363
  %v3379 = vmul.f32 %v3378, 0.6931472
  %v3380 = vlog2.pop %v3365
  %v3381 = vmul.f32 %v3380, 0.6931472
  %v3382 = vlog2.pop %v3367
  %v3383 = vmul.f32 %v3382, 0.6931472
  %v3384 = vlog2.pop %v3369
  %v3385 = vmul.f32 %v3384, 0.6931472
  %v3386 = vlog2.pop %v3371
  %v3387 = vmul.f32 %v3386, 0.6931472
  %v3388 = vlog2.pop %v3373
  %v3389 = vmul.f32 %v3388, 0.6931472
  %v3390 = vlog2.pop %v3375
  %v3391 = vmul.f32 %v3390, 0.6931472
  %v3392 = vlog2.pop %v3377
  %v3393 = vmul.f32 %v3392, 0.6931472
  %v3394 = vadd.f32 %v3379, %v3323
  %v3395 = vadd.f32 %v3381, %v3325
  %v3396 = vadd.f32 %v3383, %v3327
  %v3397 = vadd.f32 %v3385, %v3329
  %v3398 = vadd.f32 %v3387, %v3331
  %v3399 = vadd.f32 %v3389, %v3333
  %v3400 = vadd.f32 %v3391, %v3335
  %v3401 = vadd.f32 %v3393, %v3337
  %v3402 = vsub.f32 %v3303, %v3394
  %v3403 = vsub.f32 %v3305, %v3395
  %v3404 = vsub.f32 %v3308, %v3396
  %v3405 = vsub.f32 %v3310, %v3397
  %v3406 = vsub.f32 %v3313, %v3398
  %v3407 = vsub.f32 %v3315, %v3399
  %v3408 = vsub.f32 %v3318, %v3400
  %v3409 = vsub.f32 %v3320, %v3401
  %v3410 = vld [vmem:[%s2] sm:$0xff]
  %v3411 = vld [vmem:[%s2 + $0x8] sm:$0xff]
  %v3412 = vld [vmem:[%s2 + $0x10] sm:$0xff]
  %v3413 = vld [vmem:[%s2 + $0x18] sm:$0xff]
  %v3414 = vld [vmem:[%s2 + $0x20] sm:$0xff]
  %v3415 = vld [vmem:[%s2 + $0x28] sm:$0xff]
  %v3416 = vld [vmem:[%s2 + $0x30] sm:$0xff]
  %v3417 = vld [vmem:[%s2 + $0x38] sm:$0xff]
  %3418 = vset.pattern.permute.xlu0 0
  %3419 = vperm.xlu0 %3418, %v3410
  %v3420 = vpop.permute.xlu0 %3419
  %3421 = vset.pattern.permute.xlu0 0
  %3422 = vperm.xlu0 %3421, %v3411
  %v3423 = vpop.permute.xlu0 %3422
  %3424 = vset.pattern.permute.xlu0 0
  %3425 = vperm.xlu0 %3424, %v3412
  %v3426 = vpop.permute.xlu0 %3425
  %3427 = vset.pattern.permute.xlu0 0
  %3428 = vperm.xlu0 %3427, %v3413
  %v3429 = vpop.permute.xlu0 %3428
  %3430 = vset.pattern.permute.xlu0 0
  %3431 = vperm.xlu0 %3430, %v3414
  %v3432 = vpop.permute.xlu0 %3431
  %3433 = vset.pattern.permute.xlu0 0
  %3434 = vperm.xlu0 %3433, %v3415
  %v3435 = vpop.permute.xlu0 %3434
  %3436 = vset.pattern.permute.xlu0 0
  %3437 = vperm.xlu0 %3436, %v3416
  %v3438 = vpop.permute.xlu0 %3437
  %3439 = vset.pattern.permute.xlu0 0
  %3440 = vperm.xlu0 %3439, %v3417
  %v3441 = vpop.permute.xlu0 %3440
  %vm3442 = vcmp.eq.s32.totalorder %v60, %v3420
  %vm3443 = vcmp.eq.s32.totalorder %v60, %v3423
  %vm3444 = vcmp.eq.s32.totalorder %v60, %v3426
  %vm3445 = vcmp.eq.s32.totalorder %v60, %v3429
  %vm3446 = vcmp.eq.s32.totalorder %v60, %v3432
  %vm3447 = vcmp.eq.s32.totalorder %v60, %v3435
  %vm3448 = vcmp.eq.s32.totalorder %v60, %v3438
  %vm3449 = vcmp.eq.s32.totalorder %v60, %v3441
  %v3450 = vsel %vm3442, %v3402, 0.0
  %v3451 = vsel %vm3443, %v3403, 0.0
  %v3452 = vsel %vm3444, %v3404, 0.0
  %v3453 = vsel %vm3445, %v3405, 0.0
  %v3454 = vsel %vm3446, %v3406, 0.0
  %v3455 = vsel %vm3447, %v3407, 0.0
  %v3456 = vsel %vm3448, %v3408, 0.0
  %v3457 = vsel %vm3449, %v3409, 0.0
  %v3458 = vld [vmem:[%s3] sm:$0xff]
  %v3459 = vld [vmem:[%s3 + $0x8] sm:$0xff]
  %v3460 = vld [vmem:[%s3 + $0x10] sm:$0xff]
  %v3461 = vld [vmem:[%s3 + $0x18] sm:$0xff]
  %v3462 = vld [vmem:[%s3 + $0x20] sm:$0xff]
  %v3463 = vld [vmem:[%s3 + $0x28] sm:$0xff]
  %v3464 = vld [vmem:[%s3 + $0x30] sm:$0xff]
  %v3465 = vld [vmem:[%s3 + $0x38] sm:$0xff]
  %3467 = vset.pattern.permute.xlu0 0
  %3468 = vperm.xlu0 %3467, %v3458
  %v3469 = vpop.permute.xlu0 %3468
  %3472 = vset.pattern.permute.xlu0 0
  %3473 = vperm.xlu0 %3472, %v3459
  %v3474 = vpop.permute.xlu0 %3473
  %3477 = vset.pattern.permute.xlu0 0
  %3478 = vperm.xlu0 %3477, %v3460
  %v3479 = vpop.permute.xlu0 %3478
  %3482 = vset.pattern.permute.xlu0 0
  %3483 = vperm.xlu0 %3482, %v3461
  %v3484 = vpop.permute.xlu0 %3483
  %3487 = vset.pattern.permute.xlu0 0
  %3488 = vperm.xlu0 %3487, %v3462
  %v3489 = vpop.permute.xlu0 %3488
  %3492 = vset.pattern.permute.xlu0 0
  %3493 = vperm.xlu0 %3492, %v3463
  %v3494 = vpop.permute.xlu0 %3493
  %3497 = vset.pattern.permute.xlu0 0
  %3498 = vperm.xlu0 %3497, %v3464
  %v3499 = vpop.permute.xlu0 %3498
  %3502 = vset.pattern.permute.xlu0 0
  %3503 = vperm.xlu0 %3502, %v3465
  %v3504 = vpop.permute.xlu0 %3503
  %v3506 = vmul.f32 %v3450, %v3469
  %v3507 = vmul.f32 %v3451, %v3474
  %v3508 = vmul.f32 %v3452, %v3479
  %v3509 = vmul.f32 %v3453, %v3484
  %v3510 = vmul.f32 %v3454, %v3489
  %v3511 = vmul.f32 %v3455, %v3494
  %v3512 = vmul.f32 %v3456, %v3499
  %v3513 = vmul.f32 %v3457, %v3504
  %3514 = vadd.xlane.f32.xlu0 %v3506
  %v3515 = vpop.xlane.xlu0 %3514
  %3516 = vadd.xlane.f32.xlu0 %v3507
  %v3517 = vpop.xlane.xlu0 %3516
  %3518 = vadd.xlane.f32.xlu0 %v3508
  %v3519 = vpop.xlane.xlu0 %3518
  %3520 = vadd.xlane.f32.xlu0 %v3509
  %v3521 = vpop.xlane.xlu0 %3520
  %3522 = vadd.xlane.f32.xlu0 %v3510
  %v3523 = vpop.xlane.xlu0 %3522
  %3524 = vadd.xlane.f32.xlu0 %v3511
  %v3525 = vpop.xlane.xlu0 %3524
  %3526 = vadd.xlane.f32.xlu0 %v3512
  %v3527 = vpop.xlane.xlu0 %3526
  %3528 = vadd.xlane.f32.xlu0 %v3513
  %v3529 = vpop.xlane.xlu0 %3528
  %v3530 = vadd.f32 %v3515, %v3517
  %v3531 = vrot.slane %v3530, 4
  %v3532 = vadd.f32 %v3530, %v3531
  %v3533 = vrot.slane %v3532, 2
  %v3534 = vadd.f32 %v3532, %v3533
  %v3535 = vrot.slane %v3534, 1
  %v3536 = vadd.f32 %v3534, %v3535
  %v3537 = vadd.f32 %v3519, %v3521
  %v3538 = vrot.slane %v3537, 4
  %v3539 = vadd.f32 %v3537, %v3538
  %v3540 = vrot.slane %v3539, 2
  %v3541 = vadd.f32 %v3539, %v3540
  %v3542 = vrot.slane %v3541, 1
  %v3543 = vadd.f32 %v3541, %v3542
  %v3544 = vadd.f32 %v3523, %v3525
  %v3545 = vrot.slane %v3544, 4
  %v3546 = vadd.f32 %v3544, %v3545
  %v3547 = vrot.slane %v3546, 2
  %v3548 = vadd.f32 %v3546, %v3547
  %v3549 = vrot.slane %v3548, 1
  %v3550 = vadd.f32 %v3548, %v3549
  %v3551 = vadd.f32 %v3527, %v3529
  %v3552 = vrot.slane %v3551, 4
  %v3553 = vadd.f32 %v3551, %v3552
  %v3554 = vrot.slane %v3553, 2
  %v3555 = vadd.f32 %v3553, %v3554
  %v3556 = vrot.slane %v3555, 1
  %v3557 = vadd.f32 %v3555, %v3556
  %vm3562 = vcmask 1041409
  %v3563 = vsel %vm3562, %v3543, %v3536
  %vm3564 = vcmask 1042434
  %v3565 = vsel %vm3564, %v3550, %v3563
  %vm3566 = vcmask 1043459
  %v3567 = vsel %vm3566, %v3557, %v3565
  %vm3569 = vcmask 3072
  %3570 = vst.msk [vmem:[%s14] sm:$0xf] %vm3569, %v3567
  // Predicated region
  $region58: #{classifier_forward.1} parent=0 // pred_check
    _
  $region59: #{classifier_forward.1} parent=0 // pred_check_branch
    %3572 = sbr.rel (0) target = $region61
  $region60: #{classifier_forward.1} parent=0 // pred_region
    _
  $region61: #{classifier_forward.1} parent=0 // pred_fallthru
    _
  // Predicated region
  $region62: #{classifier_forward.1} parent=0 // pred_check
    _
  $region63: #{classifier_forward.1} parent=0 // pred_check_branch
    %3574 = sbr.rel (0) target = $region65
  $region64: #{classifier_forward.1} parent=0 // pred_region
    _
  $region65: #{classifier_forward.1} parent=0 // pred_fallthru
    _

</llo_original>
